<compile_context>
chip_gen: v6e
topology: v6e:2x2x1
jax: 0.10.0
libtpu: 0.0.40
codegen_flags: <defaults>
</compile_context>

<pallas_src>
import functools
import jax
import jax.numpy as jnp
from jax.experimental import pallas as pl
from jax.experimental.pallas import tpu as pltpu

EPS = 1e-5
LANE = 128


def _round_up(x, m):
    return (x + m - 1) // m * m


def _pick_row_tile(H, W, max_rows):
    divs = [t for t in range(1, H + 1) if H % t == 0]
    cands = [t for t in divs if (t * W) % 8 == 0 or t == H]  # keep sublane dim legal
    fitting = [t for t in cands if t * W <= max_rows]
    return max(fitting) if fitting else min(cands)


# ---------------- pass 1: branch convs + partial stats ----------------
def _branch_conv_kernel(xpad_hbm, w0_ref, w3_ref,
                        ypre_ref, stats_ref, xsum_ref,
                        xblk, *, dilations, TH, W, Pmax, Cin_p, Cout_p):
    n = pl.program_id(0)
    h = pl.program_id(1)
    halo = TH + 2 * Pmax
    rows = TH * W

    # Windowed halo DMA: only the padded rows needed for this output row-tile.
    # TODO(synk): double-buffer this halo DMA across grid steps to hide it behind the matmuls.
    pltpu.sync_copy(xpad_hbm.at[pl.ds(n, 1), pl.ds(h * TH, halo)], xblk)

    xc = xblk[0, Pmax:Pmax + TH, Pmax:Pmax + W, :].reshape(rows, Cin_p)

    sums, sqs = [], []

    # --- 1x1 branch (no bias): pre-BN output + per-channel sum / sum-of-squares
    y0 = jnp.dot(xc, w0_ref[...], preferred_element_type=jnp.float32)
    ypre_ref[0, :, 0:Cout_p] = y0
    sums.append(jnp.sum(y0, axis=0, keepdims=True))
    sqs.append(jnp.sum(y0 * y0, axis=0, keepdims=True))

    # --- dilated 3x3 branches: taps sliced in VMEM, single long-K matmul (K = 9*Cin_p).
    # Conv bias b3 is omitted: a per-channel constant cancels under training-mode BatchNorm.
    for d, r in enumerate(dilations):
        taps = []
        for kh in range(3):
            for kw in range(3):
                oh = Pmax + r * (kh - 1)
                ow = Pmax + r * (kw - 1)
                taps.append(xblk[0, oh:oh + TH, ow:ow + W, :])
        xt = jnp.concatenate(taps, axis=-1).reshape(rows, 9 * Cin_p)
        yd = jnp.dot(xt, w3_ref[d], preferred_element_type=jnp.float32)
        c0 = (1 + d) * Cout_p
        ypre_ref[0, :, c0:c0 + Cout_p] = yd
        sums.append(jnp.sum(yd, axis=0, keepdims=True))
        sqs.append(jnp.sum(yd * yd, axis=0, keepdims=True))

    stats_ref[0, 0] = jnp.concatenate(
        [jnp.concatenate(sums, axis=-1), jnp.concatenate(sqs, axis=-1)], axis=0)
    # partial sums for the image-level global average pool
    xsum_ref[0, 0] = jnp.sum(xc, axis=0, keepdims=True)


# ---------------- pass 2: BN-folded final 1x1 conv + partial final-BN stats ----------------
def _final_conv_kernel(ypre_ref, wf_ref, const_ref, yf_ref, fstats_ref):
    y = ypre_ref[0]                                                   # (rows, (D+1)*Cout_p)
    yf = jnp.dot(y, wf_ref[...], preferred_element_type=jnp.float32) + const_ref[0]
    yf_ref[0] = yf
    fstats_ref[0, 0] = jnp.concatenate(
        [jnp.sum(yf, axis=0, keepdims=True), jnp.sum(yf * yf, axis=0, keepdims=True)], axis=0)


# ---------------- pass 3: apply final BatchNorm affine ----------------
def _bn_apply_kernel(yf_ref, scale_ref, shift_ref, out_ref):
    out_ref[0] = yf_ref[0] * scale_ref[0] + shift_ref[0]


def aspp_forward(x_nchw, params, dilations, paddings, *, max_tile_rows=512):
    N, Cin, H, W = x_nchw.shape
    Cout = params["w0"].shape[0]
    D = len(dilations)
    HW = H * W
    for r, p in zip(dilations, paddings):
        assert r == p, "only same-size (padding == dilation) branches supported"
    Pmax = max(paddings)

    Cin_p = _round_up(Cin, LANE)
    Cout_p = _round_up(Cout, LANE)
    C1 = (D + 1) * Cout_p

    TH = _pick_row_tile(H, W, max_tile_rows)
    HT = H // TH
    Wp = W + 2 * Pmax
    rows = TH * W
    f32 = jnp.float32

    # activations: NCHW -> NHWC, channel-pad to lane width (128), spatial zero-pad once.
    x = jnp.transpose(x_nchw, (0, 2, 3, 1)).astype(f32)
    x = jnp.pad(x, ((0, 0), (0, 0), (0, 0), (0, Cin_p - Cin)))
    x_pad = jnp.pad(x, ((0, 0), (Pmax, Pmax), (Pmax, Pmax), (0, 0)))

    # weights: PyTorch (Cout, Cin, kh, kw) -> lane-padded matmul layout.
    w0_mat = jnp.pad(params["w0"][:, :, 0, 0].T, ((0, Cin_p - Cin), (0, Cout_p - Cout)))
    w3_t = jnp.transpose(params["w3"], (0, 3, 4, 2, 1))                      # (D,3,3,Cin,Cout)
    w3_t = jnp.pad(w3_t, ((0, 0), (0, 0), (0, 0), (0, Cin_p - Cin), (0, Cout_p - Cout)))
    w3_mat = w3_t.reshape(D, 9 * Cin_p, Cout_p)
    wi_mat = params["wi"][:, :, 0, 0].T                                       # (Cin, Cout)
    wf_per = params["wf"][:, :, 0, 0].T.reshape(D + 2, Cout, Cout)            # per-branch slices
    gamma, beta = params["gamma"], params["beta"]

    cparams = pltpu.CompilerParams(
        dimension_semantics=("parallel", "parallel"),
        vmem_limit_bytes=48 * 1024 * 1024)
    grid = (N, HT)

    # ---------------- pass 1 ----------------
    kernel1 = functools.partial(_branch_conv_kernel, dilations=tuple(dilations),
                                TH=TH, W=W, Pmax=Pmax, Cin_p=Cin_p, Cout_p=Cout_p)
    ypre, stats, xsum = pl.pallas_call(
        kernel1,
        grid=grid,
        in_specs=[
            pl.BlockSpec(memory_space=pl.ANY),                                # padded x stays in HBM
            pl.BlockSpec((Cin_p, Cout_p), lambda n, h: (0, 0)),
            pl.BlockSpec((D, 9 * Cin_p, Cout_p), lambda n, h: (0, 0, 0)),
        ],
        out_specs=(
            pl.BlockSpec((1, rows, C1), lambda n, h: (n, h, 0)),
            pl.BlockSpec((1, 1, 2, C1), lambda n, h: (n, h, 0, 0)),
            pl.BlockSpec((1, 1, 1, Cin_p), lambda n, h: (n, h, 0, 0)),
        ),
        out_shape=(
            jax.ShapeDtypeStruct((N, HW, C1), f32),                            # pre-BN branch outputs
            jax.ShapeDtypeStruct((N, HT, 2, C1), f32),                         # partial sum / sumsq
            jax.ShapeDtypeStruct((N, HT, 1, Cin_p), f32),                      # partial pixel sums
        ),
        scratch_shapes=[pltpu.VMEM((1, TH + 2 * Pmax, Wp, Cin_p), f32)],
        compiler_params=cparams,
    )(x_pad, w0_mat, w3_mat)

    # -------- tiny per-channel folding math (O(C^2), negligible; kept in the wrapper) --------
    cnt = float(N * HW)
    tot = jnp.sum(stats, axis=(0, 1)).reshape(2, D + 1, Cout_p)[:, :, :Cout]
    mean_b = tot[0] / cnt
    var_b = tot[1] / cnt - mean_b * mean_b                                     # biased, single-pass
    s_b = gamma[:D + 1] * jax.lax.rsqrt(var_b + EPS)
    shift_b = beta[:D + 1] - mean_b * s_b

    # image-level branch: global avg pool -> 1x1 conv -> BN over batch; 1x1->HxW upsample == broadcast
    xmean = jnp.sum(xsum, axis=1)[:, 0, :Cin] / float(HW)                      # (N, Cin)
    yi = xmean @ wi_mat                                                        # (N, Cout)
    mi = jnp.mean(yi, axis=0)
    vi = jnp.mean((yi - mi) ** 2, axis=0)
    yi_n = (yi - mi) * (gamma[D + 1] * jax.lax.rsqrt(vi + EPS)) + beta[D + 1]

    # fold branch BN affines into the final 1x1 weights + per-image constant row
    wf_fold = s_b[:, :, None] * wf_per[:D + 1]                                 # (D+1, Cout, Cout)
    wf_fold = jnp.pad(wf_fold, ((0, 0), (0, Cout_p - Cout), (0, Cout_p - Cout))).reshape(C1, Cout_p)
    const = jnp.einsum("bc,bcd->d", shift_b, wf_per[:D + 1])[None, :] + yi_n @ wf_per[D + 1]
    const_p = jnp.zeros((N, 1, Cout_p), f32).at[:, 0, :Cout].set(const)

    # ---------------- pass 2 ----------------
    yf, fstats = pl.pallas_call(
        _final_conv_kernel,
        grid=grid,
        in_specs=[
            pl.BlockSpec((1, rows, C1), lambda n, h: (n, h, 0)),
            pl.BlockSpec((C1, Cout_p), lambda n, h: (0, 0)),
            pl.BlockSpec((1, 1, Cout_p), lambda n, h: (n, 0, 0)),
        ],
        out_specs=(
            pl.BlockSpec((1, rows, Cout_p), lambda n, h: (n, h, 0)),
            pl.BlockSpec((1, 1, 2, Cout_p), lambda n, h: (n, h, 0, 0)),
        ),
        out_shape=(
            jax.ShapeDtypeStruct((N, HW, Cout_p), f32),
            jax.ShapeDtypeStruct((N, HT, 2, Cout_p), f32),
        ),
        compiler_params=cparams,
    )(ypre, wf_fold, const_p)

    ftot = jnp.sum(fstats, axis=(0, 1))
    mf = ftot[0, :Cout] / cnt
    vf = ftot[1, :Cout] / cnt - mf * mf
    sf = gamma[D + 2] * jax.lax.rsqrt(vf + EPS)
    bf = beta[D + 2] - mf * sf
    sf_p = jnp.zeros((1, 1, Cout_p), f32).at[0, 0, :Cout].set(sf)
    bf_p = jnp.zeros((1, 1, Cout_p), f32).at[0, 0, :Cout].set(bf)

    # ---------------- pass 3 ----------------
    out_pad = pl.pallas_call(
        _bn_apply_kernel,
        grid=grid,
        in_specs=[
            pl.BlockSpec((1, rows, Cout_p), lambda n, h: (n, h, 0)),
            pl.BlockSpec((1, 1, Cout_p), lambda n, h: (0, 0, 0)),
            pl.BlockSpec((1, 1, Cout_p), lambda n, h: (0, 0, 0)),
        ],
        out_specs=pl.BlockSpec((1, rows, Cout_p), lambda n, h: (n, h, 0)),
        out_shape=jax.ShapeDtypeStruct((N, HW, Cout_p), f32),
        compiler_params=cparams,
    )(yf, sf_p, bf_p)

    out = out_pad[:, :, :Cout].reshape(N, H, W, Cout)
    return jnp.transpose(out, (0, 3, 1, 2))                                    # back to NCHW


# ---------------- pure-JAX reference (for validation) ----------------
def aspp_reference(x_nchw, params, dilations, paddings):
    x = jnp.transpose(x_nchw, (0, 2, 3, 1)).astype(jnp.float32)

    def conv(z, w_oihw, padding=0, dilation=1, bias=None):
        w = jnp.transpose(w_oihw, (2, 3, 1, 0))  # HWIO
        y = jax.lax.conv_general_dilated(
            z, w, (1, 1), [(padding, padding), (padding, padding)],
            rhs_dilation=(dilation, dilation),
            dimension_numbers=("NHWC", "HWIO", "NHWC"))
        return y if bias is None else y + bias

    def bn(y, g, b):
        m = jnp.mean(y, axis=(0, 1, 2), keepdims=True)
        v = jnp.mean((y - m) ** 2, axis=(0, 1, 2), keepdims=True)
        return (y - m) * (g * jax.lax.rsqrt(v + EPS)) + b

    D = len(dilations)
    outs = [bn(conv(x, params["w0"]), params["gamma"][0], params["beta"][0])]
    for d, (r, p) in enumerate(zip(dilations, paddings)):
        outs.append(bn(conv(x, params["w3"][d], p, r, params["b3"][d]),
                       params["gamma"][1 + d], params["beta"][1 + d]))
    xm = jnp.mean(x, axis=(1, 2), keepdims=True)
    yi = bn(conv(xm, params["wi"]), params["gamma"][D + 1], params["beta"][D + 1])
    yi = jnp.broadcast_to(yi, (x.shape[0], x.shape[1], x.shape[2], yi.shape[-1]))
    cat = jnp.concatenate(outs + [yi], axis=-1)
    yf = bn(conv(cat, params["wf"]), params["gamma"][D + 2], params["beta"][D + 2])
    return jnp.transpose(yf, (0, 3, 1, 2))


if __name__ == "__main__":
    N, Cin, H, W = 2, 4, 16, 16
    Cout = 8
    dilation_series = [2, 4]
    padding_series = [2, 4]
    D = len(dilation_series)

    key = jax.random.PRNGKey(0)
    ks = jax.random.split(key, 8)
    params = {
        # Conv2d weights, PyTorch (Cout, Cin, kh, kw) layout; branch convs ~ N(0, 0.01)
        "w0": 0.01 * jax.random.normal(ks[0], (Cout, Cin, 1, 1), jnp.float32),
        "w3": 0.01 * jax.random.normal(ks[1], (D, Cout, Cin, 3, 3), jnp.float32),
        "b3": 0.01 * jax.random.normal(ks[2], (D, Cout), jnp.float32),
        "wi": 0.05 * jax.random.normal(ks[3], (Cout, Cin, 1, 1), jnp.float32),
        "wf": 0.05 * jax.random.normal(ks[4], (Cout, (D + 2) * Cout, 1, 1), jnp.float32),
        # BatchNorm affine params (affine_par = True); order: branch0, dilated..., image, final
        "gamma": 1.0 + 0.1 * jax.random.normal(ks[5], (D + 3, Cout), jnp.float32),
        "beta": 0.1 * jax.random.normal(ks[6], (D + 3, Cout), jnp.float32),
    }
    x = jax.random.normal(ks[7], (N, Cin, H, W), jnp.float32)

    # max_tile_rows=128 -> 8-row tiles (2 h-tiles per image) so the halo DMA / tiling path is exercised.
    out = aspp_forward(x, params, dilation_series, padding_series, max_tile_rows=128)
    out = jax.block_until_ready(out)

    ref = jax.block_until_ready(aspp_reference(x, params, dilation_series, padding_series))
    assert out.shape == (N, Cout, H, W)
    err = float(jnp.max(jnp.abs(out - ref)))
    assert jnp.allclose(out, ref, atol=2e-4, rtol=2e-4), err

    print("KERNEL_OK")
</pallas_src>

<mosaic_0001>
module attributes {stable_mosaic.version = 11 : i64} {
  func.func @_branch_conv_kernel(%arg0: i32, %arg1: i32, %arg2: memref<2x24x24x128xf32, #tpu.memory_space<any>>, %arg3: memref<128x128xf32, #tpu.memory_space<vmem>>, %arg4: memref<2x1152x128xf32, #tpu.memory_space<vmem>>, %arg5: memref<1x128x384xf32, #tpu.memory_space<vmem>>, %arg6: memref<1x1x2x384xf32, #tpu.memory_space<vmem>>, %arg7: memref<1x1x1x128xf32, #tpu.memory_space<vmem>>, %arg8: memref<1x16x24x128xf32, #tpu.memory_space<vmem>>) attributes {dimension_semantics = [#tpu.dimension_semantics<parallel>, #tpu.dimension_semantics<parallel>], iteration_bounds = array<i64: 2, 2>, scalar_prefetch = 0 : i64, scratch_operands = 1 : i64, tpu.core_type = #tpu.core_type<tc>, window_params = [{}, {pipeline_mode = #tpu.pipeline_mode<synchronous>, transform_indices = @transform_1, window_bounds = array<i64: 128, 128>}, {pipeline_mode = #tpu.pipeline_mode<synchronous>, transform_indices = @transform_2, window_bounds = array<i64: 2, 1152, 128>}, {transform_indices = @transform_3, window_bounds = array<i64: 1, 128, 384>}, {transform_indices = @transform_4, window_bounds = array<i64: 1, 1, 2, 384>}, {transform_indices = @transform_5, window_bounds = array<i64: 1, 1, 1, 128>}]} {
    %c8_i32 = arith.constant 8 : i32
    %0 = arith.muli %arg1, %c8_i32 : i32
    "tpu.region"() ({
      %87 = tpu.sem_alloc : memref<!tpu.dma_semaphore, #tpu.memory_space<semaphore_mem>>
      %c0_i32 = arith.constant 0 : i32
      %c0_i32_102 = arith.constant 0 : i32
      %88 = tpu.memref_slice %arg2[%arg0, %0, %c0_i32, %c0_i32_102] : memref<2x24x24x128xf32, #tpu.memory_space<any>> -> memref<1x16x24x128xf32, #tpu.memory_space<any>>
      tpu.enqueue_dma source(%88 : memref<1x16x24x128xf32, #tpu.memory_space<any>>) target(%arg8 : memref<1x16x24x128xf32, #tpu.memory_space<vmem>>) target_semaphore(%87 : memref<!tpu.dma_semaphore, #tpu.memory_space<semaphore_mem>>)
      %c0_i32_103 = arith.constant 0 : i32
      %c0_i32_104 = arith.constant 0 : i32
      %89 = tpu.memref_slice %arg2[%arg0, %0, %c0_i32_103, %c0_i32_104] : memref<2x24x24x128xf32, #tpu.memory_space<any>> -> memref<1x16x24x128xf32, #tpu.memory_space<any>>
      tpu.wait_dma2 semaphore(%87 : memref<!tpu.dma_semaphore, #tpu.memory_space<semaphore_mem>>) src(%89 : memref<1x16x24x128xf32, #tpu.memory_space<any>>) dst(%arg8 : memref<1x16x24x128xf32, #tpu.memory_space<vmem>>)
      tpu.yield
    }) : () -> ()
    %c0 = arith.constant 0 : index
    %c4 = arith.constant 4 : index
    %c4_0 = arith.constant 4 : index
    %c0_1 = arith.constant 0 : index
    %1 = vector.load %arg8[%c0, %c4, %c4_0, %c0_1] : memref<1x16x24x128xf32, #tpu.memory_space<vmem>>, vector<1x8x16x128xf32>
    %2 = vector.shape_cast %1 : vector<1x8x16x128xf32> to vector<8x16x128xf32>
    %3 = vector.shape_cast %2 : vector<8x16x128xf32> to vector<128x128xf32>
    %c0_2 = arith.constant 0 : index
    %c0_3 = arith.constant 0 : index
    %4 = vector.load %arg3[%c0_2, %c0_3] : memref<128x128xf32, #tpu.memory_space<vmem>>, vector<128x128xf32>
    %cst = arith.constant dense<0.000000e+00> : vector<128x128xf32>
    %5 = tpu.matmul %3, %4, %cst {dimension_numbers = #tpu.dot_dimension_numbers<[1], [0], [0], [1], [0, 0, 1, 1], [], []>} : vector<128x128xf32>, vector<128x128xf32>, vector<128x128xf32> -> vector<128x128xf32>
    %c0_4 = arith.constant 0 : index
    %c0_5 = arith.constant 0 : index
    %c0_6 = arith.constant 0 : index
    %6 = vector.load %arg5[%c0_4, %c0_5, %c0_6] : memref<1x128x384xf32, #tpu.memory_space<vmem>>, vector<1x128x128xf32>
    %7 = vector.shape_cast %6 : vector<1x128x128xf32> to vector<128x128xf32>
    %8 = vector.shape_cast %5 : vector<128x128xf32> to vector<1x128x128xf32>
    tpu.vector_store %arg5[%c0_4, %c0_5, %c0_6], %8 {strides = array<i32>} : memref<1x128x384xf32, #tpu.memory_space<vmem>>, vector<1x128x128xf32>,
    %cst_7 = arith.constant dense<0.000000e+00> : vector<128xf32>
    %9 = vector.multi_reduction <add>, %5, %cst_7 [0] : vector<128x128xf32> to vector<128xf32>
    %10 = vector.shape_cast %9 : vector<128xf32> to vector<1x128xf32>
    %11 = arith.mulf %5, %5 : vector<128x128xf32>
    %cst_8 = arith.constant dense<0.000000e+00> : vector<128xf32>
    %12 = vector.multi_reduction <add>, %11, %cst_8 [0] : vector<128x128xf32> to vector<128xf32>
    %13 = vector.shape_cast %12 : vector<128xf32> to vector<1x128xf32>
    %c0_9 = arith.constant 0 : index
    %c2 = arith.constant 2 : index
    %c2_10 = arith.constant 2 : index
    %c0_11 = arith.constant 0 : index
    %14 = vector.load %arg8[%c0_9, %c2, %c2_10, %c0_11] : memref<1x16x24x128xf32, #tpu.memory_space<vmem>>, vector<1x8x16x128xf32>
    %15 = vector.shape_cast %14 : vector<1x8x16x128xf32> to vector<8x16x128xf32>
    %c0_12 = arith.constant 0 : index
    %c2_13 = arith.constant 2 : index
    %c4_14 = arith.constant 4 : index
    %c0_15 = arith.constant 0 : index
    %16 = vector.load %arg8[%c0_12, %c2_13, %c4_14, %c0_15] : memref<1x16x24x128xf32, #tpu.memory_space<vmem>>, vector<1x8x16x128xf32>
    %17 = vector.shape_cast %16 : vector<1x8x16x128xf32> to vector<8x16x128xf32>
    %c0_16 = arith.constant 0 : index
    %c2_17 = arith.constant 2 : index
    %c6 = arith.constant 6 : index
    %c0_18 = arith.constant 0 : index
    %18 = vector.load %arg8[%c0_16, %c2_17, %c6, %c0_18] : memref<1x16x24x128xf32, #tpu.memory_space<vmem>>, vector<1x8x16x128xf32>
    %19 = vector.shape_cast %18 : vector<1x8x16x128xf32> to vector<8x16x128xf32>
    %c0_19 = arith.constant 0 : index
    %c4_20 = arith.constant 4 : index
    %c2_21 = arith.constant 2 : index
    %c0_22 = arith.constant 0 : index
    %20 = vector.load %arg8[%c0_19, %c4_20, %c2_21, %c0_22] : memref<1x16x24x128xf32, #tpu.memory_space<vmem>>, vector<1x8x16x128xf32>
    %21 = vector.shape_cast %20 : vector<1x8x16x128xf32> to vector<8x16x128xf32>
    %c0_23 = arith.constant 0 : index
    %c4_24 = arith.constant 4 : index
    %c4_25 = arith.constant 4 : index
    %c0_26 = arith.constant 0 : index
    %22 = vector.load %arg8[%c0_23, %c4_24, %c4_25, %c0_26] : memref<1x16x24x128xf32, #tpu.memory_space<vmem>>, vector<1x8x16x128xf32>
    %23 = vector.shape_cast %22 : vector<1x8x16x128xf32> to vector<8x16x128xf32>
    %c0_27 = arith.constant 0 : index
    %c4_28 = arith.constant 4 : index
    %c6_29 = arith.constant 6 : index
    %c0_30 = arith.constant 0 : index
    %24 = vector.load %arg8[%c0_27, %c4_28, %c6_29, %c0_30] : memref<1x16x24x128xf32, #tpu.memory_space<vmem>>, vector<1x8x16x128xf32>
    %25 = vector.shape_cast %24 : vector<1x8x16x128xf32> to vector<8x16x128xf32>
    %c0_31 = arith.constant 0 : index
    %c6_32 = arith.constant 6 : index
    %c2_33 = arith.constant 2 : index
    %c0_34 = arith.constant 0 : index
    %26 = vector.load %arg8[%c0_31, %c6_32, %c2_33, %c0_34] : memref<1x16x24x128xf32, #tpu.memory_space<vmem>>, vector<1x8x16x128xf32>
    %27 = vector.shape_cast %26 : vector<1x8x16x128xf32> to vector<8x16x128xf32>
    %c0_35 = arith.constant 0 : index
    %c6_36 = arith.constant 6 : index
    %c4_37 = arith.constant 4 : index
    %c0_38 = arith.constant 0 : index
    %28 = vector.load %arg8[%c0_35, %c6_36, %c4_37, %c0_38] : memref<1x16x24x128xf32, #tpu.memory_space<vmem>>, vector<1x8x16x128xf32>
    %29 = vector.shape_cast %28 : vector<1x8x16x128xf32> to vector<8x16x128xf32>
    %c0_39 = arith.constant 0 : index
    %c6_40 = arith.constant 6 : index
    %c6_41 = arith.constant 6 : index
    %c0_42 = arith.constant 0 : index
    %30 = vector.load %arg8[%c0_39, %c6_40, %c6_41, %c0_42] : memref<1x16x24x128xf32, #tpu.memory_space<vmem>>, vector<1x8x16x128xf32>
    %31 = vector.shape_cast %30 : vector<1x8x16x128xf32> to vector<8x16x128xf32>
    %32 = tpu.concatenate %15, %17, %19, %21, %23, %25, %27, %29, %31 in 2 : vector<8x16x128xf32>, vector<8x16x128xf32>, vector<8x16x128xf32>, vector<8x16x128xf32>, vector<8x16x128xf32>, vector<8x16x128xf32>, vector<8x16x128xf32>, vector<8x16x128xf32>, vector<8x16x128xf32> -> vector<8x16x1152xf32>
    %33 = vector.shape_cast %32 : vector<8x16x1152xf32> to vector<128x1152xf32>
    %c0_43 = arith.constant 0 : index
    %c0_44 = arith.constant 0 : index
    %c0_45 = arith.constant 0 : index
    %34 = vector.load %arg4[%c0_43, %c0_44, %c0_45] : memref<2x1152x128xf32, #tpu.memory_space<vmem>>, vector<1x1152x128xf32>
    %35 = vector.shape_cast %34 : vector<1x1152x128xf32> to vector<1152x128xf32>
    %cst_46 = arith.constant dense<0.000000e+00> : vector<128x128xf32>
    %36 = tpu.matmul %33, %35, %cst_46 {dimension_numbers = #tpu.dot_dimension_numbers<[1], [0], [0], [1], [0, 0, 1, 1], [], []>} : vector<128x1152xf32>, vector<1152x128xf32>, vector<128x128xf32> -> vector<128x128xf32>
    %c0_47 = arith.constant 0 : index
    %c0_48 = arith.constant 0 : index
    %c128 = arith.constant 128 : index
    %37 = vector.load %arg5[%c0_47, %c0_48, %c128] : memref<1x128x384xf32, #tpu.memory_space<vmem>>, vector<1x128x128xf32>
    %38 = vector.shape_cast %37 : vector<1x128x128xf32> to vector<128x128xf32>
    %39 = vector.shape_cast %36 : vector<128x128xf32> to vector<1x128x128xf32>
    tpu.vector_store %arg5[%c0_47, %c0_48, %c128], %39 {strides = array<i32>} : memref<1x128x384xf32, #tpu.memory_space<vmem>>, vector<1x128x128xf32>,
    %cst_49 = arith.constant dense<0.000000e+00> : vector<128xf32>
    %40 = vector.multi_reduction <add>, %36, %cst_49 [0] : vector<128x128xf32> to vector<128xf32>
    %41 = vector.shape_cast %40 : vector<128xf32> to vector<1x128xf32>
    %42 = arith.mulf %36, %36 : vector<128x128xf32>
    %cst_50 = arith.constant dense<0.000000e+00> : vector<128xf32>
    %43 = vector.multi_reduction <add>, %42, %cst_50 [0] : vector<128x128xf32> to vector<128xf32>
    %44 = vector.shape_cast %43 : vector<128xf32> to vector<1x128xf32>
    %c0_51 = arith.constant 0 : index
    %c0_52 = arith.constant 0 : index
    %c0_53 = arith.constant 0 : index
    %c0_54 = arith.constant 0 : index
    %45 = vector.load %arg8[%c0_51, %c0_52, %c0_53, %c0_54] : memref<1x16x24x128xf32, #tpu.memory_space<vmem>>, vector<1x8x16x128xf32>
    %46 = vector.shape_cast %45 : vector<1x8x16x128xf32> to vector<8x16x128xf32>
    %c0_55 = arith.constant 0 : index
    %c0_56 = arith.constant 0 : index
    %c4_57 = arith.constant 4 : index
    %c0_58 = arith.constant 0 : index
    %47 = vector.load %arg8[%c0_55, %c0_56, %c4_57, %c0_58] : memref<1x16x24x128xf32, #tpu.memory_space<vmem>>, vector<1x8x16x128xf32>
    %48 = vector.shape_cast %47 : vector<1x8x16x128xf32> to vector<8x16x128xf32>
    %c0_59 = arith.constant 0 : index
    %c0_60 = arith.constant 0 : index
    %c8 = arith.constant 8 : index
    %c0_61 = arith.constant 0 : index
    %49 = vector.load %arg8[%c0_59, %c0_60, %c8, %c0_61] : memref<1x16x24x128xf32, #tpu.memory_space<vmem>>, vector<1x8x16x128xf32>
    %50 = vector.shape_cast %49 : vector<1x8x16x128xf32> to vector<8x16x128xf32>
    %c0_62 = arith.constant 0 : index
    %c4_63 = arith.constant 4 : index
    %c0_64 = arith.constant 0 : index
    %c0_65 = arith.constant 0 : index
    %51 = vector.load %arg8[%c0_62, %c4_63, %c0_64, %c0_65] : memref<1x16x24x128xf32, #tpu.memory_space<vmem>>, vector<1x8x16x128xf32>
    %52 = vector.shape_cast %51 : vector<1x8x16x128xf32> to vector<8x16x128xf32>
    %c0_66 = arith.constant 0 : index
    %c4_67 = arith.constant 4 : index
    %c4_68 = arith.constant 4 : index
    %c0_69 = arith.constant 0 : index
    %53 = vector.load %arg8[%c0_66, %c4_67, %c4_68, %c0_69] : memref<1x16x24x128xf32, #tpu.memory_space<vmem>>, vector<1x8x16x128xf32>
    %54 = vector.shape_cast %53 : vector<1x8x16x128xf32> to vector<8x16x128xf32>
    %c0_70 = arith.constant 0 : index
    %c4_71 = arith.constant 4 : index
    %c8_72 = arith.constant 8 : index
    %c0_73 = arith.constant 0 : index
    %55 = vector.load %arg8[%c0_70, %c4_71, %c8_72, %c0_73] : memref<1x16x24x128xf32, #tpu.memory_space<vmem>>, vector<1x8x16x128xf32>
    %56 = vector.shape_cast %55 : vector<1x8x16x128xf32> to vector<8x16x128xf32>
    %c0_74 = arith.constant 0 : index
    %c8_75 = arith.constant 8 : index
    %c0_76 = arith.constant 0 : index
    %c0_77 = arith.constant 0 : index
    %57 = vector.load %arg8[%c0_74, %c8_75, %c0_76, %c0_77] : memref<1x16x24x128xf32, #tpu.memory_space<vmem>>, vector<1x8x16x128xf32>
    %58 = vector.shape_cast %57 : vector<1x8x16x128xf32> to vector<8x16x128xf32>
    %c0_78 = arith.constant 0 : index
    %c8_79 = arith.constant 8 : index
    %c4_80 = arith.constant 4 : index
    %c0_81 = arith.constant 0 : index
    %59 = vector.load %arg8[%c0_78, %c8_79, %c4_80, %c0_81] : memref<1x16x24x128xf32, #tpu.memory_space<vmem>>, vector<1x8x16x128xf32>
    %60 = vector.shape_cast %59 : vector<1x8x16x128xf32> to vector<8x16x128xf32>
    %c0_82 = arith.constant 0 : index
    %c8_83 = arith.constant 8 : index
    %c8_84 = arith.constant 8 : index
    %c0_85 = arith.constant 0 : index
    %61 = vector.load %arg8[%c0_82, %c8_83, %c8_84, %c0_85] : memref<1x16x24x128xf32, #tpu.memory_space<vmem>>, vector<1x8x16x128xf32>
    %62 = vector.shape_cast %61 : vector<1x8x16x128xf32> to vector<8x16x128xf32>
    %63 = tpu.concatenate %46, %48, %50, %52, %54, %56, %58, %60, %62 in 2 : vector<8x16x128xf32>, vector<8x16x128xf32>, vector<8x16x128xf32>, vector<8x16x128xf32>, vector<8x16x128xf32>, vector<8x16x128xf32>, vector<8x16x128xf32>, vector<8x16x128xf32>, vector<8x16x128xf32> -> vector<8x16x1152xf32>
    %64 = vector.shape_cast %63 : vector<8x16x1152xf32> to vector<128x1152xf32>
    %c1 = arith.constant 1 : index
    %c0_86 = arith.constant 0 : index
    %c0_87 = arith.constant 0 : index
    %65 = vector.load %arg4[%c1, %c0_86, %c0_87] : memref<2x1152x128xf32, #tpu.memory_space<vmem>>, vector<1x1152x128xf32>
    %66 = vector.shape_cast %65 : vector<1x1152x128xf32> to vector<1152x128xf32>
    %cst_88 = arith.constant dense<0.000000e+00> : vector<128x128xf32>
    %67 = tpu.matmul %64, %66, %cst_88 {dimension_numbers = #tpu.dot_dimension_numbers<[1], [0], [0], [1], [0, 0, 1, 1], [], []>} : vector<128x1152xf32>, vector<1152x128xf32>, vector<128x128xf32> -> vector<128x128xf32>
    %c0_89 = arith.constant 0 : index
    %c0_90 = arith.constant 0 : index
    %c256 = arith.constant 256 : index
    %68 = vector.load %arg5[%c0_89, %c0_90, %c256] : memref<1x128x384xf32, #tpu.memory_space<vmem>>, vector<1x128x128xf32>
    %69 = vector.shape_cast %68 : vector<1x128x128xf32> to vector<128x128xf32>
    %70 = vector.shape_cast %67 : vector<128x128xf32> to vector<1x128x128xf32>
    tpu.vector_store %arg5[%c0_89, %c0_90, %c256], %70 {strides = array<i32>} : memref<1x128x384xf32, #tpu.memory_space<vmem>>, vector<1x128x128xf32>,
    %cst_91 = arith.constant dense<0.000000e+00> : vector<128xf32>
    %71 = vector.multi_reduction <add>, %67, %cst_91 [0] : vector<128x128xf32> to vector<128xf32>
    %72 = vector.shape_cast %71 : vector<128xf32> to vector<1x128xf32>
    %73 = arith.mulf %67, %67 : vector<128x128xf32>
    %cst_92 = arith.constant dense<0.000000e+00> : vector<128xf32>
    %74 = vector.multi_reduction <add>, %73, %cst_92 [0] : vector<128x128xf32> to vector<128xf32>
    %75 = vector.shape_cast %74 : vector<128xf32> to vector<1x128xf32>
    %76 = tpu.concatenate %10, %41, %72 in 1 : vector<1x128xf32>, vector<1x128xf32>, vector<1x128xf32> -> vector<1x384xf32>
    %77 = tpu.concatenate %13, %44, %75 in 1 : vector<1x128xf32>, vector<1x128xf32>, vector<1x128xf32> -> vector<1x384xf32>
    %78 = tpu.concatenate %76, %77 in 0 : vector<1x384xf32>, vector<1x384xf32> -> vector<2x384xf32>
    %c0_93 = arith.constant 0 : index
    %c0_94 = arith.constant 0 : index
    %c0_95 = arith.constant 0 : index
    %c0_96 = arith.constant 0 : index
    %79 = vector.load %arg6[%c0_93, %c0_94, %c0_95, %c0_96] : memref<1x1x2x384xf32, #tpu.memory_space<vmem>>, vector<1x1x2x384xf32>
    %80 = vector.shape_cast %79 : vector<1x1x2x384xf32> to vector<2x384xf32>
    %81 = vector.shape_cast %78 : vector<2x384xf32> to vector<1x1x2x384xf32>
    tpu.vector_store %arg6[%c0_93, %c0_94, %c0_95, %c0_96], %81 {strides = array<i32>} : memref<1x1x2x384xf32, #tpu.memory_space<vmem>>, vector<1x1x2x384xf32>,
    %cst_97 = arith.constant dense<0.000000e+00> : vector<128xf32>
    %82 = vector.multi_reduction <add>, %3, %cst_97 [0] : vector<128x128xf32> to vector<128xf32>
    %83 = vector.shape_cast %82 : vector<128xf32> to vector<1x128xf32>
    %c0_98 = arith.constant 0 : index
    %c0_99 = arith.constant 0 : index
    %c0_100 = arith.constant 0 : index
    %c0_101 = arith.constant 0 : index
    %84 = vector.load %arg7[%c0_98, %c0_99, %c0_100, %c0_101] : memref<1x1x1x128xf32, #tpu.memory_space<vmem>>, vector<1x1x1x128xf32>
    %85 = vector.shape_cast %84 : vector<1x1x1x128xf32> to vector<1x128xf32>
    %86 = vector.shape_cast %83 : vector<1x128xf32> to vector<1x1x1x128xf32>
    tpu.vector_store %arg7[%c0_98, %c0_99, %c0_100, %c0_101], %86 {strides = array<i32>} : memref<1x1x1x128xf32, #tpu.memory_space<vmem>>, vector<1x1x1x128xf32>,
    return
  }
  func.func @transform_1(%arg0: i32, %arg1: i32) -> (i32, i32) {
    %c0_i32 = arith.constant 0 : i32
    %c0_i32_0 = arith.constant 0 : i32
    %c0_i32_1 = arith.constant 0 : i32
    return %c0_i32, %c0_i32_0 : i32, i32
  }
  func.func @transform_2(%arg0: i32, %arg1: i32) -> (i32, i32, i32) {
    %c0_i32 = arith.constant 0 : i32
    %c0_i32_0 = arith.constant 0 : i32
    %c0_i32_1 = arith.constant 0 : i32
    %c0_i32_2 = arith.constant 0 : i32
    return %c0_i32, %c0_i32_0, %c0_i32_1 : i32, i32, i32
  }
  func.func @transform_3(%arg0: i32, %arg1: i32) -> (i32, i32, i32) {
    %c0_i32 = arith.constant 0 : i32
    %c0_i32_0 = arith.constant 0 : i32
    return %arg0, %arg1, %c0_i32 : i32, i32, i32
  }
  func.func @transform_4(%arg0: i32, %arg1: i32) -> (i32, i32, i32, i32) {
    %c0_i32 = arith.constant 0 : i32
    %c0_i32_0 = arith.constant 0 : i32
    %c0_i32_1 = arith.constant 0 : i32
    return %arg0, %arg1, %c0_i32, %c0_i32_0 : i32, i32, i32, i32
  }
  func.func @transform_5(%arg0: i32, %arg1: i32) -> (i32, i32, i32, i32) {
    %c0_i32 = arith.constant 0 : i32
    %c0_i32_0 = arith.constant 0 : i32
    %c0_i32_1 = arith.constant 0 : i32
    return %arg0, %arg1, %c0_i32, %c0_i32_0 : i32, i32, i32, i32
  }
}

</mosaic_0001>

<llo_original>
// kernel: tpu_custom_call.1
$region0: #{tpu_custom_call.1}
  #allocation0 [shape = 'u32[]', space=smem, size = 0x4, offset = 0x4, fixed_abs, tag = 'smem constant byte address 0x4 - core index']
  #allocation1 [shape = 'u32[144,128]{1,0:T(1,128)}', space=vmem, size = 0x12000, scoped, tag = 'internal scratch']
  #allocation2 [shape = 'f32[1,16,24,128]{3,2,1,0:T(8,128)}', space=vmem, size = 0x30000, scoped, tag = 'scratch operand']
  #allocation13 [shape = 's32[]', space=sflag, size = 0x4, offset = 0, fixed_abs, tag = 'sflag constant byte address 0x0 - dummy sync flag']
  #allocation14 [shape = 's32[]', space=sflag, size = 0x4, offset = 0, fixed_abs, tag = 'sflag constant byte address 0x0 - dummy sync flag']
  #allocation15 [shape = 'u32[]', space=smem, size = 0x4, offset = 0x44, fixed_abs, tag = 'smem constant byte address 0x44 - assertion arg 0']
  #allocation16 [shape = 'u32[]', space=smem, size = 0x4, offset = 0x48, fixed_abs, tag = 'smem constant byte address 0x48 - assertion arg 1']
  %s0 = inlined_call_operand.hbm [shape: f32[2,24,24,128], index: 0, kind: input, shape index: {}]
  %s1 = inlined_call_operand.hbm [shape: f32[128,128], index: 1, kind: input, shape index: {}]
  %s2 = inlined_call_operand.hbm [shape: f32[2,1152,128], index: 2, kind: input, shape index: {}]
  %s3 = inlined_call_operand.hbm [shape: f32[2,256,384], index: 3, kind: output, shape index: {0}]
  %s4 = inlined_call_operand.hbm [shape: f32[2,2,2,384], index: 4, kind: output, shape index: {1}]
  %s5 = inlined_call_operand.hbm [shape: f32[2,2,1,128], index: 5, kind: output, shape index: {2}]
  %6 = xla_tuple %s3, %s4, %s5
  %s7 = sld [smem:[#allocation0]]
  $region70: #{tpu_custom_call.1} parent=0
    _
  %s9 = ssub.s32 1, %s7
  %s10 = scalar_select 0, %s9, %s7
  $region1: #{tpu_custom_call.1} parent=0
    #allocation3 [shape = 'u8[65536]{0}', space=vmem, size = 0x10000, scoped, tag = 'input window, operand 1, single buffered']
    #allocation4 [shape = 's32[2]{0}', space=sflag, size = 0x8, scoped, tag = 'scoped memory for tpu_custom_call.1']
    #allocation5 [shape = 's32[2]{0}', space=sflag, size = 0x8, scoped, tag = 'scoped memory for tpu_custom_call.1']
    #allocation6 [shape = 'u8[1179648]{0}', space=vmem, size = 0x120000, scoped, tag = 'input window, operand 2, single buffered']
    #allocation7 [shape = 's32[1]{0}', space=sflag, size = 0x4, scoped, tag = 'scoped memory for tpu_custom_call.1']
    #allocation8 [shape = 'u8[393216]{0}', space=vmem, size = 0x60000, scoped, tag = 'output window, operand 0']
    #allocation9 [shape = 'u8[6144]{0}', space=vmem, size = 0x1800, scoped, tag = 'output window, operand 1']
    #allocation10 [shape = 's32[2]{0}', space=sflag, size = 0x8, scoped, tag = 'scoped memory for tpu_custom_call.1']
    #allocation11 [shape = 'u8[1024]{0}', space=vmem, size = 0x400, scoped, tag = 'output window, operand 2']
    %11 = vsyncpa [#allocation4], 0
    %12 = vsyncpa [#allocation7], 0
    %13 = vsyncpa [#allocation5], 0
    %s14 = scalar_lea.sflag [#allocation5], 1
    %15 = vsyncpa %s14, 0
    %16 = vsyncpa [#allocation10], 0
    %s17 = scalar_lea.sflag [#allocation10], 1
    %18 = vsyncpa %s17, 0
    loop: start=0, step=1, limit=6
    $region2: #{tpu_custom_call.1} parent=1 // loop_pre_header
      _
    $region3: #{tpu_custom_call.1} parent=1 // loop_header
      %s20 = sphi 0, %s24
      %p21 = scmp.ge.s32.totalorder %s20, 6
      %s27 = sphi 0, %s39
      %s28 = sphi 0, %s35
      %s29 = sphi 0, %s27
      %s30 = sphi 0, %s28
      %s31 = sphi 0, %s29
      %s32 = sphi 0, %s30
      %s40 = sphi 0, %s40
      %s42 = sphi 0, %s40
      %s43 = sphi 0, %s42
      %s57 = sphi 0, %s43
      %s61 = sphi 0, %s61
      %s63 = sphi 0, %s61
      %s64 = sphi 0, %s63
      %s78 = sphi 0, %s64
      %s86 = sphi 0, %s88
      %s89 = sphi 0, %s86
      %s90 = sphi 0, %s89
      %s106 = sphi 0, %s90
      %s114 = sphi 0, %s116
      %s117 = sphi 0, %s114
      %s118 = sphi 0, %s117
      %s134 = sphi 0, %s118
      %s142 = sphi 0, %s144
      %s145 = sphi 0, %s142
      %s146 = sphi 0, %s145
      %s162 = sphi 0, %s146
    $region4: #{tpu_custom_call.1} parent=1 // loop_header_branch
      %23 = sbr.rel (%p21) target = $region8
    $region5: #{tpu_custom_call.1} parent=1 // loop_body
      %s25 = ssub.s32 %s20, 1
      %s26 = ssub.s32 %s20, 2
      %s33 = sadd.s32 1, %s28
      %p34 = scmp.ge.s32.totalorder %s33, 2
      %s35 = scalar_select %p34, 0, %s33
      %s36 = sadd.s32 1, %s27
      %s37 = scalar_select %p34, %s36, %s27
      %p38 = scmp.ge.s32.totalorder %s37, 2
      %s39 = scalar_select %p38, 0, %s37
      %s41 = sadd.s32 %s40, 1
      %p44 = scmp.eq.s32.totalorder %s20, 3
      %p45 = scmp.ne.s32.totalorder %s40, %s42
      %p46 = scmp.eq.s32.totalorder %s20, 0
      %p47 = por %p45, %p46
      %p48 = scmp.ne.s32.totalorder %s40, %s42
      %p49 = scmp.eq.s32.totalorder %s25, 3
      %p50 = por %p48, %p49
      %p51 = scmp.ne.s32.totalorder %s42, %s43
      %p52 = scmp.eq.s32.totalorder %s25, 0
      %p53 = por %p51, %p52
      %p54 = scmp.ne.s32.totalorder %s42, %s43
      %p55 = scmp.eq.s32.totalorder %s26, 3
      %p56 = por %p54, %p55
      %p58 = scmp.ne.s32.totalorder %s43, %s57
      %p59 = scmp.eq.s32.totalorder %s26, 0
      %p60 = por %p58, %p59
      %s62 = sadd.s32 %s61, 1
      %p65 = scmp.eq.s32.totalorder %s20, 3
      %p66 = scmp.ne.s32.totalorder %s61, %s63
      %p67 = scmp.eq.s32.totalorder %s20, 0
      %p68 = por %p66, %p67
      %p69 = scmp.ne.s32.totalorder %s61, %s63
      %p70 = scmp.eq.s32.totalorder %s25, 3
      %p71 = por %p69, %p70
      %p72 = scmp.ne.s32.totalorder %s63, %s64
      %p73 = scmp.eq.s32.totalorder %s25, 0
      %p74 = por %p72, %p73
      %p75 = scmp.ne.s32.totalorder %s63, %s64
      %p76 = scmp.eq.s32.totalorder %s26, 3
      %p77 = por %p75, %p76
      %p79 = scmp.ne.s32.totalorder %s64, %s78
      %p80 = scmp.eq.s32.totalorder %s26, 0
      %p81 = por %p79, %p80
      %s82 = ssub.s32 %s27, %s39
      %s83 = ssub.s32 %s28, %s35
      %s84 = sor.u32 %s82, %s83
      %p85 = scmp.eq.s32.totalorder %s84, 0
      %s87 = sadd.s32 %s86, 1
      %s88 = scalar_select %p85, %s86, %s87
      %p91 = pneg %p85
      %p92 = scmp.eq.s32.totalorder %s20, 3
      %p93 = por %p91, %p92
      %p94 = scmp.ne.s32.totalorder %s86, %s89
      %p95 = scmp.eq.s32.totalorder %s20, 0
      %p96 = por %p94, %p95
      %p97 = scmp.ne.s32.totalorder %s86, %s89
      %p98 = scmp.eq.s32.totalorder %s25, 3
      %p99 = por %p97, %p98
      %p100 = scmp.ne.s32.totalorder %s89, %s90
      %p101 = scmp.eq.s32.totalorder %s25, 0
      %p102 = por %p100, %p101
      %p103 = scmp.ne.s32.totalorder %s89, %s90
      %p104 = scmp.eq.s32.totalorder %s26, 3
      %p105 = por %p103, %p104
      %p107 = scmp.ne.s32.totalorder %s90, %s106
      %p108 = scmp.eq.s32.totalorder %s26, 0
      %p109 = por %p107, %p108
      %s110 = ssub.s32 %s27, %s39
      %s111 = ssub.s32 %s28, %s35
      %s112 = sor.u32 %s110, %s111
      %p113 = scmp.eq.s32.totalorder %s112, 0
      %s115 = sadd.s32 %s114, 1
      %s116 = scalar_select %p113, %s114, %s115
      %p119 = pneg %p113
      %p120 = scmp.eq.s32.totalorder %s20, 3
      %p121 = por %p119, %p120
      %p122 = scmp.ne.s32.totalorder %s114, %s117
      %p123 = scmp.eq.s32.totalorder %s20, 0
      %p124 = por %p122, %p123
      %p125 = scmp.ne.s32.totalorder %s114, %s117
      %p126 = scmp.eq.s32.totalorder %s25, 3
      %p127 = por %p125, %p126
      %p128 = scmp.ne.s32.totalorder %s117, %s118
      %p129 = scmp.eq.s32.totalorder %s25, 0
      %p130 = por %p128, %p129
      %p131 = scmp.ne.s32.totalorder %s117, %s118
      %p132 = scmp.eq.s32.totalorder %s26, 3
      %p133 = por %p131, %p132
      %p135 = scmp.ne.s32.totalorder %s118, %s134
      %p136 = scmp.eq.s32.totalorder %s26, 0
      %p137 = por %p135, %p136
      %s138 = ssub.s32 %s27, %s39
      %s139 = ssub.s32 %s28, %s35
      %s140 = sor.u32 %s138, %s139
      %p141 = scmp.eq.s32.totalorder %s140, 0
      %s143 = sadd.s32 %s142, 1
      %s144 = scalar_select %p141, %s142, %s143
      %p147 = pneg %p141
      %p148 = scmp.eq.s32.totalorder %s20, 3
      %p149 = por %p147, %p148
      %p150 = scmp.ne.s32.totalorder %s142, %s145
      %p151 = scmp.eq.s32.totalorder %s20, 0
      %p152 = por %p150, %p151
      %p153 = scmp.ne.s32.totalorder %s142, %s145
      %p154 = scmp.eq.s32.totalorder %s25, 3
      %p155 = por %p153, %p154
      %p156 = scmp.ne.s32.totalorder %s145, %s146
      %p157 = scmp.eq.s32.totalorder %s25, 0
      %p158 = por %p156, %p157
      %p159 = scmp.ne.s32.totalorder %s145, %s146
      %p160 = scmp.eq.s32.totalorder %s26, 3
      %p161 = por %p159, %p160
      %p163 = scmp.ne.s32.totalorder %s146, %s162
      %p164 = scmp.eq.s32.totalorder %s26, 0
      %p165 = por %p163, %p164
      %p166 = scmp.le.s32.totalorder 1, %s20
      %p167 = scmp.lt.s32.totalorder %s20, 5
      %p168 = pnand %p166, %p167
      %p169 = pneg %p168
      // Predicated region
      $region9: #{tpu_custom_call.1} parent=5 // pred_check
        _
      $region10: #{tpu_custom_call.1} parent=5 // pred_check_branch
        %171 = sbr.rel (%p168) target = $region12
      $region11: #{tpu_custom_call.1} parent=5 // pred_region
        %s172 = ssub.s32 %s20, 1
        // Predicated region
        $region13: #{tpu_custom_call.1} parent=11 // pred_check
          %p173 = pneg %p53
        $region14: #{tpu_custom_call.1} parent=11 // pred_check_branch
          %175 = sbr.rel (%p173) target = $region16
        $region15: #{tpu_custom_call.1} parent=11 // pred_region
          %s177 = ssub.s32 2048, 2048
          %178 = vsyncadd [#allocation4], %s177
          %s179 = sshll.u32 [#allocation3], 4
          %s180 = int_to_ptr.vmem [resolvable:$true] %s179
          %185 = dma.hbm_to_vmem [thread:$0]  %s1, 2048, %s180, [#allocation4], 128, 128, 8
        $region16: #{tpu_custom_call.1} parent=11 // pred_fallthru
          _
        // Predicated region
        $region17: #{tpu_custom_call.1} parent=11 // pred_check
          %p186 = pneg %p74
        $region18: #{tpu_custom_call.1} parent=11 // pred_check_branch
          %188 = sbr.rel (%p186) target = $region20
        $region19: #{tpu_custom_call.1} parent=11 // pred_region
          %s190 = ssub.s32 36864, 36864
          %191 = vsyncadd [#allocation7], %s190
          %s192 = sshll.u32 [#allocation6], 4
          %s193 = int_to_ptr.vmem [resolvable:$true] %s192
          %198 = dma.hbm_to_vmem [thread:$0]  %s2, 36864, %s193, [#allocation7], 128, 128, 8
        $region20: #{tpu_custom_call.1} parent=11 // pred_fallthru
          _
      $region12: #{tpu_custom_call.1} parent=5 // pred_fallthru
        _
      %p199 = scmp.lt.s32.totalorder %s20, 4
      // Predicated region
      $region21: #{tpu_custom_call.1} parent=5 // pred_check
        %p200 = pneg %p199
      $region22: #{tpu_custom_call.1} parent=5 // pred_check_branch
        %202 = sbr.rel (%p200) target = $region24
      $region23: #{tpu_custom_call.1} parent=5 // pred_region
        _
      $region24: #{tpu_custom_call.1} parent=5 // pred_fallthru
        _
      %p203 = scmp.le.s32.totalorder 1, %s20
      %p204 = scmp.lt.s32.totalorder %s20, 5
      %p205 = pnand %p203, %p204
      %p206 = pneg %p205
      // Predicated region
      $region25: #{tpu_custom_call.1} parent=5 // pred_check
        _
      $region26: #{tpu_custom_call.1} parent=5 // pred_check_branch
        %208 = sbr.rel (%p205) target = $region28
      $region27: #{tpu_custom_call.1} parent=5 // pred_region
        %s209 = ssub.s32 %s20, 1
        // Predicated region
        $region29: #{tpu_custom_call.1} parent=27 // pred_check
          %p210 = pneg %p53
        $region30: #{tpu_custom_call.1} parent=27 // pred_check_branch
          %212 = sbr.rel (%p210) target = $region32
        $region31: #{tpu_custom_call.1} parent=27 // pred_region
          %213 = dma.done [#allocation4], 2048
        $region32: #{tpu_custom_call.1} parent=27 // pred_fallthru
          _
        // Predicated region
        $region33: #{tpu_custom_call.1} parent=27 // pred_check
          %p214 = pneg %p74
        $region34: #{tpu_custom_call.1} parent=27 // pred_check_branch
          %216 = sbr.rel (%p214) target = $region36
        $region35: #{tpu_custom_call.1} parent=27 // pred_region
          %217 = dma.done [#allocation7], 36864
        $region36: #{tpu_custom_call.1} parent=27 // pred_fallthru
          _
        %p218 = pneg %p53
        %p219 = pneg %p50
        %p220 = pneg %p74
        %p221 = pneg %p71
        %p222 = pneg %p102
        %p223 = pneg %p99
        %s224 = sand.u32 %s89, 1
        %s225 = scalar_lea.sflag [#allocation5], %s224
        %s226 = sand.u32 %s89, 1
        %s227 = smul.addr %s226, 384
        %s228 = scalar_lea.vmem [#allocation8], %s227
        %p229 = pneg %p130
        %p230 = pneg %p127
        %s231 = sand.u32 %s25, 1
        %s232 = scalar_lea.sflag [#allocation10], %s231
        %s233 = sand.u32 %s117, 1
        %s234 = smul.addr %s233, 6
        %s235 = scalar_lea.vmem [#allocation9], %s234
        %p236 = pneg %p158
        %p237 = pneg %p155
        %s238 = sand.u32 %s25, 1
        %s239 = scalar_lea.sflag [#allocation10], %s238
        %s240 = sand.u32 %s145, 1
        %s241 = scalar_lea.vmem [#allocation11], %s240
        %s242 = smul.u32 16, %s30
        %s243 = smul.u32 %s30, 8
        $region37: #{tpu_custom_call.1} parent=27
          #allocation12 [shape = 's32[1]{0}', space=sflag, size = 0x4, scoped, tag = 'scoped memory for tpu_custom_call.1']
          %s244 = smul.u32 %s243, 24
          %s245 = smul.u32 %s29, 576
          %s246 = sadd.s32 %s244, %s245
          %s247 = smul.addr %s246, 16
          %s248 = scalar_lea.hbm %s0, %s247
          // Predicated region
          $region38: #{tpu_custom_call.1} parent=37 // pred_check
            _
          $region39: #{tpu_custom_call.1} parent=37 // pred_check_branch
            %250 = sbr.rel target = $region41
          $region40: #{tpu_custom_call.1} parent=37 // pred_region
            %251 = sst [smem:[#allocation15]] [#allocation14]
            %252 = sst [smem:[#allocation16]] [#allocation13]
          $region41: #{tpu_custom_call.1} parent=37 // pred_fallthru
            _
          %254 = shalt.err (0)
          %s256 = sshll.u32 [#allocation2], 4
          %s257 = int_to_ptr.vmem [resolvable:$true] %s256
          %259 = dma.hbm_to_vmem [thread:$0]  %s248, 6144, %s257, [#allocation12]
          %s260 = smul.u32 1, 16
          %s261 = smul.u32 %s260, 24
          %s262 = smul.u32 %s261, 1
          %s263 = sshll.u32 %s262, 4
          %264 = dma.done [#allocation12], %s263
        %s265 = scalar_lea.vmem [#allocation2], 96
        %v266 = vld [vmem:[%s265 + $0x4] sm:$0xff]
        %v267 = vld [vmem:[%s265 + $0xc] sm:$0xff]
        %v268 = vld [vmem:[%s265 + $0x1c] sm:$0xff]
        %v269 = vld [vmem:[%s265 + $0x24] sm:$0xff]
        %v270 = vld [vmem:[%s265 + $0x34] sm:$0xff]
        %v271 = vld [vmem:[%s265 + $0x3c] sm:$0xff]
        %v272 = vld [vmem:[%s265 + $0x4c] sm:$0xff]
        %v273 = vld [vmem:[%s265 + $0x54] sm:$0xff]
        %v274 = vld [vmem:[%s265 + $0x64] sm:$0xff]
        %v275 = vld [vmem:[%s265 + $0x6c] sm:$0xff]
        %v276 = vld [vmem:[%s265 + $0x7c] sm:$0xff]
        %v277 = vld [vmem:[%s265 + $0x84] sm:$0xff]
        %v278 = vld [vmem:[%s265 + $0x94] sm:$0xff]
        %v279 = vld [vmem:[%s265 + $0x9c] sm:$0xff]
        %v280 = vld [vmem:[%s265 + $0xac] sm:$0xff]
        %v281 = vld [vmem:[%s265 + $0xb4] sm:$0xff]
        %v282 = vld [vmem:[#allocation3] sm:$0xff]
        %v283 = vld [vmem:[#allocation3 + $0x8] sm:$0xff]
        %v284 = vld [vmem:[#allocation3 + $0x10] sm:$0xff]
        %v285 = vld [vmem:[#allocation3 + $0x18] sm:$0xff]
        %v286 = vld [vmem:[#allocation3 + $0x20] sm:$0xff]
        %v287 = vld [vmem:[#allocation3 + $0x28] sm:$0xff]
        %v288 = vld [vmem:[#allocation3 + $0x30] sm:$0xff]
        %v289 = vld [vmem:[#allocation3 + $0x38] sm:$0xff]
        %v290 = vld [vmem:[#allocation3 + $0x40] sm:$0xff]
        %v291 = vld [vmem:[#allocation3 + $0x48] sm:$0xff]
        %v292 = vld [vmem:[#allocation3 + $0x50] sm:$0xff]
        %v293 = vld [vmem:[#allocation3 + $0x58] sm:$0xff]
        %v294 = vld [vmem:[#allocation3 + $0x60] sm:$0xff]
        %v295 = vld [vmem:[#allocation3 + $0x68] sm:$0xff]
        %v296 = vld [vmem:[#allocation3 + $0x70] sm:$0xff]
        %v297 = vld [vmem:[#allocation3 + $0x78] sm:$0xff]
        %298 = vmatprep.subr.mxu0 0.0
        %299 = vmatpush1.msra.mxu0 %v297
        %300 = vmatprep.subr.mxu0 0.0
        %301 = vmatpush1.msra.mxu0 %v296
        %302 = vmatprep.subr.mxu0 0.0
        %303 = vmatpush1.msra.mxu0 %v295
        %304 = vmatprep.subr.mxu0 0.0
        %305 = vmatpush1.msra.mxu0 %v294
        %306 = vmatprep.subr.mxu0 0.0
        %307 = vmatpush1.msra.mxu0 %v293
        %308 = vmatprep.subr.mxu0 0.0
        %309 = vmatpush1.msra.mxu0 %v292
        %310 = vmatprep.subr.mxu0 0.0
        %311 = vmatpush1.msra.mxu0 %v291
        %312 = vmatprep.subr.mxu0 0.0
        %313 = vmatpush1.msra.mxu0 %v290
        %314 = vmatprep.subr.mxu0 0.0
        %315 = vmatpush1.msra.mxu0 %v289
        %316 = vmatprep.subr.mxu0 0.0
        %317 = vmatpush1.msra.mxu0 %v288
        %318 = vmatprep.subr.mxu0 0.0
        %319 = vmatpush1.msra.mxu0 %v287
        %320 = vmatprep.subr.mxu0 0.0
        %321 = vmatpush1.msra.mxu0 %v286
        %322 = vmatprep.subr.mxu0 0.0
        %323 = vmatpush1.msra.mxu0 %v285
        %324 = vmatprep.subr.mxu0 0.0
        %325 = vmatpush1.msra.mxu0 %v284
        %326 = vmatprep.subr.mxu0 0.0
        %327 = vmatpush1.msra.mxu0 %v283
        %328 = vmatprep.subr.mxu0 0.0
        %329 = vmatpush1.msra.mxu0 %v282
        %330 = vmatprep.subr.mxu0 0.0
        %331 = vmatpush2.msra.mxu0 0.0
        %332 = vmatprep.subr.mxu0 0.0
        %333 = vmatpush2.msra.mxu0 0.0
        %334 = vmatprep.subr.mxu0 0.0
        %335 = vmatpush2.msra.mxu0 0.0
        %336 = vmatprep.subr.mxu0 0.0
        %337 = vmatpush2.msra.mxu0 0.0
        %338 = vmatprep.subr.mxu0 0.0
        %339 = vmatpush2.msra.mxu0 0.0
        %340 = vmatprep.subr.mxu0 0.0
        %341 = vmatpush2.msra.mxu0 0.0
        %342 = vmatprep.subr.mxu0 0.0
        %343 = vmatpush2.msra.mxu0 0.0
        %344 = vmatprep.subr.mxu0 0.0
        %345 = vmatpush2.msra.mxu0 0.0
        %346 = vmatprep.subr.mxu0 0.0
        %347 = vmatpush2.msra.mxu0 0.0
        %348 = vmatprep.subr.mxu0 0.0
        %349 = vmatpush2.msra.mxu0 0.0
        %350 = vmatprep.subr.mxu0 0.0
        %351 = vmatpush2.msra.mxu0 0.0
        %352 = vmatprep.subr.mxu0 0.0
        %353 = vmatpush2.msra.mxu0 0.0
        %354 = vmatprep.subr.mxu0 0.0
        %355 = vmatpush2.msra.mxu0 0.0
        %356 = vmatprep.subr.mxu0 0.0
        %357 = vmatpush2.msra.mxu0 0.0
        %358 = vmatprep.subr.mxu0 0.0
        %359 = vmatpush2.msra.mxu0 0.0
        %360 = vmatprep.subr.mxu0 0.0
        %361 = vmatpush2.msra.mxu0 0.0
        %362 = vmatprep.mubr.f32.mxu0 0.0
        %363 = vmatmul.mubr.f32.gmra.mxu0 %v266
        %v364 = vpop.f32.mrf.mxu0
        %v365 = vadd.f32 0.0, %v364
        %v366 = vpop.f32.mrf.mxu0
        %367 = vmatprep.mubr.f32.mxu0 0.0
        %368 = vmatmul.mubr.f32.gmra.mxu0 %v267
        %v369 = vpop.f32.mrf.mxu0
        %v370 = vadd.f32 0.0, %v369
        %v371 = vpop.f32.mrf.mxu0
        %372 = vmatprep.mubr.f32.mxu0 0.0
        %373 = vmatmul.mubr.f32.gmra.mxu0 %v268
        %v374 = vpop.f32.mrf.mxu0
        %v375 = vadd.f32 0.0, %v374
        %v376 = vpop.f32.mrf.mxu0
        %377 = vmatprep.mubr.f32.mxu0 0.0
        %378 = vmatmul.mubr.f32.gmra.mxu0 %v269
        %v379 = vpop.f32.mrf.mxu0
        %v380 = vadd.f32 0.0, %v379
        %v381 = vpop.f32.mrf.mxu0
        %382 = vmatprep.mubr.f32.mxu0 0.0
        %383 = vmatmul.mubr.f32.gmra.mxu0 %v270
        %v384 = vpop.f32.mrf.mxu0
        %v385 = vadd.f32 0.0, %v384
        %v386 = vpop.f32.mrf.mxu0
        %387 = vmatprep.mubr.f32.mxu0 0.0
        %388 = vmatmul.mubr.f32.gmra.mxu0 %v271
        %v389 = vpop.f32.mrf.mxu0
        %v390 = vadd.f32 0.0, %v389
        %v391 = vpop.f32.mrf.mxu0
        %392 = vmatprep.mubr.f32.mxu0 0.0
        %393 = vmatmul.mubr.f32.gmra.mxu0 %v272
        %v394 = vpop.f32.mrf.mxu0
        %v395 = vadd.f32 0.0, %v394
        %v396 = vpop.f32.mrf.mxu0
        %397 = vmatprep.mubr.f32.mxu0 0.0
        %398 = vmatmul.mubr.f32.gmra.mxu0 %v273
        %v399 = vpop.f32.mrf.mxu0
        %v400 = vadd.f32 0.0, %v399
        %v401 = vpop.f32.mrf.mxu0
        %402 = vmatprep.mubr.f32.mxu0 0.0
        %403 = vmatmul.mubr.f32.gmra.mxu0 %v274
        %v404 = vpop.f32.mrf.mxu0
        %v405 = vadd.f32 0.0, %v404
        %v406 = vpop.f32.mrf.mxu0
        %407 = vmatprep.mubr.f32.mxu0 0.0
        %408 = vmatmul.mubr.f32.gmra.mxu0 %v275
        %v409 = vpop.f32.mrf.mxu0
        %v410 = vadd.f32 0.0, %v409
        %v411 = vpop.f32.mrf.mxu0
        %412 = vmatprep.mubr.f32.mxu0 0.0
        %413 = vmatmul.mubr.f32.gmra.mxu0 %v276
        %v414 = vpop.f32.mrf.mxu0
        %v415 = vadd.f32 0.0, %v414
        %v416 = vpop.f32.mrf.mxu0
        %417 = vmatprep.mubr.f32.mxu0 0.0
        %418 = vmatmul.mubr.f32.gmra.mxu0 %v277
        %v419 = vpop.f32.mrf.mxu0
        %v420 = vadd.f32 0.0, %v419
        %v421 = vpop.f32.mrf.mxu0
        %422 = vmatprep.mubr.f32.mxu0 0.0
        %423 = vmatmul.mubr.f32.gmra.mxu0 %v278
        %v424 = vpop.f32.mrf.mxu0
        %v425 = vadd.f32 0.0, %v424
        %v426 = vpop.f32.mrf.mxu0
        %427 = vmatprep.mubr.f32.mxu0 0.0
        %428 = vmatmul.mubr.f32.gmra.mxu0 %v279
        %v429 = vpop.f32.mrf.mxu0
        %v430 = vadd.f32 0.0, %v429
        %v431 = vpop.f32.mrf.mxu0
        %432 = vmatprep.mubr.f32.mxu0 0.0
        %433 = vmatmul.mubr.f32.gmra.mxu0 %v280
        %v434 = vpop.f32.mrf.mxu0
        %v435 = vadd.f32 0.0, %v434
        %v436 = vpop.f32.mrf.mxu0
        %437 = vmatprep.mubr.f32.mxu0 0.0
        %438 = vmatmul.mubr.f32.gmra.mxu0 %v281
        %v439 = vpop.f32.mrf.mxu0
        %v440 = vadd.f32 0.0, %v439
        %v441 = vpop.f32.mrf.mxu0
        %442 = vdwg.mxu0
        %443 = vst [vmem:[%s228] sm:$0xff] %v365
        %444 = vst [vmem:[%s228 + $0x18] sm:$0xff] %v370
        %445 = vst [vmem:[%s228 + $0x30] sm:$0xff] %v375
        %446 = vst [vmem:[%s228 + $0x48] sm:$0xff] %v380
        %447 = vst [vmem:[%s228 + $0x60] sm:$0xff] %v385
        %448 = vst [vmem:[%s228 + $0x78] sm:$0xff] %v390
        %449 = vst [vmem:[%s228 + $0x90] sm:$0xff] %v395
        %450 = vst [vmem:[%s228 + $0xa8] sm:$0xff] %v400
        %451 = vst [vmem:[%s228 + $0xc0] sm:$0xff] %v405
        %452 = vst [vmem:[%s228 + $0xd8] sm:$0xff] %v410
        %453 = vst [vmem:[%s228 + $0xf0] sm:$0xff] %v415
        %454 = vst [vmem:[%s228 + $0x108] sm:$0xff] %v420
        %455 = vst [vmem:[%s228 + $0x120] sm:$0xff] %v425
        %456 = vst [vmem:[%s228 + $0x138] sm:$0xff] %v430
        %457 = vst [vmem:[%s228 + $0x150] sm:$0xff] %v435
        %458 = vst [vmem:[%s228 + $0x168] sm:$0xff] %v440
        %v459 = vadd.f32 %v365, %v370
        %v460 = vadd.f32 %v459, %v375
        %v461 = vadd.f32 %v460, %v380
        %v462 = vadd.f32 %v461, %v385
        %v463 = vadd.f32 %v462, %v390
        %v464 = vadd.f32 %v463, %v395
        %v465 = vadd.f32 %v464, %v400
        %v466 = vadd.f32 %v465, %v405
        %v467 = vadd.f32 %v466, %v410
        %v468 = vadd.f32 %v467, %v415
        %v469 = vadd.f32 %v468, %v420
        %v470 = vadd.f32 %v469, %v425
        %v471 = vadd.f32 %v470, %v430
        %v472 = vadd.f32 %v471, %v435
        %v473 = vadd.f32 %v472, %v440
        %v474 = vrot.slane %v473, 4
        %v475 = vadd.f32 %v473, %v474
        %v476 = vrot.slane %v475, 2
        %v477 = vadd.f32 %v475, %v476
        %v478 = vrot.slane %v477, 1
        %v479 = vadd.f32 %v477, %v478
        %v480 = vmul.f32 %v365, %v365
        %v481 = vmul.f32 %v370, %v370
        %v482 = vmul.f32 %v375, %v375
        %v483 = vmul.f32 %v380, %v380
        %v484 = vmul.f32 %v385, %v385
        %v485 = vmul.f32 %v390, %v390
        %v486 = vmul.f32 %v395, %v395
        %v487 = vmul.f32 %v400, %v400
        %v488 = vmul.f32 %v405, %v405
        %v489 = vmul.f32 %v410, %v410
        %v490 = vmul.f32 %v415, %v415
        %v491 = vmul.f32 %v420, %v420
        %v492 = vmul.f32 %v425, %v425
        %v493 = vmul.f32 %v430, %v430
        %v494 = vmul.f32 %v435, %v435
        %v495 = vmul.f32 %v440, %v440
        %v496 = vadd.f32 %v480, %v481
        %v497 = vadd.f32 %v496, %v482
        %v498 = vadd.f32 %v497, %v483
        %v499 = vadd.f32 %v498, %v484
        %v500 = vadd.f32 %v499, %v485
        %v501 = vadd.f32 %v500, %v486
        %v502 = vadd.f32 %v501, %v487
        %v503 = vadd.f32 %v502, %v488
        %v504 = vadd.f32 %v503, %v489
        %v505 = vadd.f32 %v504, %v490
        %v506 = vadd.f32 %v505, %v491
        %v507 = vadd.f32 %v506, %v492
        %v508 = vadd.f32 %v507, %v493
        %v509 = vadd.f32 %v508, %v494
        %v510 = vadd.f32 %v509, %v495
        %v511 = vrot.slane %v510, 4
        %v512 = vadd.f32 %v510, %v511
        %v513 = vrot.slane %v512, 2
        %v514 = vadd.f32 %v512, %v513
        %v515 = vrot.slane %v514, 1
        %v516 = vadd.f32 %v514, %v515
        %s517 = scalar_lea.vmem [#allocation2], 48
        %v518 = vld [vmem:[%s517 + $0x2] sm:$0xff]
        %v519 = vld [vmem:[%s517 + $0xa] sm:$0xff]
        %v520 = vld [vmem:[%s517 + $0x1a] sm:$0xff]
        %v521 = vld [vmem:[%s517 + $0x22] sm:$0xff]
        %v522 = vld [vmem:[%s517 + $0x32] sm:$0xff]
        %v523 = vld [vmem:[%s517 + $0x3a] sm:$0xff]
        %v524 = vld [vmem:[%s517 + $0x4a] sm:$0xff]
        %v525 = vld [vmem:[%s517 + $0x52] sm:$0xff]
        %v526 = vld [vmem:[%s517 + $0x62] sm:$0xff]
        %v527 = vld [vmem:[%s517 + $0x6a] sm:$0xff]
        %v528 = vld [vmem:[%s517 + $0x7a] sm:$0xff]
        %v529 = vld [vmem:[%s517 + $0x82] sm:$0xff]
        %v530 = vld [vmem:[%s517 + $0x92] sm:$0xff]
        %v531 = vld [vmem:[%s517 + $0x9a] sm:$0xff]
        %v532 = vld [vmem:[%s517 + $0xaa] sm:$0xff]
        %v533 = vld [vmem:[%s517 + $0xb2] sm:$0xff]
        %v534 = vld [vmem:[%s517 + $0x4] sm:$0xff]
        %v535 = vld [vmem:[%s517 + $0xc] sm:$0xff]
        %v536 = vld [vmem:[%s517 + $0x1c] sm:$0xff]
        %v537 = vld [vmem:[%s517 + $0x24] sm:$0xff]
        %v538 = vld [vmem:[%s517 + $0x34] sm:$0xff]
        %v539 = vld [vmem:[%s517 + $0x3c] sm:$0xff]
        %v540 = vld [vmem:[%s517 + $0x4c] sm:$0xff]
        %v541 = vld [vmem:[%s517 + $0x54] sm:$0xff]
        %v542 = vld [vmem:[%s517 + $0x64] sm:$0xff]
        %v543 = vld [vmem:[%s517 + $0x6c] sm:$0xff]
        %v544 = vld [vmem:[%s517 + $0x7c] sm:$0xff]
        %v545 = vld [vmem:[%s517 + $0x84] sm:$0xff]
        %v546 = vld [vmem:[%s517 + $0x94] sm:$0xff]
        %v547 = vld [vmem:[%s517 + $0x9c] sm:$0xff]
        %v548 = vld [vmem:[%s517 + $0xac] sm:$0xff]
        %v549 = vld [vmem:[%s517 + $0xb4] sm:$0xff]
        %v550 = vld [vmem:[%s517 + $0x6] sm:$0xff]
        %v551 = vld [vmem:[%s517 + $0xe] sm:$0xff]
        %v552 = vld [vmem:[%s517 + $0x1e] sm:$0xff]
        %v553 = vld [vmem:[%s517 + $0x26] sm:$0xff]
        %v554 = vld [vmem:[%s517 + $0x36] sm:$0xff]
        %v555 = vld [vmem:[%s517 + $0x3e] sm:$0xff]
        %v556 = vld [vmem:[%s517 + $0x4e] sm:$0xff]
        %v557 = vld [vmem:[%s517 + $0x56] sm:$0xff]
        %v558 = vld [vmem:[%s517 + $0x66] sm:$0xff]
        %v559 = vld [vmem:[%s517 + $0x6e] sm:$0xff]
        %v560 = vld [vmem:[%s517 + $0x7e] sm:$0xff]
        %v561 = vld [vmem:[%s517 + $0x86] sm:$0xff]
        %v562 = vld [vmem:[%s517 + $0x96] sm:$0xff]
        %v563 = vld [vmem:[%s517 + $0x9e] sm:$0xff]
        %v564 = vld [vmem:[%s517 + $0xae] sm:$0xff]
        %v565 = vld [vmem:[%s517 + $0xb6] sm:$0xff]
        %v566 = vld [vmem:[%s265 + $0x2] sm:$0xff]
        %v567 = vld [vmem:[%s265 + $0xa] sm:$0xff]
        %v568 = vld [vmem:[%s265 + $0x1a] sm:$0xff]
        %v569 = vld [vmem:[%s265 + $0x22] sm:$0xff]
        %v570 = vld [vmem:[%s265 + $0x32] sm:$0xff]
        %v571 = vld [vmem:[%s265 + $0x3a] sm:$0xff]
        %v572 = vld [vmem:[%s265 + $0x4a] sm:$0xff]
        %v573 = vld [vmem:[%s265 + $0x52] sm:$0xff]
        %v574 = vld [vmem:[%s265 + $0x62] sm:$0xff]
        %v575 = vld [vmem:[%s265 + $0x6a] sm:$0xff]
        %v576 = vld [vmem:[%s265 + $0x7a] sm:$0xff]
        %v577 = vld [vmem:[%s265 + $0x82] sm:$0xff]
        %v578 = vld [vmem:[%s265 + $0x92] sm:$0xff]
        %v579 = vld [vmem:[%s265 + $0x9a] sm:$0xff]
        %v580 = vld [vmem:[%s265 + $0xaa] sm:$0xff]
        %v581 = vld [vmem:[%s265 + $0xb2] sm:$0xff]
        %v582 = vld [vmem:[%s265 + $0x4] sm:$0xff]
        %v583 = vld [vmem:[%s265 + $0xc] sm:$0xff]
        %v584 = vld [vmem:[%s265 + $0x1c] sm:$0xff]
        %v585 = vld [vmem:[%s265 + $0x24] sm:$0xff]
        %v586 = vld [vmem:[%s265 + $0x34] sm:$0xff]
        %v587 = vld [vmem:[%s265 + $0x3c] sm:$0xff]
        %v588 = vld [vmem:[%s265 + $0x4c] sm:$0xff]
        %v589 = vld [vmem:[%s265 + $0x54] sm:$0xff]
        %v590 = vld [vmem:[%s265 + $0x64] sm:$0xff]
        %v591 = vld [vmem:[%s265 + $0x6c] sm:$0xff]
        %v592 = vld [vmem:[%s265 + $0x7c] sm:$0xff]
        %v593 = vld [vmem:[%s265 + $0x84] sm:$0xff]
        %v594 = vld [vmem:[%s265 + $0x94] sm:$0xff]
        %v595 = vld [vmem:[%s265 + $0x9c] sm:$0xff]
        %v596 = vld [vmem:[%s265 + $0xac] sm:$0xff]
        %v597 = vld [vmem:[%s265 + $0xb4] sm:$0xff]
        %v598 = vld [vmem:[%s265 + $0x6] sm:$0xff]
        %v599 = vld [vmem:[%s265 + $0xe] sm:$0xff]
        %v600 = vld [vmem:[%s265 + $0x1e] sm:$0xff]
        %v601 = vld [vmem:[%s265 + $0x26] sm:$0xff]
        %v602 = vld [vmem:[%s265 + $0x36] sm:$0xff]
        %v603 = vld [vmem:[%s265 + $0x3e] sm:$0xff]
        %v604 = vld [vmem:[%s265 + $0x4e] sm:$0xff]
        %v605 = vld [vmem:[%s265 + $0x56] sm:$0xff]
        %v606 = vld [vmem:[%s265 + $0x66] sm:$0xff]
        %v607 = vld [vmem:[%s265 + $0x6e] sm:$0xff]
        %v608 = vld [vmem:[%s265 + $0x7e] sm:$0xff]
        %v609 = vld [vmem:[%s265 + $0x86] sm:$0xff]
        %v610 = vld [vmem:[%s265 + $0x96] sm:$0xff]
        %v611 = vld [vmem:[%s265 + $0x9e] sm:$0xff]
        %v612 = vld [vmem:[%s265 + $0xae] sm:$0xff]
        %v613 = vld [vmem:[%s265 + $0xb6] sm:$0xff]
        %s614 = scalar_lea.vmem [#allocation2], 144
        %v615 = vld [vmem:[%s614 + $0x2] sm:$0xff]
        %v616 = vld [vmem:[%s614 + $0xa] sm:$0xff]
        %v617 = vld [vmem:[%s614 + $0x1a] sm:$0xff]
        %v618 = vld [vmem:[%s614 + $0x22] sm:$0xff]
        %v619 = vld [vmem:[%s614 + $0x32] sm:$0xff]
        %v620 = vld [vmem:[%s614 + $0x3a] sm:$0xff]
        %v621 = vld [vmem:[%s614 + $0x4a] sm:$0xff]
        %v622 = vld [vmem:[%s614 + $0x52] sm:$0xff]
        %v623 = vld [vmem:[%s614 + $0x62] sm:$0xff]
        %v624 = vld [vmem:[%s614 + $0x6a] sm:$0xff]
        %v625 = vld [vmem:[%s614 + $0x7a] sm:$0xff]
        %v626 = vld [vmem:[%s614 + $0x82] sm:$0xff]
        %v627 = vld [vmem:[%s614 + $0x92] sm:$0xff]
        %v628 = vld [vmem:[%s614 + $0x9a] sm:$0xff]
        %v629 = vld [vmem:[%s614 + $0xaa] sm:$0xff]
        %v630 = vld [vmem:[%s614 + $0xb2] sm:$0xff]
        %v631 = vld [vmem:[%s614 + $0x4] sm:$0xff]
        %v632 = vld [vmem:[%s614 + $0xc] sm:$0xff]
        %v633 = vld [vmem:[%s614 + $0x1c] sm:$0xff]
        %v634 = vld [vmem:[%s614 + $0x24] sm:$0xff]
        %v635 = vld [vmem:[%s614 + $0x34] sm:$0xff]
        %v636 = vld [vmem:[%s614 + $0x3c] sm:$0xff]
        %v637 = vld [vmem:[%s614 + $0x4c] sm:$0xff]
        %v638 = vld [vmem:[%s614 + $0x54] sm:$0xff]
        %v639 = vld [vmem:[%s614 + $0x64] sm:$0xff]
        %v640 = vld [vmem:[%s614 + $0x6c] sm:$0xff]
        %v641 = vld [vmem:[%s614 + $0x7c] sm:$0xff]
        %v642 = vld [vmem:[%s614 + $0x84] sm:$0xff]
        %v643 = vld [vmem:[%s614 + $0x94] sm:$0xff]
        %v644 = vld [vmem:[%s614 + $0x9c] sm:$0xff]
        %v645 = vld [vmem:[%s614 + $0xac] sm:$0xff]
        %v646 = vld [vmem:[%s614 + $0xb4] sm:$0xff]
        %v647 = vld [vmem:[%s614 + $0x6] sm:$0xff]
        %v648 = vld [vmem:[%s614 + $0xe] sm:$0xff]
        %v649 = vld [vmem:[%s614 + $0x1e] sm:$0xff]
        %v650 = vld [vmem:[%s614 + $0x26] sm:$0xff]
        %v651 = vld [vmem:[%s614 + $0x36] sm:$0xff]
        %v652 = vld [vmem:[%s614 + $0x3e] sm:$0xff]
        %v653 = vld [vmem:[%s614 + $0x4e] sm:$0xff]
        %v654 = vld [vmem:[%s614 + $0x56] sm:$0xff]
        %v655 = vld [vmem:[%s614 + $0x66] sm:$0xff]
        %v656 = vld [vmem:[%s614 + $0x6e] sm:$0xff]
        %v657 = vld [vmem:[%s614 + $0x7e] sm:$0xff]
        %v658 = vld [vmem:[%s614 + $0x86] sm:$0xff]
        %v659 = vld [vmem:[%s614 + $0x96] sm:$0xff]
        %v660 = vld [vmem:[%s614 + $0x9e] sm:$0xff]
        %v661 = vld [vmem:[%s614 + $0xae] sm:$0xff]
        %v662 = vld [vmem:[%s614 + $0xb6] sm:$0xff]
        %v663 = vld [vmem:[#allocation6] sm:$0xff]
        %v664 = vld [vmem:[#allocation6 + $0x8] sm:$0xff]
        %v665 = vld [vmem:[#allocation6 + $0x10] sm:$0xff]
        %v666 = vld [vmem:[#allocation6 + $0x18] sm:$0xff]
        %v667 = vld [vmem:[#allocation6 + $0x20] sm:$0xff]
        %v668 = vld [vmem:[#allocation6 + $0x28] sm:$0xff]
        %v669 = vld [vmem:[#allocation6 + $0x30] sm:$0xff]
        %v670 = vld [vmem:[#allocation6 + $0x38] sm:$0xff]
        %v671 = vld [vmem:[#allocation6 + $0x40] sm:$0xff]
        %v672 = vld [vmem:[#allocation6 + $0x48] sm:$0xff]
        %v673 = vld [vmem:[#allocation6 + $0x50] sm:$0xff]
        %v674 = vld [vmem:[#allocation6 + $0x58] sm:$0xff]
        %v675 = vld [vmem:[#allocation6 + $0x60] sm:$0xff]
        %v676 = vld [vmem:[#allocation6 + $0x68] sm:$0xff]
        %v677 = vld [vmem:[#allocation6 + $0x70] sm:$0xff]
        %v678 = vld [vmem:[#allocation6 + $0x78] sm:$0xff]
        %v679 = vld [vmem:[#allocation6 + $0x80] sm:$0xff]
        %v680 = vld [vmem:[#allocation6 + $0x88] sm:$0xff]
        %v681 = vld [vmem:[#allocation6 + $0x90] sm:$0xff]
        %v682 = vld [vmem:[#allocation6 + $0x98] sm:$0xff]
        %v683 = vld [vmem:[#allocation6 + $0xa0] sm:$0xff]
        %v684 = vld [vmem:[#allocation6 + $0xa8] sm:$0xff]
        %v685 = vld [vmem:[#allocation6 + $0xb0] sm:$0xff]
        %v686 = vld [vmem:[#allocation6 + $0xb8] sm:$0xff]
        %v687 = vld [vmem:[#allocation6 + $0xc0] sm:$0xff]
        %v688 = vld [vmem:[#allocation6 + $0xc8] sm:$0xff]
        %v689 = vld [vmem:[#allocation6 + $0xd0] sm:$0xff]
        %v690 = vld [vmem:[#allocation6 + $0xd8] sm:$0xff]
        %v691 = vld [vmem:[#allocation6 + $0xe0] sm:$0xff]
        %v692 = vld [vmem:[#allocation6 + $0xe8] sm:$0xff]
        %v693 = vld [vmem:[#allocation6 + $0xf0] sm:$0xff]
        %v694 = vld [vmem:[#allocation6 + $0xf8] sm:$0xff]
        %v695 = vld [vmem:[#allocation6 + $0x100] sm:$0xff]
        %v696 = vld [vmem:[#allocation6 + $0x108] sm:$0xff]
        %v697 = vld [vmem:[#allocation6 + $0x110] sm:$0xff]
        %v698 = vld [vmem:[#allocation6 + $0x118] sm:$0xff]
        %v699 = vld [vmem:[#allocation6 + $0x120] sm:$0xff]
        %v700 = vld [vmem:[#allocation6 + $0x128] sm:$0xff]
        %v701 = vld [vmem:[#allocation6 + $0x130] sm:$0xff]
        %v702 = vld [vmem:[#allocation6 + $0x138] sm:$0xff]
        %v703 = vld [vmem:[#allocation6 + $0x140] sm:$0xff]
        %v704 = vld [vmem:[#allocation6 + $0x148] sm:$0xff]
        %v705 = vld [vmem:[#allocation6 + $0x150] sm:$0xff]
        %v706 = vld [vmem:[#allocation6 + $0x158] sm:$0xff]
        %v707 = vld [vmem:[#allocation6 + $0x160] sm:$0xff]
        %v708 = vld [vmem:[#allocation6 + $0x168] sm:$0xff]
        %v709 = vld [vmem:[#allocation6 + $0x170] sm:$0xff]
        %v710 = vld [vmem:[#allocation6 + $0x178] sm:$0xff]
        %v711 = vld [vmem:[#allocation6 + $0x180] sm:$0xff]
        %v712 = vld [vmem:[#allocation6 + $0x188] sm:$0xff]
        %v713 = vld [vmem:[#allocation6 + $0x190] sm:$0xff]
        %v714 = vld [vmem:[#allocation6 + $0x198] sm:$0xff]
        %v715 = vld [vmem:[#allocation6 + $0x1a0] sm:$0xff]
        %v716 = vld [vmem:[#allocation6 + $0x1a8] sm:$0xff]
        %v717 = vld [vmem:[#allocation6 + $0x1b0] sm:$0xff]
        %v718 = vld [vmem:[#allocation6 + $0x1b8] sm:$0xff]
        %v719 = vld [vmem:[#allocation6 + $0x1c0] sm:$0xff]
        %v720 = vld [vmem:[#allocation6 + $0x1c8] sm:$0xff]
        %v721 = vld [vmem:[#allocation6 + $0x1d0] sm:$0xff]
        %v722 = vld [vmem:[#allocation6 + $0x1d8] sm:$0xff]
        %v723 = vld [vmem:[#allocation6 + $0x1e0] sm:$0xff]
        %v724 = vld [vmem:[#allocation6 + $0x1e8] sm:$0xff]
        %v725 = vld [vmem:[#allocation6 + $0x1f0] sm:$0xff]
        %v726 = vld [vmem:[#allocation6 + $0x1f8] sm:$0xff]
        %v727 = vld [vmem:[#allocation6 + $0x200] sm:$0xff]
        %v728 = vld [vmem:[#allocation6 + $0x208] sm:$0xff]
        %v729 = vld [vmem:[#allocation6 + $0x210] sm:$0xff]
        %v730 = vld [vmem:[#allocation6 + $0x218] sm:$0xff]
        %v731 = vld [vmem:[#allocation6 + $0x220] sm:$0xff]
        %v732 = vld [vmem:[#allocation6 + $0x228] sm:$0xff]
        %v733 = vld [vmem:[#allocation6 + $0x230] sm:$0xff]
        %v734 = vld [vmem:[#allocation6 + $0x238] sm:$0xff]
        %v735 = vld [vmem:[#allocation6 + $0x240] sm:$0xff]
        %v736 = vld [vmem:[#allocation6 + $0x248] sm:$0xff]
        %v737 = vld [vmem:[#allocation6 + $0x250] sm:$0xff]
        %v738 = vld [vmem:[#allocation6 + $0x258] sm:$0xff]
        %v739 = vld [vmem:[#allocation6 + $0x260] sm:$0xff]
        %v740 = vld [vmem:[#allocation6 + $0x268] sm:$0xff]
        %v741 = vld [vmem:[#allocation6 + $0x270] sm:$0xff]
        %v742 = vld [vmem:[#allocation6 + $0x278] sm:$0xff]
        %v743 = vld [vmem:[#allocation6 + $0x280] sm:$0xff]
        %v744 = vld [vmem:[#allocation6 + $0x288] sm:$0xff]
        %v745 = vld [vmem:[#allocation6 + $0x290] sm:$0xff]
        %v746 = vld [vmem:[#allocation6 + $0x298] sm:$0xff]
        %v747 = vld [vmem:[#allocation6 + $0x2a0] sm:$0xff]
        %v748 = vld [vmem:[#allocation6 + $0x2a8] sm:$0xff]
        %v749 = vld [vmem:[#allocation6 + $0x2b0] sm:$0xff]
        %v750 = vld [vmem:[#allocation6 + $0x2b8] sm:$0xff]
        %v751 = vld [vmem:[#allocation6 + $0x2c0] sm:$0xff]
        %v752 = vld [vmem:[#allocation6 + $0x2c8] sm:$0xff]
        %v753 = vld [vmem:[#allocation6 + $0x2d0] sm:$0xff]
        %v754 = vld [vmem:[#allocation6 + $0x2d8] sm:$0xff]
        %v755 = vld [vmem:[#allocation6 + $0x2e0] sm:$0xff]
        %v756 = vld [vmem:[#allocation6 + $0x2e8] sm:$0xff]
        %v757 = vld [vmem:[#allocation6 + $0x2f0] sm:$0xff]
        %v758 = vld [vmem:[#allocation6 + $0x2f8] sm:$0xff]
        %v759 = vld [vmem:[#allocation6 + $0x300] sm:$0xff]
        %v760 = vld [vmem:[#allocation6 + $0x308] sm:$0xff]
        %v761 = vld [vmem:[#allocation6 + $0x310] sm:$0xff]
        %v762 = vld [vmem:[#allocation6 + $0x318] sm:$0xff]
        %v763 = vld [vmem:[#allocation6 + $0x320] sm:$0xff]
        %v764 = vld [vmem:[#allocation6 + $0x328] sm:$0xff]
        %v765 = vld [vmem:[#allocation6 + $0x330] sm:$0xff]
        %v766 = vld [vmem:[#allocation6 + $0x338] sm:$0xff]
        %v767 = vld [vmem:[#allocation6 + $0x340] sm:$0xff]
        %v768 = vld [vmem:[#allocation6 + $0x348] sm:$0xff]
        %v769 = vld [vmem:[#allocation6 + $0x350] sm:$0xff]
        %v770 = vld [vmem:[#allocation6 + $0x358] sm:$0xff]
        %v771 = vld [vmem:[#allocation6 + $0x360] sm:$0xff]
        %v772 = vld [vmem:[#allocation6 + $0x368] sm:$0xff]
        %v773 = vld [vmem:[#allocation6 + $0x370] sm:$0xff]
        %v774 = vld [vmem:[#allocation6 + $0x378] sm:$0xff]
        %v775 = vld [vmem:[#allocation6 + $0x380] sm:$0xff]
        %v776 = vld [vmem:[#allocation6 + $0x388] sm:$0xff]
        %v777 = vld [vmem:[#allocation6 + $0x390] sm:$0xff]
        %v778 = vld [vmem:[#allocation6 + $0x398] sm:$0xff]
        %v779 = vld [vmem:[#allocation6 + $0x3a0] sm:$0xff]
        %v780 = vld [vmem:[#allocation6 + $0x3a8] sm:$0xff]
        %v781 = vld [vmem:[#allocation6 + $0x3b0] sm:$0xff]
        %v782 = vld [vmem:[#allocation6 + $0x3b8] sm:$0xff]
        %v783 = vld [vmem:[#allocation6 + $0x3c0] sm:$0xff]
        %v784 = vld [vmem:[#allocation6 + $0x3c8] sm:$0xff]
        %v785 = vld [vmem:[#allocation6 + $0x3d0] sm:$0xff]
        %v786 = vld [vmem:[#allocation6 + $0x3d8] sm:$0xff]
        %v787 = vld [vmem:[#allocation6 + $0x3e0] sm:$0xff]
        %v788 = vld [vmem:[#allocation6 + $0x3e8] sm:$0xff]
        %v789 = vld [vmem:[#allocation6 + $0x3f0] sm:$0xff]
        %v790 = vld [vmem:[#allocation6 + $0x3f8] sm:$0xff]
        %v791 = vld [vmem:[#allocation6 + $0x400] sm:$0xff]
        %v792 = vld [vmem:[#allocation6 + $0x408] sm:$0xff]
        %v793 = vld [vmem:[#allocation6 + $0x410] sm:$0xff]
        %v794 = vld [vmem:[#allocation6 + $0x418] sm:$0xff]
        %v795 = vld [vmem:[#allocation6 + $0x420] sm:$0xff]
        %v796 = vld [vmem:[#allocation6 + $0x428] sm:$0xff]
        %v797 = vld [vmem:[#allocation6 + $0x430] sm:$0xff]
        %v798 = vld [vmem:[#allocation6 + $0x438] sm:$0xff]
        %v799 = vld [vmem:[#allocation6 + $0x440] sm:$0xff]
        %v800 = vld [vmem:[#allocation6 + $0x448] sm:$0xff]
        %v801 = vld [vmem:[#allocation6 + $0x450] sm:$0xff]
        %v802 = vld [vmem:[#allocation6 + $0x458] sm:$0xff]
        %v803 = vld [vmem:[#allocation6 + $0x460] sm:$0xff]
        %v804 = vld [vmem:[#allocation6 + $0x468] sm:$0xff]
        %v805 = vld [vmem:[#allocation6 + $0x470] sm:$0xff]
        %v806 = vld [vmem:[#allocation6 + $0x478] sm:$0xff]
        %807 = vmatprep.subr.mxu0 0.0
        %808 = vmatpush1.msra.mxu0 %v678
        %809 = vmatprep.subr.mxu0 0.0
        %810 = vmatpush1.msra.mxu0 %v677
        %811 = vmatprep.subr.mxu0 0.0
        %812 = vmatpush1.msra.mxu0 %v676
        %813 = vmatprep.subr.mxu0 0.0
        %814 = vmatpush1.msra.mxu0 %v675
        %815 = vmatprep.subr.mxu0 0.0
        %816 = vmatpush1.msra.mxu0 %v674
        %817 = vmatprep.subr.mxu0 0.0
        %818 = vmatpush1.msra.mxu0 %v673
        %819 = vmatprep.subr.mxu0 0.0
        %820 = vmatpush1.msra.mxu0 %v672
        %821 = vmatprep.subr.mxu0 0.0
        %822 = vmatpush1.msra.mxu0 %v671
        %823 = vmatprep.subr.mxu0 0.0
        %824 = vmatpush1.msra.mxu0 %v670
        %825 = vmatprep.subr.mxu0 0.0
        %826 = vmatpush1.msra.mxu0 %v669
        %827 = vmatprep.subr.mxu0 0.0
        %828 = vmatpush1.msra.mxu0 %v668
        %829 = vmatprep.subr.mxu0 0.0
        %830 = vmatpush1.msra.mxu0 %v667
        %831 = vmatprep.subr.mxu0 0.0
        %832 = vmatpush1.msra.mxu0 %v666
        %833 = vmatprep.subr.mxu0 0.0
        %834 = vmatpush1.msra.mxu0 %v665
        %835 = vmatprep.subr.mxu0 0.0
        %836 = vmatpush1.msra.mxu0 %v664
        %837 = vmatprep.subr.mxu0 0.0
        %838 = vmatpush1.msra.mxu0 %v663
        %839 = vmatprep.subr.mxu0 0.0
        %840 = vmatpush2.msra.mxu0 %v694
        %841 = vmatprep.subr.mxu0 0.0
        %842 = vmatpush2.msra.mxu0 %v693
        %843 = vmatprep.subr.mxu0 0.0
        %844 = vmatpush2.msra.mxu0 %v692
        %845 = vmatprep.subr.mxu0 0.0
        %846 = vmatpush2.msra.mxu0 %v691
        %847 = vmatprep.subr.mxu0 0.0
        %848 = vmatpush2.msra.mxu0 %v690
        %849 = vmatprep.subr.mxu0 0.0
        %850 = vmatpush2.msra.mxu0 %v689
        %851 = vmatprep.subr.mxu0 0.0
        %852 = vmatpush2.msra.mxu0 %v688
        %853 = vmatprep.subr.mxu0 0.0
        %854 = vmatpush2.msra.mxu0 %v687
        %855 = vmatprep.subr.mxu0 0.0
        %856 = vmatpush2.msra.mxu0 %v686
        %857 = vmatprep.subr.mxu0 0.0
        %858 = vmatpush2.msra.mxu0 %v685
        %859 = vmatprep.subr.mxu0 0.0
        %860 = vmatpush2.msra.mxu0 %v684
        %861 = vmatprep.subr.mxu0 0.0
        %862 = vmatpush2.msra.mxu0 %v683
        %863 = vmatprep.subr.mxu0 0.0
        %864 = vmatpush2.msra.mxu0 %v682
        %865 = vmatprep.subr.mxu0 0.0
        %866 = vmatpush2.msra.mxu0 %v681
        %867 = vmatprep.subr.mxu0 0.0
        %868 = vmatpush2.msra.mxu0 %v680
        %869 = vmatprep.subr.mxu0 0.0
        %870 = vmatpush2.msra.mxu0 %v679
        %871 = vmatprep.mubr.f32.mxu0 %v534
        %872 = vmatmul.mubr.f32.gmra.mxu0 %v518
        %v873 = vpop.f32.mrf.mxu0
        %v874 = vadd.f32 0.0, %v873
        %v875 = vpop.f32.mrf.mxu0
        %876 = vmatprep.mubr.f32.mxu0 %v535
        %877 = vmatmul.mubr.f32.gmra.mxu0 %v519
        %v878 = vpop.f32.mrf.mxu0
        %v879 = vadd.f32 0.0, %v878
        %v880 = vpop.f32.mrf.mxu0
        %881 = vmatprep.mubr.f32.mxu0 %v536
        %882 = vmatmul.mubr.f32.gmra.mxu0 %v520
        %v883 = vpop.f32.mrf.mxu0
        %v884 = vadd.f32 0.0, %v883
        %v885 = vpop.f32.mrf.mxu0
        %886 = vmatprep.mubr.f32.mxu0 %v537
        %887 = vmatmul.mubr.f32.gmra.mxu0 %v521
        %v888 = vpop.f32.mrf.mxu0
        %v889 = vadd.f32 0.0, %v888
        %v890 = vpop.f32.mrf.mxu0
        %891 = vmatprep.mubr.f32.mxu0 %v538
        %892 = vmatmul.mubr.f32.gmra.mxu0 %v522
        %v893 = vpop.f32.mrf.mxu0
        %v894 = vadd.f32 0.0, %v893
        %v895 = vpop.f32.mrf.mxu0
        %896 = vmatprep.mubr.f32.mxu0 %v539
        %897 = vmatmul.mubr.f32.gmra.mxu0 %v523
        %v898 = vpop.f32.mrf.mxu0
        %v899 = vadd.f32 0.0, %v898
        %v900 = vpop.f32.mrf.mxu0
        %901 = vmatprep.mubr.f32.mxu0 %v540
        %902 = vmatmul.mubr.f32.gmra.mxu0 %v524
        %v903 = vpop.f32.mrf.mxu0
        %v904 = vadd.f32 0.0, %v903
        %v905 = vpop.f32.mrf.mxu0
        %906 = vmatprep.mubr.f32.mxu0 %v541
        %907 = vmatmul.mubr.f32.gmra.mxu0 %v525
        %v908 = vpop.f32.mrf.mxu0
        %v909 = vadd.f32 0.0, %v908
        %v910 = vpop.f32.mrf.mxu0
        %911 = vmatprep.mubr.f32.mxu0 %v542
        %912 = vmatmul.mubr.f32.gmra.mxu0 %v526
        %v913 = vpop.f32.mrf.mxu0
        %v914 = vadd.f32 0.0, %v913
        %v915 = vpop.f32.mrf.mxu0
        %916 = vmatprep.mubr.f32.mxu0 %v543
        %917 = vmatmul.mubr.f32.gmra.mxu0 %v527
        %v918 = vpop.f32.mrf.mxu0
        %v919 = vadd.f32 0.0, %v918
        %v920 = vpop.f32.mrf.mxu0
        %921 = vmatprep.mubr.f32.mxu0 %v544
        %922 = vmatmul.mubr.f32.gmra.mxu0 %v528
        %v923 = vpop.f32.mrf.mxu0
        %v924 = vadd.f32 0.0, %v923
        %v925 = vpop.f32.mrf.mxu0
        %926 = vmatprep.mubr.f32.mxu0 %v545
        %927 = vmatmul.mubr.f32.gmra.mxu0 %v529
        %v928 = vpop.f32.mrf.mxu0
        %v929 = vadd.f32 0.0, %v928
        %v930 = vpop.f32.mrf.mxu0
        %931 = vmatprep.mubr.f32.mxu0 %v546
        %932 = vmatmul.mubr.f32.gmra.mxu0 %v530
        %v933 = vpop.f32.mrf.mxu0
        %v934 = vadd.f32 0.0, %v933
        %v935 = vpop.f32.mrf.mxu0
        %936 = vmatprep.mubr.f32.mxu0 %v547
        %937 = vmatmul.mubr.f32.gmra.mxu0 %v531
        %v938 = vpop.f32.mrf.mxu0
        %v939 = vadd.f32 0.0, %v938
        %v940 = vpop.f32.mrf.mxu0
        %941 = vmatprep.mubr.f32.mxu0 %v548
        %942 = vmatmul.mubr.f32.gmra.mxu0 %v532
        %v943 = vpop.f32.mrf.mxu0
        %v944 = vadd.f32 0.0, %v943
        %v945 = vpop.f32.mrf.mxu0
        %946 = vmatprep.mubr.f32.mxu0 %v549
        %947 = vmatmul.mubr.f32.gmra.mxu0 %v533
        %v948 = vpop.f32.mrf.mxu0
        %v949 = vadd.f32 0.0, %v948
        %v950 = vpop.f32.mrf.mxu0
        %951 = vdwg.mxu0
        %952 = vmatprep.subr.mxu0 0.0
        %953 = vmatpush1.msra.mxu0 %v710
        %954 = vmatprep.subr.mxu0 0.0
        %955 = vmatpush1.msra.mxu0 %v709
        %956 = vmatprep.subr.mxu0 0.0
        %957 = vmatpush1.msra.mxu0 %v708
        %958 = vmatprep.subr.mxu0 0.0
        %959 = vmatpush1.msra.mxu0 %v707
        %960 = vmatprep.subr.mxu0 0.0
        %961 = vmatpush1.msra.mxu0 %v706
        %962 = vmatprep.subr.mxu0 0.0
        %963 = vmatpush1.msra.mxu0 %v705
        %964 = vmatprep.subr.mxu0 0.0
        %965 = vmatpush1.msra.mxu0 %v704
        %966 = vmatprep.subr.mxu0 0.0
        %967 = vmatpush1.msra.mxu0 %v703
        %968 = vmatprep.subr.mxu0 0.0
        %969 = vmatpush1.msra.mxu0 %v702
        %970 = vmatprep.subr.mxu0 0.0
        %971 = vmatpush1.msra.mxu0 %v701
        %972 = vmatprep.subr.mxu0 0.0
        %973 = vmatpush1.msra.mxu0 %v700
        %974 = vmatprep.subr.mxu0 0.0
        %975 = vmatpush1.msra.mxu0 %v699
        %976 = vmatprep.subr.mxu0 0.0
        %977 = vmatpush1.msra.mxu0 %v698
        %978 = vmatprep.subr.mxu0 0.0
        %979 = vmatpush1.msra.mxu0 %v697
        %980 = vmatprep.subr.mxu0 0.0
        %981 = vmatpush1.msra.mxu0 %v696
        %982 = vmatprep.subr.mxu0 0.0
        %983 = vmatpush1.msra.mxu0 %v695
        %984 = vmatprep.subr.mxu0 0.0
        %985 = vmatpush2.msra.mxu0 %v726
        %986 = vmatprep.subr.mxu0 0.0
        %987 = vmatpush2.msra.mxu0 %v725
        %988 = vmatprep.subr.mxu0 0.0
        %989 = vmatpush2.msra.mxu0 %v724
        %990 = vmatprep.subr.mxu0 0.0
        %991 = vmatpush2.msra.mxu0 %v723
        %992 = vmatprep.subr.mxu0 0.0
        %993 = vmatpush2.msra.mxu0 %v722
        %994 = vmatprep.subr.mxu0 0.0
        %995 = vmatpush2.msra.mxu0 %v721
        %996 = vmatprep.subr.mxu0 0.0
        %997 = vmatpush2.msra.mxu0 %v720
        %998 = vmatprep.subr.mxu0 0.0
        %999 = vmatpush2.msra.mxu0 %v719
        %1000 = vmatprep.subr.mxu0 0.0
        %1001 = vmatpush2.msra.mxu0 %v718
        %1002 = vmatprep.subr.mxu0 0.0
        %1003 = vmatpush2.msra.mxu0 %v717
        %1004 = vmatprep.subr.mxu0 0.0
        %1005 = vmatpush2.msra.mxu0 %v716
        %1006 = vmatprep.subr.mxu0 0.0
        %1007 = vmatpush2.msra.mxu0 %v715
        %1008 = vmatprep.subr.mxu0 0.0
        %1009 = vmatpush2.msra.mxu0 %v714
        %1010 = vmatprep.subr.mxu0 0.0
        %1011 = vmatpush2.msra.mxu0 %v713
        %1012 = vmatprep.subr.mxu0 0.0
        %1013 = vmatpush2.msra.mxu0 %v712
        %1014 = vmatprep.subr.mxu0 0.0
        %1015 = vmatpush2.msra.mxu0 %v711
        %1016 = vmatprep.mubr.f32.mxu0 %v566
        %1017 = vmatmul.mubr.f32.gmra.mxu0 %v550
        %v1018 = vpop.f32.mrf.mxu0
        %v1019 = vadd.f32 %v874, %v1018
        %v1020 = vpop.f32.mrf.mxu0
        %1021 = vmatprep.mubr.f32.mxu0 %v567
        %1022 = vmatmul.mubr.f32.gmra.mxu0 %v551
        %v1023 = vpop.f32.mrf.mxu0
        %v1024 = vadd.f32 %v879, %v1023
        %v1025 = vpop.f32.mrf.mxu0
        %1026 = vmatprep.mubr.f32.mxu0 %v568
        %1027 = vmatmul.mubr.f32.gmra.mxu0 %v552
        %v1028 = vpop.f32.mrf.mxu0
        %v1029 = vadd.f32 %v884, %v1028
        %v1030 = vpop.f32.mrf.mxu0
        %1031 = vmatprep.mubr.f32.mxu0 %v569
        %1032 = vmatmul.mubr.f32.gmra.mxu0 %v553
        %v1033 = vpop.f32.mrf.mxu0
        %v1034 = vadd.f32 %v889, %v1033
        %v1035 = vpop.f32.mrf.mxu0
        %1036 = vmatprep.mubr.f32.mxu0 %v570
        %1037 = vmatmul.mubr.f32.gmra.mxu0 %v554
        %v1038 = vpop.f32.mrf.mxu0
        %v1039 = vadd.f32 %v894, %v1038
        %v1040 = vpop.f32.mrf.mxu0
        %1041 = vmatprep.mubr.f32.mxu0 %v571
        %1042 = vmatmul.mubr.f32.gmra.mxu0 %v555
        %v1043 = vpop.f32.mrf.mxu0
        %v1044 = vadd.f32 %v899, %v1043
        %v1045 = vpop.f32.mrf.mxu0
        %1046 = vmatprep.mubr.f32.mxu0 %v572
        %1047 = vmatmul.mubr.f32.gmra.mxu0 %v556
        %v1048 = vpop.f32.mrf.mxu0
        %v1049 = vadd.f32 %v904, %v1048
        %v1050 = vpop.f32.mrf.mxu0
        %1051 = vmatprep.mubr.f32.mxu0 %v573
        %1052 = vmatmul.mubr.f32.gmra.mxu0 %v557
        %v1053 = vpop.f32.mrf.mxu0
        %v1054 = vadd.f32 %v909, %v1053
        %v1055 = vpop.f32.mrf.mxu0
        %1056 = vmatprep.mubr.f32.mxu0 %v574
        %1057 = vmatmul.mubr.f32.gmra.mxu0 %v558
        %v1058 = vpop.f32.mrf.mxu0
        %v1059 = vadd.f32 %v914, %v1058
        %v1060 = vpop.f32.mrf.mxu0
        %1061 = vmatprep.mubr.f32.mxu0 %v575
        %1062 = vmatmul.mubr.f32.gmra.mxu0 %v559
        %v1063 = vpop.f32.mrf.mxu0
        %v1064 = vadd.f32 %v919, %v1063
        %v1065 = vpop.f32.mrf.mxu0
        %1066 = vmatprep.mubr.f32.mxu0 %v576
        %1067 = vmatmul.mubr.f32.gmra.mxu0 %v560
        %v1068 = vpop.f32.mrf.mxu0
        %v1069 = vadd.f32 %v924, %v1068
        %v1070 = vpop.f32.mrf.mxu0
        %1071 = vmatprep.mubr.f32.mxu0 %v577
        %1072 = vmatmul.mubr.f32.gmra.mxu0 %v561
        %v1073 = vpop.f32.mrf.mxu0
        %v1074 = vadd.f32 %v929, %v1073
        %v1075 = vpop.f32.mrf.mxu0
        %1076 = vmatprep.mubr.f32.mxu0 %v578
        %1077 = vmatmul.mubr.f32.gmra.mxu0 %v562
        %v1078 = vpop.f32.mrf.mxu0
        %v1079 = vadd.f32 %v934, %v1078
        %v1080 = vpop.f32.mrf.mxu0
        %1081 = vmatprep.mubr.f32.mxu0 %v579
        %1082 = vmatmul.mubr.f32.gmra.mxu0 %v563
        %v1083 = vpop.f32.mrf.mxu0
        %v1084 = vadd.f32 %v939, %v1083
        %v1085 = vpop.f32.mrf.mxu0
        %1086 = vmatprep.mubr.f32.mxu0 %v580
        %1087 = vmatmul.mubr.f32.gmra.mxu0 %v564
        %v1088 = vpop.f32.mrf.mxu0
        %v1089 = vadd.f32 %v944, %v1088
        %v1090 = vpop.f32.mrf.mxu0
        %1091 = vmatprep.mubr.f32.mxu0 %v581
        %1092 = vmatmul.mubr.f32.gmra.mxu0 %v565
        %v1093 = vpop.f32.mrf.mxu0
        %v1094 = vadd.f32 %v949, %v1093
        %v1095 = vpop.f32.mrf.mxu0
        %1096 = vdwg.mxu0
        %1097 = vmatprep.subr.mxu0 0.0
        %1098 = vmatpush1.msra.mxu0 %v742
        %1099 = vmatprep.subr.mxu0 0.0
        %1100 = vmatpush1.msra.mxu0 %v741
        %1101 = vmatprep.subr.mxu0 0.0
        %1102 = vmatpush1.msra.mxu0 %v740
        %1103 = vmatprep.subr.mxu0 0.0
        %1104 = vmatpush1.msra.mxu0 %v739
        %1105 = vmatprep.subr.mxu0 0.0
        %1106 = vmatpush1.msra.mxu0 %v738
        %1107 = vmatprep.subr.mxu0 0.0
        %1108 = vmatpush1.msra.mxu0 %v737
        %1109 = vmatprep.subr.mxu0 0.0
        %1110 = vmatpush1.msra.mxu0 %v736
        %1111 = vmatprep.subr.mxu0 0.0
        %1112 = vmatpush1.msra.mxu0 %v735
        %1113 = vmatprep.subr.mxu0 0.0
        %1114 = vmatpush1.msra.mxu0 %v734
        %1115 = vmatprep.subr.mxu0 0.0
        %1116 = vmatpush1.msra.mxu0 %v733
        %1117 = vmatprep.subr.mxu0 0.0
        %1118 = vmatpush1.msra.mxu0 %v732
        %1119 = vmatprep.subr.mxu0 0.0
        %1120 = vmatpush1.msra.mxu0 %v731
        %1121 = vmatprep.subr.mxu0 0.0
        %1122 = vmatpush1.msra.mxu0 %v730
        %1123 = vmatprep.subr.mxu0 0.0
        %1124 = vmatpush1.msra.mxu0 %v729
        %1125 = vmatprep.subr.mxu0 0.0
        %1126 = vmatpush1.msra.mxu0 %v728
        %1127 = vmatprep.subr.mxu0 0.0
        %1128 = vmatpush1.msra.mxu0 %v727
        %1129 = vmatprep.subr.mxu0 0.0
        %1130 = vmatpush2.msra.mxu0 %v758
        %1131 = vmatprep.subr.mxu0 0.0
        %1132 = vmatpush2.msra.mxu0 %v757
        %1133 = vmatprep.subr.mxu0 0.0
        %1134 = vmatpush2.msra.mxu0 %v756
        %1135 = vmatprep.subr.mxu0 0.0
        %1136 = vmatpush2.msra.mxu0 %v755
        %1137 = vmatprep.subr.mxu0 0.0
        %1138 = vmatpush2.msra.mxu0 %v754
        %1139 = vmatprep.subr.mxu0 0.0
        %1140 = vmatpush2.msra.mxu0 %v753
        %1141 = vmatprep.subr.mxu0 0.0
        %1142 = vmatpush2.msra.mxu0 %v752
        %1143 = vmatprep.subr.mxu0 0.0
        %1144 = vmatpush2.msra.mxu0 %v751
        %1145 = vmatprep.subr.mxu0 0.0
        %1146 = vmatpush2.msra.mxu0 %v750
        %1147 = vmatprep.subr.mxu0 0.0
        %1148 = vmatpush2.msra.mxu0 %v749
        %1149 = vmatprep.subr.mxu0 0.0
        %1150 = vmatpush2.msra.mxu0 %v748
        %1151 = vmatprep.subr.mxu0 0.0
        %1152 = vmatpush2.msra.mxu0 %v747
        %1153 = vmatprep.subr.mxu0 0.0
        %1154 = vmatpush2.msra.mxu0 %v746
        %1155 = vmatprep.subr.mxu0 0.0
        %1156 = vmatpush2.msra.mxu0 %v745
        %1157 = vmatprep.subr.mxu0 0.0
        %1158 = vmatpush2.msra.mxu0 %v744
        %1159 = vmatprep.subr.mxu0 0.0
        %1160 = vmatpush2.msra.mxu0 %v743
        %1161 = vmatprep.mubr.f32.mxu0 %v598
        %1162 = vmatmul.mubr.f32.gmra.mxu0 %v582
        %v1163 = vpop.f32.mrf.mxu0
        %v1164 = vadd.f32 %v1019, %v1163
        %v1165 = vpop.f32.mrf.mxu0
        %1166 = vmatprep.mubr.f32.mxu0 %v599
        %1167 = vmatmul.mubr.f32.gmra.mxu0 %v583
        %v1168 = vpop.f32.mrf.mxu0
        %v1169 = vadd.f32 %v1024, %v1168
        %v1170 = vpop.f32.mrf.mxu0
        %1171 = vmatprep.mubr.f32.mxu0 %v600
        %1172 = vmatmul.mubr.f32.gmra.mxu0 %v584
        %v1173 = vpop.f32.mrf.mxu0
        %v1174 = vadd.f32 %v1029, %v1173
        %v1175 = vpop.f32.mrf.mxu0
        %1176 = vmatprep.mubr.f32.mxu0 %v601
        %1177 = vmatmul.mubr.f32.gmra.mxu0 %v585
        %v1178 = vpop.f32.mrf.mxu0
        %v1179 = vadd.f32 %v1034, %v1178
        %v1180 = vpop.f32.mrf.mxu0
        %1181 = vmatprep.mubr.f32.mxu0 %v602
        %1182 = vmatmul.mubr.f32.gmra.mxu0 %v586
        %v1183 = vpop.f32.mrf.mxu0
        %v1184 = vadd.f32 %v1039, %v1183
        %v1185 = vpop.f32.mrf.mxu0
        %1186 = vmatprep.mubr.f32.mxu0 %v603
        %1187 = vmatmul.mubr.f32.gmra.mxu0 %v587
        %v1188 = vpop.f32.mrf.mxu0
        %v1189 = vadd.f32 %v1044, %v1188
        %v1190 = vpop.f32.mrf.mxu0
        %1191 = vmatprep.mubr.f32.mxu0 %v604
        %1192 = vmatmul.mubr.f32.gmra.mxu0 %v588
        %v1193 = vpop.f32.mrf.mxu0
        %v1194 = vadd.f32 %v1049, %v1193
        %v1195 = vpop.f32.mrf.mxu0
        %1196 = vmatprep.mubr.f32.mxu0 %v605
        %1197 = vmatmul.mubr.f32.gmra.mxu0 %v589
        %v1198 = vpop.f32.mrf.mxu0
        %v1199 = vadd.f32 %v1054, %v1198
        %v1200 = vpop.f32.mrf.mxu0
        %1201 = vmatprep.mubr.f32.mxu0 %v606
        %1202 = vmatmul.mubr.f32.gmra.mxu0 %v590
        %v1203 = vpop.f32.mrf.mxu0
        %v1204 = vadd.f32 %v1059, %v1203
        %v1205 = vpop.f32.mrf.mxu0
        %1206 = vmatprep.mubr.f32.mxu0 %v607
        %1207 = vmatmul.mubr.f32.gmra.mxu0 %v591
        %v1208 = vpop.f32.mrf.mxu0
        %v1209 = vadd.f32 %v1064, %v1208
        %v1210 = vpop.f32.mrf.mxu0
        %1211 = vmatprep.mubr.f32.mxu0 %v608
        %1212 = vmatmul.mubr.f32.gmra.mxu0 %v592
        %v1213 = vpop.f32.mrf.mxu0
        %v1214 = vadd.f32 %v1069, %v1213
        %v1215 = vpop.f32.mrf.mxu0
        %1216 = vmatprep.mubr.f32.mxu0 %v609
        %1217 = vmatmul.mubr.f32.gmra.mxu0 %v593
        %v1218 = vpop.f32.mrf.mxu0
        %v1219 = vadd.f32 %v1074, %v1218
        %v1220 = vpop.f32.mrf.mxu0
        %1221 = vmatprep.mubr.f32.mxu0 %v610
        %1222 = vmatmul.mubr.f32.gmra.mxu0 %v594
        %v1223 = vpop.f32.mrf.mxu0
        %v1224 = vadd.f32 %v1079, %v1223
        %v1225 = vpop.f32.mrf.mxu0
        %1226 = vmatprep.mubr.f32.mxu0 %v611
        %1227 = vmatmul.mubr.f32.gmra.mxu0 %v595
        %v1228 = vpop.f32.mrf.mxu0
        %v1229 = vadd.f32 %v1084, %v1228
        %v1230 = vpop.f32.mrf.mxu0
        %1231 = vmatprep.mubr.f32.mxu0 %v612
        %1232 = vmatmul.mubr.f32.gmra.mxu0 %v596
        %v1233 = vpop.f32.mrf.mxu0
        %v1234 = vadd.f32 %v1089, %v1233
        %v1235 = vpop.f32.mrf.mxu0
        %1236 = vmatprep.mubr.f32.mxu0 %v613
        %1237 = vmatmul.mubr.f32.gmra.mxu0 %v597
        %v1238 = vpop.f32.mrf.mxu0
        %v1239 = vadd.f32 %v1094, %v1238
        %v1240 = vpop.f32.mrf.mxu0
        %1241 = vdwg.mxu0
        %1242 = vmatprep.subr.mxu0 0.0
        %1243 = vmatpush1.msra.mxu0 %v774
        %1244 = vmatprep.subr.mxu0 0.0
        %1245 = vmatpush1.msra.mxu0 %v773
        %1246 = vmatprep.subr.mxu0 0.0
        %1247 = vmatpush1.msra.mxu0 %v772
        %1248 = vmatprep.subr.mxu0 0.0
        %1249 = vmatpush1.msra.mxu0 %v771
        %1250 = vmatprep.subr.mxu0 0.0
        %1251 = vmatpush1.msra.mxu0 %v770
        %1252 = vmatprep.subr.mxu0 0.0
        %1253 = vmatpush1.msra.mxu0 %v769
        %1254 = vmatprep.subr.mxu0 0.0
        %1255 = vmatpush1.msra.mxu0 %v768
        %1256 = vmatprep.subr.mxu0 0.0
        %1257 = vmatpush1.msra.mxu0 %v767
        %1258 = vmatprep.subr.mxu0 0.0
        %1259 = vmatpush1.msra.mxu0 %v766
        %1260 = vmatprep.subr.mxu0 0.0
        %1261 = vmatpush1.msra.mxu0 %v765
        %1262 = vmatprep.subr.mxu0 0.0
        %1263 = vmatpush1.msra.mxu0 %v764
        %1264 = vmatprep.subr.mxu0 0.0
        %1265 = vmatpush1.msra.mxu0 %v763
        %1266 = vmatprep.subr.mxu0 0.0
        %1267 = vmatpush1.msra.mxu0 %v762
        %1268 = vmatprep.subr.mxu0 0.0
        %1269 = vmatpush1.msra.mxu0 %v761
        %1270 = vmatprep.subr.mxu0 0.0
        %1271 = vmatpush1.msra.mxu0 %v760
        %1272 = vmatprep.subr.mxu0 0.0
        %1273 = vmatpush1.msra.mxu0 %v759
        %1274 = vmatprep.subr.mxu0 0.0
        %1275 = vmatpush2.msra.mxu0 %v790
        %1276 = vmatprep.subr.mxu0 0.0
        %1277 = vmatpush2.msra.mxu0 %v789
        %1278 = vmatprep.subr.mxu0 0.0
        %1279 = vmatpush2.msra.mxu0 %v788
        %1280 = vmatprep.subr.mxu0 0.0
        %1281 = vmatpush2.msra.mxu0 %v787
        %1282 = vmatprep.subr.mxu0 0.0
        %1283 = vmatpush2.msra.mxu0 %v786
        %1284 = vmatprep.subr.mxu0 0.0
        %1285 = vmatpush2.msra.mxu0 %v785
        %1286 = vmatprep.subr.mxu0 0.0
        %1287 = vmatpush2.msra.mxu0 %v784
        %1288 = vmatprep.subr.mxu0 0.0
        %1289 = vmatpush2.msra.mxu0 %v783
        %1290 = vmatprep.subr.mxu0 0.0
        %1291 = vmatpush2.msra.mxu0 %v782
        %1292 = vmatprep.subr.mxu0 0.0
        %1293 = vmatpush2.msra.mxu0 %v781
        %1294 = vmatprep.subr.mxu0 0.0
        %1295 = vmatpush2.msra.mxu0 %v780
        %1296 = vmatprep.subr.mxu0 0.0
        %1297 = vmatpush2.msra.mxu0 %v779
        %1298 = vmatprep.subr.mxu0 0.0
        %1299 = vmatpush2.msra.mxu0 %v778
        %1300 = vmatprep.subr.mxu0 0.0
        %1301 = vmatpush2.msra.mxu0 %v777
        %1302 = vmatprep.subr.mxu0 0.0
        %1303 = vmatpush2.msra.mxu0 %v776
        %1304 = vmatprep.subr.mxu0 0.0
        %1305 = vmatpush2.msra.mxu0 %v775
        %1306 = vmatprep.mubr.f32.mxu0 %v631
        %1307 = vmatmul.mubr.f32.gmra.mxu0 %v615
        %v1308 = vpop.f32.mrf.mxu0
        %v1309 = vadd.f32 %v1164, %v1308
        %v1310 = vpop.f32.mrf.mxu0
        %1311 = vmatprep.mubr.f32.mxu0 %v632
        %1312 = vmatmul.mubr.f32.gmra.mxu0 %v616
        %v1313 = vpop.f32.mrf.mxu0
        %v1314 = vadd.f32 %v1169, %v1313
        %v1315 = vpop.f32.mrf.mxu0
        %1316 = vmatprep.mubr.f32.mxu0 %v633
        %1317 = vmatmul.mubr.f32.gmra.mxu0 %v617
        %v1318 = vpop.f32.mrf.mxu0
        %v1319 = vadd.f32 %v1174, %v1318
        %v1320 = vpop.f32.mrf.mxu0
        %1321 = vmatprep.mubr.f32.mxu0 %v634
        %1322 = vmatmul.mubr.f32.gmra.mxu0 %v618
        %v1323 = vpop.f32.mrf.mxu0
        %v1324 = vadd.f32 %v1179, %v1323
        %v1325 = vpop.f32.mrf.mxu0
        %1326 = vmatprep.mubr.f32.mxu0 %v635
        %1327 = vmatmul.mubr.f32.gmra.mxu0 %v619
        %v1328 = vpop.f32.mrf.mxu0
        %v1329 = vadd.f32 %v1184, %v1328
        %v1330 = vpop.f32.mrf.mxu0
        %1331 = vmatprep.mubr.f32.mxu0 %v636
        %1332 = vmatmul.mubr.f32.gmra.mxu0 %v620
        %v1333 = vpop.f32.mrf.mxu0
        %v1334 = vadd.f32 %v1189, %v1333
        %v1335 = vpop.f32.mrf.mxu0
        %1336 = vmatprep.mubr.f32.mxu0 %v637
        %1337 = vmatmul.mubr.f32.gmra.mxu0 %v621
        %v1338 = vpop.f32.mrf.mxu0
        %v1339 = vadd.f32 %v1194, %v1338
        %v1340 = vpop.f32.mrf.mxu0
        %1341 = vmatprep.mubr.f32.mxu0 %v638
        %1342 = vmatmul.mubr.f32.gmra.mxu0 %v622
        %v1343 = vpop.f32.mrf.mxu0
        %v1344 = vadd.f32 %v1199, %v1343
        %v1345 = vpop.f32.mrf.mxu0
        %1346 = vmatprep.mubr.f32.mxu0 %v639
        %1347 = vmatmul.mubr.f32.gmra.mxu0 %v623
        %v1348 = vpop.f32.mrf.mxu0
        %v1349 = vadd.f32 %v1204, %v1348
        %v1350 = vpop.f32.mrf.mxu0
        %1351 = vmatprep.mubr.f32.mxu0 %v640
        %1352 = vmatmul.mubr.f32.gmra.mxu0 %v624
        %v1353 = vpop.f32.mrf.mxu0
        %v1354 = vadd.f32 %v1209, %v1353
        %v1355 = vpop.f32.mrf.mxu0
        %1356 = vmatprep.mubr.f32.mxu0 %v641
        %1357 = vmatmul.mubr.f32.gmra.mxu0 %v625
        %v1358 = vpop.f32.mrf.mxu0
        %v1359 = vadd.f32 %v1214, %v1358
        %v1360 = vpop.f32.mrf.mxu0
        %1361 = vmatprep.mubr.f32.mxu0 %v642
        %1362 = vmatmul.mubr.f32.gmra.mxu0 %v626
        %v1363 = vpop.f32.mrf.mxu0
        %v1364 = vadd.f32 %v1219, %v1363
        %v1365 = vpop.f32.mrf.mxu0
        %1366 = vmatprep.mubr.f32.mxu0 %v643
        %1367 = vmatmul.mubr.f32.gmra.mxu0 %v627
        %v1368 = vpop.f32.mrf.mxu0
        %v1369 = vadd.f32 %v1224, %v1368
        %v1370 = vpop.f32.mrf.mxu0
        %1371 = vmatprep.mubr.f32.mxu0 %v644
        %1372 = vmatmul.mubr.f32.gmra.mxu0 %v628
        %v1373 = vpop.f32.mrf.mxu0
        %v1374 = vadd.f32 %v1229, %v1373
        %v1375 = vpop.f32.mrf.mxu0
        %1376 = vmatprep.mubr.f32.mxu0 %v645
        %1377 = vmatmul.mubr.f32.gmra.mxu0 %v629
        %v1378 = vpop.f32.mrf.mxu0
        %v1379 = vadd.f32 %v1234, %v1378
        %v1380 = vpop.f32.mrf.mxu0
        %1381 = vmatprep.mubr.f32.mxu0 %v646
        %1382 = vmatmul.mubr.f32.gmra.mxu0 %v630
        %v1383 = vpop.f32.mrf.mxu0
        %v1384 = vadd.f32 %v1239, %v1383
        %v1385 = vpop.f32.mrf.mxu0
        %1386 = vdwg.mxu0
        %1387 = vmatprep.subr.mxu0 0.0
        %1388 = vmatpush1.msra.mxu0 %v806
        %1389 = vmatprep.subr.mxu0 0.0
        %1390 = vmatpush1.msra.mxu0 %v805
        %1391 = vmatprep.subr.mxu0 0.0
        %1392 = vmatpush1.msra.mxu0 %v804
        %1393 = vmatprep.subr.mxu0 0.0
        %1394 = vmatpush1.msra.mxu0 %v803
        %1395 = vmatprep.subr.mxu0 0.0
        %1396 = vmatpush1.msra.mxu0 %v802
        %1397 = vmatprep.subr.mxu0 0.0
        %1398 = vmatpush1.msra.mxu0 %v801
        %1399 = vmatprep.subr.mxu0 0.0
        %1400 = vmatpush1.msra.mxu0 %v800
        %1401 = vmatprep.subr.mxu0 0.0
        %1402 = vmatpush1.msra.mxu0 %v799
        %1403 = vmatprep.subr.mxu0 0.0
        %1404 = vmatpush1.msra.mxu0 %v798
        %1405 = vmatprep.subr.mxu0 0.0
        %1406 = vmatpush1.msra.mxu0 %v797
        %1407 = vmatprep.subr.mxu0 0.0
        %1408 = vmatpush1.msra.mxu0 %v796
        %1409 = vmatprep.subr.mxu0 0.0
        %1410 = vmatpush1.msra.mxu0 %v795
        %1411 = vmatprep.subr.mxu0 0.0
        %1412 = vmatpush1.msra.mxu0 %v794
        %1413 = vmatprep.subr.mxu0 0.0
        %1414 = vmatpush1.msra.mxu0 %v793
        %1415 = vmatprep.subr.mxu0 0.0
        %1416 = vmatpush1.msra.mxu0 %v792
        %1417 = vmatprep.subr.mxu0 0.0
        %1418 = vmatpush1.msra.mxu0 %v791
        %1419 = vmatprep.subr.mxu0 0.0
        %1420 = vmatpush2.msra.mxu0 0.0
        %1421 = vmatprep.subr.mxu0 0.0
        %1422 = vmatpush2.msra.mxu0 0.0
        %1423 = vmatprep.subr.mxu0 0.0
        %1424 = vmatpush2.msra.mxu0 0.0
        %1425 = vmatprep.subr.mxu0 0.0
        %1426 = vmatpush2.msra.mxu0 0.0
        %1427 = vmatprep.subr.mxu0 0.0
        %1428 = vmatpush2.msra.mxu0 0.0
        %1429 = vmatprep.subr.mxu0 0.0
        %1430 = vmatpush2.msra.mxu0 0.0
        %1431 = vmatprep.subr.mxu0 0.0
        %1432 = vmatpush2.msra.mxu0 0.0
        %1433 = vmatprep.subr.mxu0 0.0
        %1434 = vmatpush2.msra.mxu0 0.0
        %1435 = vmatprep.subr.mxu0 0.0
        %1436 = vmatpush2.msra.mxu0 0.0
        %1437 = vmatprep.subr.mxu0 0.0
        %1438 = vmatpush2.msra.mxu0 0.0
        %1439 = vmatprep.subr.mxu0 0.0
        %1440 = vmatpush2.msra.mxu0 0.0
        %1441 = vmatprep.subr.mxu0 0.0
        %1442 = vmatpush2.msra.mxu0 0.0
        %1443 = vmatprep.subr.mxu0 0.0
        %1444 = vmatpush2.msra.mxu0 0.0
        %1445 = vmatprep.subr.mxu0 0.0
        %1446 = vmatpush2.msra.mxu0 0.0
        %1447 = vmatprep.subr.mxu0 0.0
        %1448 = vmatpush2.msra.mxu0 0.0
        %1449 = vmatprep.subr.mxu0 0.0
        %1450 = vmatpush2.msra.mxu0 0.0
        %1451 = vmatprep.mubr.f32.mxu0 0.0
        %1452 = vmatmul.mubr.f32.gmra.mxu0 %v647
        %v1453 = vpop.f32.mrf.mxu0
        %v1454 = vadd.f32 %v1309, %v1453
        %v1455 = vpop.f32.mrf.mxu0
        %1456 = vmatprep.mubr.f32.mxu0 0.0
        %1457 = vmatmul.mubr.f32.gmra.mxu0 %v648
        %v1458 = vpop.f32.mrf.mxu0
        %v1459 = vadd.f32 %v1314, %v1458
        %v1460 = vpop.f32.mrf.mxu0
        %1461 = vmatprep.mubr.f32.mxu0 0.0
        %1462 = vmatmul.mubr.f32.gmra.mxu0 %v649
        %v1463 = vpop.f32.mrf.mxu0
        %v1464 = vadd.f32 %v1319, %v1463
        %v1465 = vpop.f32.mrf.mxu0
        %1466 = vmatprep.mubr.f32.mxu0 0.0
        %1467 = vmatmul.mubr.f32.gmra.mxu0 %v650
        %v1468 = vpop.f32.mrf.mxu0
        %v1469 = vadd.f32 %v1324, %v1468
        %v1470 = vpop.f32.mrf.mxu0
        %1471 = vmatprep.mubr.f32.mxu0 0.0
        %1472 = vmatmul.mubr.f32.gmra.mxu0 %v651
        %v1473 = vpop.f32.mrf.mxu0
        %v1474 = vadd.f32 %v1329, %v1473
        %v1475 = vpop.f32.mrf.mxu0
        %1476 = vmatprep.mubr.f32.mxu0 0.0
        %1477 = vmatmul.mubr.f32.gmra.mxu0 %v652
        %v1478 = vpop.f32.mrf.mxu0
        %v1479 = vadd.f32 %v1334, %v1478
        %v1480 = vpop.f32.mrf.mxu0
        %1481 = vmatprep.mubr.f32.mxu0 0.0
        %1482 = vmatmul.mubr.f32.gmra.mxu0 %v653
        %v1483 = vpop.f32.mrf.mxu0
        %v1484 = vadd.f32 %v1339, %v1483
        %v1485 = vpop.f32.mrf.mxu0
        %1486 = vmatprep.mubr.f32.mxu0 0.0
        %1487 = vmatmul.mubr.f32.gmra.mxu0 %v654
        %v1488 = vpop.f32.mrf.mxu0
        %v1489 = vadd.f32 %v1344, %v1488
        %v1490 = vpop.f32.mrf.mxu0
        %1491 = vmatprep.mubr.f32.mxu0 0.0
        %1492 = vmatmul.mubr.f32.gmra.mxu0 %v655
        %v1493 = vpop.f32.mrf.mxu0
        %v1494 = vadd.f32 %v1349, %v1493
        %v1495 = vpop.f32.mrf.mxu0
        %1496 = vmatprep.mubr.f32.mxu0 0.0
        %1497 = vmatmul.mubr.f32.gmra.mxu0 %v656
        %v1498 = vpop.f32.mrf.mxu0
        %v1499 = vadd.f32 %v1354, %v1498
        %v1500 = vpop.f32.mrf.mxu0
        %1501 = vmatprep.mubr.f32.mxu0 0.0
        %1502 = vmatmul.mubr.f32.gmra.mxu0 %v657
        %v1503 = vpop.f32.mrf.mxu0
        %v1504 = vadd.f32 %v1359, %v1503
        %v1505 = vpop.f32.mrf.mxu0
        %1506 = vmatprep.mubr.f32.mxu0 0.0
        %1507 = vmatmul.mubr.f32.gmra.mxu0 %v658
        %v1508 = vpop.f32.mrf.mxu0
        %v1509 = vadd.f32 %v1364, %v1508
        %v1510 = vpop.f32.mrf.mxu0
        %1511 = vmatprep.mubr.f32.mxu0 0.0
        %1512 = vmatmul.mubr.f32.gmra.mxu0 %v659
        %v1513 = vpop.f32.mrf.mxu0
        %v1514 = vadd.f32 %v1369, %v1513
        %v1515 = vpop.f32.mrf.mxu0
        %1516 = vmatprep.mubr.f32.mxu0 0.0
        %1517 = vmatmul.mubr.f32.gmra.mxu0 %v660
        %v1518 = vpop.f32.mrf.mxu0
        %v1519 = vadd.f32 %v1374, %v1518
        %v1520 = vpop.f32.mrf.mxu0
        %1521 = vmatprep.mubr.f32.mxu0 0.0
        %1522 = vmatmul.mubr.f32.gmra.mxu0 %v661
        %v1523 = vpop.f32.mrf.mxu0
        %v1524 = vadd.f32 %v1379, %v1523
        %v1525 = vpop.f32.mrf.mxu0
        %1526 = vmatprep.mubr.f32.mxu0 0.0
        %1527 = vmatmul.mubr.f32.gmra.mxu0 %v662
        %v1528 = vpop.f32.mrf.mxu0
        %v1529 = vadd.f32 %v1384, %v1528
        %v1530 = vpop.f32.mrf.mxu0
        %1531 = vdwg.mxu0
        %1532 = vst [vmem:[%s228 + $0x8] sm:$0xff] %v1454
        %1533 = vst [vmem:[%s228 + $0x20] sm:$0xff] %v1459
        %1534 = vst [vmem:[%s228 + $0x38] sm:$0xff] %v1464
        %1535 = vst [vmem:[%s228 + $0x50] sm:$0xff] %v1469
        %1536 = vst [vmem:[%s228 + $0x68] sm:$0xff] %v1474
        %1537 = vst [vmem:[%s228 + $0x80] sm:$0xff] %v1479
        %1538 = vst [vmem:[%s228 + $0x98] sm:$0xff] %v1484
        %1539 = vst [vmem:[%s228 + $0xb0] sm:$0xff] %v1489
        %1540 = vst [vmem:[%s228 + $0xc8] sm:$0xff] %v1494
        %1541 = vst [vmem:[%s228 + $0xe0] sm:$0xff] %v1499
        %1542 = vst [vmem:[%s228 + $0xf8] sm:$0xff] %v1504
        %1543 = vst [vmem:[%s228 + $0x110] sm:$0xff] %v1509
        %1544 = vst [vmem:[%s228 + $0x128] sm:$0xff] %v1514
        %1545 = vst [vmem:[%s228 + $0x140] sm:$0xff] %v1519
        %1546 = vst [vmem:[%s228 + $0x158] sm:$0xff] %v1524
        %1547 = vst [vmem:[%s228 + $0x170] sm:$0xff] %v1529
        %v1548 = vadd.f32 %v1454, %v1459
        %v1549 = vadd.f32 %v1548, %v1464
        %v1550 = vadd.f32 %v1549, %v1469
        %v1551 = vadd.f32 %v1550, %v1474
        %v1552 = vadd.f32 %v1551, %v1479
        %v1553 = vadd.f32 %v1552, %v1484
        %v1554 = vadd.f32 %v1553, %v1489
        %v1555 = vadd.f32 %v1554, %v1494
        %v1556 = vadd.f32 %v1555, %v1499
        %v1557 = vadd.f32 %v1556, %v1504
        %v1558 = vadd.f32 %v1557, %v1509
        %v1559 = vadd.f32 %v1558, %v1514
        %v1560 = vadd.f32 %v1559, %v1519
        %v1561 = vadd.f32 %v1560, %v1524
        %v1562 = vadd.f32 %v1561, %v1529
        %v1563 = vrot.slane %v1562, 4
        %v1564 = vadd.f32 %v1562, %v1563
        %v1565 = vrot.slane %v1564, 2
        %v1566 = vadd.f32 %v1564, %v1565
        %v1567 = vrot.slane %v1566, 1
        %v1568 = vadd.f32 %v1566, %v1567
        %v1569 = vmul.f32 %v1454, %v1454
        %v1570 = vmul.f32 %v1459, %v1459
        %v1571 = vmul.f32 %v1464, %v1464
        %v1572 = vmul.f32 %v1469, %v1469
        %v1573 = vmul.f32 %v1474, %v1474
        %v1574 = vmul.f32 %v1479, %v1479
        %v1575 = vmul.f32 %v1484, %v1484
        %v1576 = vmul.f32 %v1489, %v1489
        %v1577 = vmul.f32 %v1494, %v1494
        %v1578 = vmul.f32 %v1499, %v1499
        %v1579 = vmul.f32 %v1504, %v1504
        %v1580 = vmul.f32 %v1509, %v1509
        %v1581 = vmul.f32 %v1514, %v1514
        %v1582 = vmul.f32 %v1519, %v1519
        %v1583 = vmul.f32 %v1524, %v1524
        %v1584 = vmul.f32 %v1529, %v1529
        %v1585 = vadd.f32 %v1569, %v1570
        %v1586 = vadd.f32 %v1585, %v1571
        %v1587 = vadd.f32 %v1586, %v1572
        %v1588 = vadd.f32 %v1587, %v1573
        %v1589 = vadd.f32 %v1588, %v1574
        %v1590 = vadd.f32 %v1589, %v1575
        %v1591 = vadd.f32 %v1590, %v1576
        %v1592 = vadd.f32 %v1591, %v1577
        %v1593 = vadd.f32 %v1592, %v1578
        %v1594 = vadd.f32 %v1593, %v1579
        %v1595 = vadd.f32 %v1594, %v1580
        %v1596 = vadd.f32 %v1595, %v1581
        %v1597 = vadd.f32 %v1596, %v1582
        %v1598 = vadd.f32 %v1597, %v1583
        %v1599 = vadd.f32 %v1598, %v1584
        %v1600 = vrot.slane %v1599, 4
        %v1601 = vadd.f32 %v1599, %v1600
        %v1602 = vrot.slane %v1601, 2
        %v1603 = vadd.f32 %v1601, %v1602
        %v1604 = vrot.slane %v1603, 1
        %v1605 = vadd.f32 %v1603, %v1604
        %v1606 = vld [vmem:[#allocation2] sm:$0xff]
        %v1607 = vld [vmem:[#allocation2 + $0x8] sm:$0xff]
        %v1608 = vld [vmem:[#allocation2 + $0x18] sm:$0xff]
        %v1609 = vld [vmem:[#allocation2 + $0x20] sm:$0xff]
        %v1610 = vld [vmem:[#allocation2 + $0x30] sm:$0xff]
        %v1611 = vld [vmem:[#allocation2 + $0x38] sm:$0xff]
        %v1612 = vld [vmem:[#allocation2 + $0x48] sm:$0xff]
        %v1613 = vld [vmem:[#allocation2 + $0x50] sm:$0xff]
        %v1614 = vld [vmem:[#allocation2 + $0x60] sm:$0xff]
        %v1615 = vld [vmem:[#allocation2 + $0x68] sm:$0xff]
        %v1616 = vld [vmem:[#allocation2 + $0x78] sm:$0xff]
        %v1617 = vld [vmem:[#allocation2 + $0x80] sm:$0xff]
        %v1618 = vld [vmem:[#allocation2 + $0x90] sm:$0xff]
        %v1619 = vld [vmem:[#allocation2 + $0x98] sm:$0xff]
        %v1620 = vld [vmem:[#allocation2 + $0xa8] sm:$0xff]
        %v1621 = vld [vmem:[#allocation2 + $0xb0] sm:$0xff]
        %v1622 = vld [vmem:[#allocation2 + $0x4] sm:$0xff]
        %v1623 = vld [vmem:[#allocation2 + $0xc] sm:$0xff]
        %v1624 = vld [vmem:[#allocation2 + $0x1c] sm:$0xff]
        %v1625 = vld [vmem:[#allocation2 + $0x24] sm:$0xff]
        %v1626 = vld [vmem:[#allocation2 + $0x34] sm:$0xff]
        %v1627 = vld [vmem:[#allocation2 + $0x3c] sm:$0xff]
        %v1628 = vld [vmem:[#allocation2 + $0x4c] sm:$0xff]
        %v1629 = vld [vmem:[#allocation2 + $0x54] sm:$0xff]
        %v1630 = vld [vmem:[#allocation2 + $0x64] sm:$0xff]
        %v1631 = vld [vmem:[#allocation2 + $0x6c] sm:$0xff]
        %v1632 = vld [vmem:[#allocation2 + $0x7c] sm:$0xff]
        %v1633 = vld [vmem:[#allocation2 + $0x84] sm:$0xff]
        %v1634 = vld [vmem:[#allocation2 + $0x94] sm:$0xff]
        %v1635 = vld [vmem:[#allocation2 + $0x9c] sm:$0xff]
        %v1636 = vld [vmem:[#allocation2 + $0xac] sm:$0xff]
        %v1637 = vld [vmem:[#allocation2 + $0xb4] sm:$0xff]
        %v1638 = vld [vmem:[#allocation2 + $0x10] sm:$0xff]
        %v1639 = vld [vmem:[#allocation2 + $0x28] sm:$0xff]
        %v1640 = vld [vmem:[#allocation2 + $0x40] sm:$0xff]
        %v1641 = vld [vmem:[#allocation2 + $0x58] sm:$0xff]
        %v1642 = vld [vmem:[#allocation2 + $0x70] sm:$0xff]
        %v1643 = vld [vmem:[#allocation2 + $0x88] sm:$0xff]
        %v1644 = vld [vmem:[#allocation2 + $0xa0] sm:$0xff]
        %v1645 = vld [vmem:[#allocation2 + $0xb8] sm:$0xff]
        %v1646 = vld [vmem:[%s265] sm:$0xff]
        %v1647 = vld [vmem:[%s265 + $0x8] sm:$0xff]
        %v1648 = vld [vmem:[%s265 + $0x18] sm:$0xff]
        %v1649 = vld [vmem:[%s265 + $0x20] sm:$0xff]
        %v1650 = vld [vmem:[%s265 + $0x30] sm:$0xff]
        %v1651 = vld [vmem:[%s265 + $0x38] sm:$0xff]
        %v1652 = vld [vmem:[%s265 + $0x48] sm:$0xff]
        %v1653 = vld [vmem:[%s265 + $0x50] sm:$0xff]
        %v1654 = vld [vmem:[%s265 + $0x60] sm:$0xff]
        %v1655 = vld [vmem:[%s265 + $0x68] sm:$0xff]
        %v1656 = vld [vmem:[%s265 + $0x78] sm:$0xff]
        %v1657 = vld [vmem:[%s265 + $0x80] sm:$0xff]
        %v1658 = vld [vmem:[%s265 + $0x90] sm:$0xff]
        %v1659 = vld [vmem:[%s265 + $0x98] sm:$0xff]
        %v1660 = vld [vmem:[%s265 + $0xa8] sm:$0xff]
        %v1661 = vld [vmem:[%s265 + $0xb0] sm:$0xff]
        %v1662 = vld [vmem:[%s265 + $0x4] sm:$0xff]
        %v1663 = vld [vmem:[%s265 + $0xc] sm:$0xff]
        %v1664 = vld [vmem:[%s265 + $0x1c] sm:$0xff]
        %v1665 = vld [vmem:[%s265 + $0x24] sm:$0xff]
        %v1666 = vld [vmem:[%s265 + $0x34] sm:$0xff]
        %v1667 = vld [vmem:[%s265 + $0x3c] sm:$0xff]
        %v1668 = vld [vmem:[%s265 + $0x4c] sm:$0xff]
        %v1669 = vld [vmem:[%s265 + $0x54] sm:$0xff]
        %v1670 = vld [vmem:[%s265 + $0x64] sm:$0xff]
        %v1671 = vld [vmem:[%s265 + $0x6c] sm:$0xff]
        %v1672 = vld [vmem:[%s265 + $0x7c] sm:$0xff]
        %v1673 = vld [vmem:[%s265 + $0x84] sm:$0xff]
        %v1674 = vld [vmem:[%s265 + $0x94] sm:$0xff]
        %v1675 = vld [vmem:[%s265 + $0x9c] sm:$0xff]
        %v1676 = vld [vmem:[%s265 + $0xac] sm:$0xff]
        %v1677 = vld [vmem:[%s265 + $0xb4] sm:$0xff]
        %v1678 = vld [vmem:[%s265 + $0x10] sm:$0xff]
        %v1679 = vld [vmem:[%s265 + $0x28] sm:$0xff]
        %v1680 = vld [vmem:[%s265 + $0x40] sm:$0xff]
        %v1681 = vld [vmem:[%s265 + $0x58] sm:$0xff]
        %v1682 = vld [vmem:[%s265 + $0x70] sm:$0xff]
        %v1683 = vld [vmem:[%s265 + $0x88] sm:$0xff]
        %v1684 = vld [vmem:[%s265 + $0xa0] sm:$0xff]
        %v1685 = vld [vmem:[%s265 + $0xb8] sm:$0xff]
        %s1686 = scalar_lea.vmem [#allocation2], 192
        %v1687 = vld [vmem:[%s1686] sm:$0xff]
        %v1688 = vld [vmem:[%s1686 + $0x8] sm:$0xff]
        %v1689 = vld [vmem:[%s1686 + $0x18] sm:$0xff]
        %v1690 = vld [vmem:[%s1686 + $0x20] sm:$0xff]
        %v1691 = vld [vmem:[%s1686 + $0x30] sm:$0xff]
        %v1692 = vld [vmem:[%s1686 + $0x38] sm:$0xff]
        %v1693 = vld [vmem:[%s1686 + $0x48] sm:$0xff]
        %v1694 = vld [vmem:[%s1686 + $0x50] sm:$0xff]
        %v1695 = vld [vmem:[%s1686 + $0x60] sm:$0xff]
        %v1696 = vld [vmem:[%s1686 + $0x68] sm:$0xff]
        %v1697 = vld [vmem:[%s1686 + $0x78] sm:$0xff]
        %v1698 = vld [vmem:[%s1686 + $0x80] sm:$0xff]
        %v1699 = vld [vmem:[%s1686 + $0x90] sm:$0xff]
        %v1700 = vld [vmem:[%s1686 + $0x98] sm:$0xff]
        %v1701 = vld [vmem:[%s1686 + $0xa8] sm:$0xff]
        %v1702 = vld [vmem:[%s1686 + $0xb0] sm:$0xff]
        %v1703 = vld [vmem:[%s1686 + $0x4] sm:$0xff]
        %v1704 = vld [vmem:[%s1686 + $0xc] sm:$0xff]
        %v1705 = vld [vmem:[%s1686 + $0x1c] sm:$0xff]
        %v1706 = vld [vmem:[%s1686 + $0x24] sm:$0xff]
        %v1707 = vld [vmem:[%s1686 + $0x34] sm:$0xff]
        %v1708 = vld [vmem:[%s1686 + $0x3c] sm:$0xff]
        %v1709 = vld [vmem:[%s1686 + $0x4c] sm:$0xff]
        %v1710 = vld [vmem:[%s1686 + $0x54] sm:$0xff]
        %v1711 = vld [vmem:[%s1686 + $0x64] sm:$0xff]
        %v1712 = vld [vmem:[%s1686 + $0x6c] sm:$0xff]
        %v1713 = vld [vmem:[%s1686 + $0x7c] sm:$0xff]
        %v1714 = vld [vmem:[%s1686 + $0x84] sm:$0xff]
        %v1715 = vld [vmem:[%s1686 + $0x94] sm:$0xff]
        %v1716 = vld [vmem:[%s1686 + $0x9c] sm:$0xff]
        %v1717 = vld [vmem:[%s1686 + $0xac] sm:$0xff]
        %v1718 = vld [vmem:[%s1686 + $0xb4] sm:$0xff]
        %v1719 = vld [vmem:[%s1686 + $0x10] sm:$0xff]
        %v1720 = vld [vmem:[%s1686 + $0x28] sm:$0xff]
        %v1721 = vld [vmem:[%s1686 + $0x40] sm:$0xff]
        %v1722 = vld [vmem:[%s1686 + $0x58] sm:$0xff]
        %v1723 = vld [vmem:[%s1686 + $0x70] sm:$0xff]
        %v1724 = vld [vmem:[%s1686 + $0x88] sm:$0xff]
        %v1725 = vld [vmem:[%s1686 + $0xa0] sm:$0xff]
        %v1726 = vld [vmem:[%s1686 + $0xb8] sm:$0xff]
        %s1727 = scalar_lea.vmem [#allocation6], 1152
        %v1728 = vld [vmem:[%s1727] sm:$0xff]
        %v1729 = vld [vmem:[%s1727 + $0x8] sm:$0xff]
        %v1730 = vld [vmem:[%s1727 + $0x10] sm:$0xff]
        %v1731 = vld [vmem:[%s1727 + $0x18] sm:$0xff]
        %v1732 = vld [vmem:[%s1727 + $0x20] sm:$0xff]
        %v1733 = vld [vmem:[%s1727 + $0x28] sm:$0xff]
        %v1734 = vld [vmem:[%s1727 + $0x30] sm:$0xff]
        %v1735 = vld [vmem:[%s1727 + $0x38] sm:$0xff]
        %v1736 = vld [vmem:[%s1727 + $0x40] sm:$0xff]
        %v1737 = vld [vmem:[%s1727 + $0x48] sm:$0xff]
        %v1738 = vld [vmem:[%s1727 + $0x50] sm:$0xff]
        %v1739 = vld [vmem:[%s1727 + $0x58] sm:$0xff]
        %v1740 = vld [vmem:[%s1727 + $0x60] sm:$0xff]
        %v1741 = vld [vmem:[%s1727 + $0x68] sm:$0xff]
        %v1742 = vld [vmem:[%s1727 + $0x70] sm:$0xff]
        %v1743 = vld [vmem:[%s1727 + $0x78] sm:$0xff]
        %v1744 = vld [vmem:[%s1727 + $0x80] sm:$0xff]
        %v1745 = vld [vmem:[%s1727 + $0x88] sm:$0xff]
        %v1746 = vld [vmem:[%s1727 + $0x90] sm:$0xff]
        %v1747 = vld [vmem:[%s1727 + $0x98] sm:$0xff]
        %v1748 = vld [vmem:[%s1727 + $0xa0] sm:$0xff]
        %v1749 = vld [vmem:[%s1727 + $0xa8] sm:$0xff]
        %v1750 = vld [vmem:[%s1727 + $0xb0] sm:$0xff]
        %v1751 = vld [vmem:[%s1727 + $0xb8] sm:$0xff]
        %v1752 = vld [vmem:[%s1727 + $0xc0] sm:$0xff]
        %v1753 = vld [vmem:[%s1727 + $0xc8] sm:$0xff]
        %v1754 = vld [vmem:[%s1727 + $0xd0] sm:$0xff]
        %v1755 = vld [vmem:[%s1727 + $0xd8] sm:$0xff]
        %v1756 = vld [vmem:[%s1727 + $0xe0] sm:$0xff]
        %v1757 = vld [vmem:[%s1727 + $0xe8] sm:$0xff]
        %v1758 = vld [vmem:[%s1727 + $0xf0] sm:$0xff]
        %v1759 = vld [vmem:[%s1727 + $0xf8] sm:$0xff]
        %v1760 = vld [vmem:[%s1727 + $0x100] sm:$0xff]
        %v1761 = vld [vmem:[%s1727 + $0x108] sm:$0xff]
        %v1762 = vld [vmem:[%s1727 + $0x110] sm:$0xff]
        %v1763 = vld [vmem:[%s1727 + $0x118] sm:$0xff]
        %v1764 = vld [vmem:[%s1727 + $0x120] sm:$0xff]
        %v1765 = vld [vmem:[%s1727 + $0x128] sm:$0xff]
        %v1766 = vld [vmem:[%s1727 + $0x130] sm:$0xff]
        %v1767 = vld [vmem:[%s1727 + $0x138] sm:$0xff]
        %v1768 = vld [vmem:[%s1727 + $0x140] sm:$0xff]
        %v1769 = vld [vmem:[%s1727 + $0x148] sm:$0xff]
        %v1770 = vld [vmem:[%s1727 + $0x150] sm:$0xff]
        %v1771 = vld [vmem:[%s1727 + $0x158] sm:$0xff]
        %v1772 = vld [vmem:[%s1727 + $0x160] sm:$0xff]
        %v1773 = vld [vmem:[%s1727 + $0x168] sm:$0xff]
        %v1774 = vld [vmem:[%s1727 + $0x170] sm:$0xff]
        %v1775 = vld [vmem:[%s1727 + $0x178] sm:$0xff]
        %v1776 = vld [vmem:[%s1727 + $0x180] sm:$0xff]
        %v1777 = vld [vmem:[%s1727 + $0x188] sm:$0xff]
        %v1778 = vld [vmem:[%s1727 + $0x190] sm:$0xff]
        %v1779 = vld [vmem:[%s1727 + $0x198] sm:$0xff]
        %v1780 = vld [vmem:[%s1727 + $0x1a0] sm:$0xff]
        %v1781 = vld [vmem:[%s1727 + $0x1a8] sm:$0xff]
        %v1782 = vld [vmem:[%s1727 + $0x1b0] sm:$0xff]
        %v1783 = vld [vmem:[%s1727 + $0x1b8] sm:$0xff]
        %v1784 = vld [vmem:[%s1727 + $0x1c0] sm:$0xff]
        %v1785 = vld [vmem:[%s1727 + $0x1c8] sm:$0xff]
        %v1786 = vld [vmem:[%s1727 + $0x1d0] sm:$0xff]
        %v1787 = vld [vmem:[%s1727 + $0x1d8] sm:$0xff]
        %v1788 = vld [vmem:[%s1727 + $0x1e0] sm:$0xff]
        %v1789 = vld [vmem:[%s1727 + $0x1e8] sm:$0xff]
        %v1790 = vld [vmem:[%s1727 + $0x1f0] sm:$0xff]
        %v1791 = vld [vmem:[%s1727 + $0x1f8] sm:$0xff]
        %v1792 = vld [vmem:[%s1727 + $0x200] sm:$0xff]
        %v1793 = vld [vmem:[%s1727 + $0x208] sm:$0xff]
        %v1794 = vld [vmem:[%s1727 + $0x210] sm:$0xff]
        %v1795 = vld [vmem:[%s1727 + $0x218] sm:$0xff]
        %v1796 = vld [vmem:[%s1727 + $0x220] sm:$0xff]
        %v1797 = vld [vmem:[%s1727 + $0x228] sm:$0xff]
        %v1798 = vld [vmem:[%s1727 + $0x230] sm:$0xff]
        %v1799 = vld [vmem:[%s1727 + $0x238] sm:$0xff]
        %v1800 = vld [vmem:[%s1727 + $0x240] sm:$0xff]
        %v1801 = vld [vmem:[%s1727 + $0x248] sm:$0xff]
        %v1802 = vld [vmem:[%s1727 + $0x250] sm:$0xff]
        %v1803 = vld [vmem:[%s1727 + $0x258] sm:$0xff]
        %v1804 = vld [vmem:[%s1727 + $0x260] sm:$0xff]
        %v1805 = vld [vmem:[%s1727 + $0x268] sm:$0xff]
        %v1806 = vld [vmem:[%s1727 + $0x270] sm:$0xff]
        %v1807 = vld [vmem:[%s1727 + $0x278] sm:$0xff]
        %v1808 = vld [vmem:[%s1727 + $0x280] sm:$0xff]
        %v1809 = vld [vmem:[%s1727 + $0x288] sm:$0xff]
        %v1810 = vld [vmem:[%s1727 + $0x290] sm:$0xff]
        %v1811 = vld [vmem:[%s1727 + $0x298] sm:$0xff]
        %v1812 = vld [vmem:[%s1727 + $0x2a0] sm:$0xff]
        %v1813 = vld [vmem:[%s1727 + $0x2a8] sm:$0xff]
        %v1814 = vld [vmem:[%s1727 + $0x2b0] sm:$0xff]
        %v1815 = vld [vmem:[%s1727 + $0x2b8] sm:$0xff]
        %v1816 = vld [vmem:[%s1727 + $0x2c0] sm:$0xff]
        %v1817 = vld [vmem:[%s1727 + $0x2c8] sm:$0xff]
        %v1818 = vld [vmem:[%s1727 + $0x2d0] sm:$0xff]
        %v1819 = vld [vmem:[%s1727 + $0x2d8] sm:$0xff]
        %v1820 = vld [vmem:[%s1727 + $0x2e0] sm:$0xff]
        %v1821 = vld [vmem:[%s1727 + $0x2e8] sm:$0xff]
        %v1822 = vld [vmem:[%s1727 + $0x2f0] sm:$0xff]
        %v1823 = vld [vmem:[%s1727 + $0x2f8] sm:$0xff]
        %v1824 = vld [vmem:[%s1727 + $0x300] sm:$0xff]
        %v1825 = vld [vmem:[%s1727 + $0x308] sm:$0xff]
        %v1826 = vld [vmem:[%s1727 + $0x310] sm:$0xff]
        %v1827 = vld [vmem:[%s1727 + $0x318] sm:$0xff]
        %v1828 = vld [vmem:[%s1727 + $0x320] sm:$0xff]
        %v1829 = vld [vmem:[%s1727 + $0x328] sm:$0xff]
        %v1830 = vld [vmem:[%s1727 + $0x330] sm:$0xff]
        %v1831 = vld [vmem:[%s1727 + $0x338] sm:$0xff]
        %v1832 = vld [vmem:[%s1727 + $0x340] sm:$0xff]
        %v1833 = vld [vmem:[%s1727 + $0x348] sm:$0xff]
        %v1834 = vld [vmem:[%s1727 + $0x350] sm:$0xff]
        %v1835 = vld [vmem:[%s1727 + $0x358] sm:$0xff]
        %v1836 = vld [vmem:[%s1727 + $0x360] sm:$0xff]
        %v1837 = vld [vmem:[%s1727 + $0x368] sm:$0xff]
        %v1838 = vld [vmem:[%s1727 + $0x370] sm:$0xff]
        %v1839 = vld [vmem:[%s1727 + $0x378] sm:$0xff]
        %v1840 = vld [vmem:[%s1727 + $0x380] sm:$0xff]
        %v1841 = vld [vmem:[%s1727 + $0x388] sm:$0xff]
        %v1842 = vld [vmem:[%s1727 + $0x390] sm:$0xff]
        %v1843 = vld [vmem:[%s1727 + $0x398] sm:$0xff]
        %v1844 = vld [vmem:[%s1727 + $0x3a0] sm:$0xff]
        %v1845 = vld [vmem:[%s1727 + $0x3a8] sm:$0xff]
        %v1846 = vld [vmem:[%s1727 + $0x3b0] sm:$0xff]
        %v1847 = vld [vmem:[%s1727 + $0x3b8] sm:$0xff]
        %v1848 = vld [vmem:[%s1727 + $0x3c0] sm:$0xff]
        %v1849 = vld [vmem:[%s1727 + $0x3c8] sm:$0xff]
        %v1850 = vld [vmem:[%s1727 + $0x3d0] sm:$0xff]
        %v1851 = vld [vmem:[%s1727 + $0x3d8] sm:$0xff]
        %v1852 = vld [vmem:[%s1727 + $0x3e0] sm:$0xff]
        %v1853 = vld [vmem:[%s1727 + $0x3e8] sm:$0xff]
        %v1854 = vld [vmem:[%s1727 + $0x3f0] sm:$0xff]
        %v1855 = vld [vmem:[%s1727 + $0x3f8] sm:$0xff]
        %v1856 = vld [vmem:[%s1727 + $0x400] sm:$0xff]
        %v1857 = vld [vmem:[%s1727 + $0x408] sm:$0xff]
        %v1858 = vld [vmem:[%s1727 + $0x410] sm:$0xff]
        %v1859 = vld [vmem:[%s1727 + $0x418] sm:$0xff]
        %v1860 = vld [vmem:[%s1727 + $0x420] sm:$0xff]
        %v1861 = vld [vmem:[%s1727 + $0x428] sm:$0xff]
        %v1862 = vld [vmem:[%s1727 + $0x430] sm:$0xff]
        %v1863 = vld [vmem:[%s1727 + $0x438] sm:$0xff]
        %v1864 = vld [vmem:[%s1727 + $0x440] sm:$0xff]
        %v1865 = vld [vmem:[%s1727 + $0x448] sm:$0xff]
        %v1866 = vld [vmem:[%s1727 + $0x450] sm:$0xff]
        %v1867 = vld [vmem:[%s1727 + $0x458] sm:$0xff]
        %v1868 = vld [vmem:[%s1727 + $0x460] sm:$0xff]
        %v1869 = vld [vmem:[%s1727 + $0x468] sm:$0xff]
        %v1870 = vld [vmem:[%s1727 + $0x470] sm:$0xff]
        %v1871 = vld [vmem:[%s1727 + $0x478] sm:$0xff]
        %1872 = vmatprep.subr.mxu0 0.0
        %1873 = vmatpush1.msra.mxu0 %v1743
        %1874 = vmatprep.subr.mxu0 0.0
        %1875 = vmatpush1.msra.mxu0 %v1742
        %1876 = vmatprep.subr.mxu0 0.0
        %1877 = vmatpush1.msra.mxu0 %v1741
        %1878 = vmatprep.subr.mxu0 0.0
        %1879 = vmatpush1.msra.mxu0 %v1740
        %1880 = vmatprep.subr.mxu0 0.0
        %1881 = vmatpush1.msra.mxu0 %v1739
        %1882 = vmatprep.subr.mxu0 0.0
        %1883 = vmatpush1.msra.mxu0 %v1738
        %1884 = vmatprep.subr.mxu0 0.0
        %1885 = vmatpush1.msra.mxu0 %v1737
        %1886 = vmatprep.subr.mxu0 0.0
        %1887 = vmatpush1.msra.mxu0 %v1736
        %1888 = vmatprep.subr.mxu0 0.0
        %1889 = vmatpush1.msra.mxu0 %v1735
        %1890 = vmatprep.subr.mxu0 0.0
        %1891 = vmatpush1.msra.mxu0 %v1734
        %1892 = vmatprep.subr.mxu0 0.0
        %1893 = vmatpush1.msra.mxu0 %v1733
        %1894 = vmatprep.subr.mxu0 0.0
        %1895 = vmatpush1.msra.mxu0 %v1732
        %1896 = vmatprep.subr.mxu0 0.0
        %1897 = vmatpush1.msra.mxu0 %v1731
        %1898 = vmatprep.subr.mxu0 0.0
        %1899 = vmatpush1.msra.mxu0 %v1730
        %1900 = vmatprep.subr.mxu0 0.0
        %1901 = vmatpush1.msra.mxu0 %v1729
        %1902 = vmatprep.subr.mxu0 0.0
        %1903 = vmatpush1.msra.mxu0 %v1728
        %1904 = vmatprep.subr.mxu0 0.0
        %1905 = vmatpush2.msra.mxu0 %v1759
        %1906 = vmatprep.subr.mxu0 0.0
        %1907 = vmatpush2.msra.mxu0 %v1758
        %1908 = vmatprep.subr.mxu0 0.0
        %1909 = vmatpush2.msra.mxu0 %v1757
        %1910 = vmatprep.subr.mxu0 0.0
        %1911 = vmatpush2.msra.mxu0 %v1756
        %1912 = vmatprep.subr.mxu0 0.0
        %1913 = vmatpush2.msra.mxu0 %v1755
        %1914 = vmatprep.subr.mxu0 0.0
        %1915 = vmatpush2.msra.mxu0 %v1754
        %1916 = vmatprep.subr.mxu0 0.0
        %1917 = vmatpush2.msra.mxu0 %v1753
        %1918 = vmatprep.subr.mxu0 0.0
        %1919 = vmatpush2.msra.mxu0 %v1752
        %1920 = vmatprep.subr.mxu0 0.0
        %1921 = vmatpush2.msra.mxu0 %v1751
        %1922 = vmatprep.subr.mxu0 0.0
        %1923 = vmatpush2.msra.mxu0 %v1750
        %1924 = vmatprep.subr.mxu0 0.0
        %1925 = vmatpush2.msra.mxu0 %v1749
        %1926 = vmatprep.subr.mxu0 0.0
        %1927 = vmatpush2.msra.mxu0 %v1748
        %1928 = vmatprep.subr.mxu0 0.0
        %1929 = vmatpush2.msra.mxu0 %v1747
        %1930 = vmatprep.subr.mxu0 0.0
        %1931 = vmatpush2.msra.mxu0 %v1746
        %1932 = vmatprep.subr.mxu0 0.0
        %1933 = vmatpush2.msra.mxu0 %v1745
        %1934 = vmatprep.subr.mxu0 0.0
        %1935 = vmatpush2.msra.mxu0 %v1744
        %1936 = vmatprep.mubr.f32.mxu0 %v1622
        %1937 = vmatmul.mubr.f32.gmra.mxu0 %v1606
        %v1938 = vpop.f32.mrf.mxu0
        %v1939 = vadd.f32 0.0, %v1938
        %v1940 = vpop.f32.mrf.mxu0
        %1941 = vmatprep.mubr.f32.mxu0 %v1623
        %1942 = vmatmul.mubr.f32.gmra.mxu0 %v1607
        %v1943 = vpop.f32.mrf.mxu0
        %v1944 = vadd.f32 0.0, %v1943
        %v1945 = vpop.f32.mrf.mxu0
        %1946 = vmatprep.mubr.f32.mxu0 %v1624
        %1947 = vmatmul.mubr.f32.gmra.mxu0 %v1608
        %v1948 = vpop.f32.mrf.mxu0
        %v1949 = vadd.f32 0.0, %v1948
        %v1950 = vpop.f32.mrf.mxu0
        %1951 = vmatprep.mubr.f32.mxu0 %v1625
        %1952 = vmatmul.mubr.f32.gmra.mxu0 %v1609
        %v1953 = vpop.f32.mrf.mxu0
        %v1954 = vadd.f32 0.0, %v1953
        %v1955 = vpop.f32.mrf.mxu0
        %1956 = vmatprep.mubr.f32.mxu0 %v1626
        %1957 = vmatmul.mubr.f32.gmra.mxu0 %v1610
        %v1958 = vpop.f32.mrf.mxu0
        %v1959 = vadd.f32 0.0, %v1958
        %v1960 = vpop.f32.mrf.mxu0
        %1961 = vmatprep.mubr.f32.mxu0 %v1627
        %1962 = vmatmul.mubr.f32.gmra.mxu0 %v1611
        %v1963 = vpop.f32.mrf.mxu0
        %v1964 = vadd.f32 0.0, %v1963
        %v1965 = vpop.f32.mrf.mxu0
        %1966 = vmatprep.mubr.f32.mxu0 %v1628
        %1967 = vmatmul.mubr.f32.gmra.mxu0 %v1612
        %v1968 = vpop.f32.mrf.mxu0
        %v1969 = vadd.f32 0.0, %v1968
        %v1970 = vpop.f32.mrf.mxu0
        %1971 = vmatprep.mubr.f32.mxu0 %v1629
        %1972 = vmatmul.mubr.f32.gmra.mxu0 %v1613
        %v1973 = vpop.f32.mrf.mxu0
        %v1974 = vadd.f32 0.0, %v1973
        %v1975 = vpop.f32.mrf.mxu0
        %1976 = vmatprep.mubr.f32.mxu0 %v1630
        %1977 = vmatmul.mubr.f32.gmra.mxu0 %v1614
        %v1978 = vpop.f32.mrf.mxu0
        %v1979 = vadd.f32 0.0, %v1978
        %v1980 = vpop.f32.mrf.mxu0
        %1981 = vmatprep.mubr.f32.mxu0 %v1631
        %1982 = vmatmul.mubr.f32.gmra.mxu0 %v1615
        %v1983 = vpop.f32.mrf.mxu0
        %v1984 = vadd.f32 0.0, %v1983
        %v1985 = vpop.f32.mrf.mxu0
        %1986 = vmatprep.mubr.f32.mxu0 %v1632
        %1987 = vmatmul.mubr.f32.gmra.mxu0 %v1616
        %v1988 = vpop.f32.mrf.mxu0
        %v1989 = vadd.f32 0.0, %v1988
        %v1990 = vpop.f32.mrf.mxu0
        %1991 = vmatprep.mubr.f32.mxu0 %v1633
        %1992 = vmatmul.mubr.f32.gmra.mxu0 %v1617
        %v1993 = vpop.f32.mrf.mxu0
        %v1994 = vadd.f32 0.0, %v1993
        %v1995 = vpop.f32.mrf.mxu0
        %1996 = vmatprep.mubr.f32.mxu0 %v1634
        %1997 = vmatmul.mubr.f32.gmra.mxu0 %v1618
        %v1998 = vpop.f32.mrf.mxu0
        %v1999 = vadd.f32 0.0, %v1998
        %v2000 = vpop.f32.mrf.mxu0
        %2001 = vmatprep.mubr.f32.mxu0 %v1635
        %2002 = vmatmul.mubr.f32.gmra.mxu0 %v1619
        %v2003 = vpop.f32.mrf.mxu0
        %v2004 = vadd.f32 0.0, %v2003
        %v2005 = vpop.f32.mrf.mxu0
        %2006 = vmatprep.mubr.f32.mxu0 %v1636
        %2007 = vmatmul.mubr.f32.gmra.mxu0 %v1620
        %v2008 = vpop.f32.mrf.mxu0
        %v2009 = vadd.f32 0.0, %v2008
        %v2010 = vpop.f32.mrf.mxu0
        %2011 = vmatprep.mubr.f32.mxu0 %v1637
        %2012 = vmatmul.mubr.f32.gmra.mxu0 %v1621
        %v2013 = vpop.f32.mrf.mxu0
        %v2014 = vadd.f32 0.0, %v2013
        %v2015 = vpop.f32.mrf.mxu0
        %2016 = vdwg.mxu0
        %2017 = vmatprep.subr.mxu0 0.0
        %2018 = vmatpush1.msra.mxu0 %v1775
        %2019 = vmatprep.subr.mxu0 0.0
        %2020 = vmatpush1.msra.mxu0 %v1774
        %2021 = vmatprep.subr.mxu0 0.0
        %2022 = vmatpush1.msra.mxu0 %v1773
        %2023 = vmatprep.subr.mxu0 0.0
        %2024 = vmatpush1.msra.mxu0 %v1772
        %2025 = vmatprep.subr.mxu0 0.0
        %2026 = vmatpush1.msra.mxu0 %v1771
        %2027 = vmatprep.subr.mxu0 0.0
        %2028 = vmatpush1.msra.mxu0 %v1770
        %2029 = vmatprep.subr.mxu0 0.0
        %2030 = vmatpush1.msra.mxu0 %v1769
        %2031 = vmatprep.subr.mxu0 0.0
        %2032 = vmatpush1.msra.mxu0 %v1768
        %2033 = vmatprep.subr.mxu0 0.0
        %2034 = vmatpush1.msra.mxu0 %v1767
        %2035 = vmatprep.subr.mxu0 0.0
        %2036 = vmatpush1.msra.mxu0 %v1766
        %2037 = vmatprep.subr.mxu0 0.0
        %2038 = vmatpush1.msra.mxu0 %v1765
        %2039 = vmatprep.subr.mxu0 0.0
        %2040 = vmatpush1.msra.mxu0 %v1764
        %2041 = vmatprep.subr.mxu0 0.0
        %2042 = vmatpush1.msra.mxu0 %v1763
        %2043 = vmatprep.subr.mxu0 0.0
        %2044 = vmatpush1.msra.mxu0 %v1762
        %2045 = vmatprep.subr.mxu0 0.0
        %2046 = vmatpush1.msra.mxu0 %v1761
        %2047 = vmatprep.subr.mxu0 0.0
        %2048 = vmatpush1.msra.mxu0 %v1760
        %2049 = vmatprep.subr.mxu0 0.0
        %2050 = vmatpush2.msra.mxu0 %v1791
        %2051 = vmatprep.subr.mxu0 0.0
        %2052 = vmatpush2.msra.mxu0 %v1790
        %2053 = vmatprep.subr.mxu0 0.0
        %2054 = vmatpush2.msra.mxu0 %v1789
        %2055 = vmatprep.subr.mxu0 0.0
        %2056 = vmatpush2.msra.mxu0 %v1788
        %2057 = vmatprep.subr.mxu0 0.0
        %2058 = vmatpush2.msra.mxu0 %v1787
        %2059 = vmatprep.subr.mxu0 0.0
        %2060 = vmatpush2.msra.mxu0 %v1786
        %2061 = vmatprep.subr.mxu0 0.0
        %2062 = vmatpush2.msra.mxu0 %v1785
        %2063 = vmatprep.subr.mxu0 0.0
        %2064 = vmatpush2.msra.mxu0 %v1784
        %2065 = vmatprep.subr.mxu0 0.0
        %2066 = vmatpush2.msra.mxu0 %v1783
        %2067 = vmatprep.subr.mxu0 0.0
        %2068 = vmatpush2.msra.mxu0 %v1782
        %2069 = vmatprep.subr.mxu0 0.0
        %2070 = vmatpush2.msra.mxu0 %v1781
        %2071 = vmatprep.subr.mxu0 0.0
        %2072 = vmatpush2.msra.mxu0 %v1780
        %2073 = vmatprep.subr.mxu0 0.0
        %2074 = vmatpush2.msra.mxu0 %v1779
        %2075 = vmatprep.subr.mxu0 0.0
        %2076 = vmatpush2.msra.mxu0 %v1778
        %2077 = vmatprep.subr.mxu0 0.0
        %2078 = vmatpush2.msra.mxu0 %v1777
        %2079 = vmatprep.subr.mxu0 0.0
        %2080 = vmatpush2.msra.mxu0 %v1776
        %2081 = vmatprep.mubr.f32.mxu0 %v1646
        %2082 = vmatmul.mubr.f32.gmra.mxu0 %v1607
        %v2083 = vpop.f32.mrf.mxu0
        %v2084 = vadd.f32 %v1939, %v2083
        %v2085 = vpop.f32.mrf.mxu0
        %2086 = vmatprep.mubr.f32.mxu0 %v1647
        %2087 = vmatmul.mubr.f32.gmra.mxu0 %v1638
        %v2088 = vpop.f32.mrf.mxu0
        %v2089 = vadd.f32 %v1944, %v2088
        %v2090 = vpop.f32.mrf.mxu0
        %2091 = vmatprep.mubr.f32.mxu0 %v1648
        %2092 = vmatmul.mubr.f32.gmra.mxu0 %v1609
        %v2093 = vpop.f32.mrf.mxu0
        %v2094 = vadd.f32 %v1949, %v2093
        %v2095 = vpop.f32.mrf.mxu0
        %2096 = vmatprep.mubr.f32.mxu0 %v1649
        %2097 = vmatmul.mubr.f32.gmra.mxu0 %v1639
        %v2098 = vpop.f32.mrf.mxu0
        %v2099 = vadd.f32 %v1954, %v2098
        %v2100 = vpop.f32.mrf.mxu0
        %2101 = vmatprep.mubr.f32.mxu0 %v1650
        %2102 = vmatmul.mubr.f32.gmra.mxu0 %v1611
        %v2103 = vpop.f32.mrf.mxu0
        %v2104 = vadd.f32 %v1959, %v2103
        %v2105 = vpop.f32.mrf.mxu0
        %2106 = vmatprep.mubr.f32.mxu0 %v1651
        %2107 = vmatmul.mubr.f32.gmra.mxu0 %v1640
        %v2108 = vpop.f32.mrf.mxu0
        %v2109 = vadd.f32 %v1964, %v2108
        %v2110 = vpop.f32.mrf.mxu0
        %2111 = vmatprep.mubr.f32.mxu0 %v1652
        %2112 = vmatmul.mubr.f32.gmra.mxu0 %v1613
        %v2113 = vpop.f32.mrf.mxu0
        %v2114 = vadd.f32 %v1969, %v2113
        %v2115 = vpop.f32.mrf.mxu0
        %2116 = vmatprep.mubr.f32.mxu0 %v1653
        %2117 = vmatmul.mubr.f32.gmra.mxu0 %v1641
        %v2118 = vpop.f32.mrf.mxu0
        %v2119 = vadd.f32 %v1974, %v2118
        %v2120 = vpop.f32.mrf.mxu0
        %2121 = vmatprep.mubr.f32.mxu0 %v1654
        %2122 = vmatmul.mubr.f32.gmra.mxu0 %v1615
        %v2123 = vpop.f32.mrf.mxu0
        %v2124 = vadd.f32 %v1979, %v2123
        %v2125 = vpop.f32.mrf.mxu0
        %2126 = vmatprep.mubr.f32.mxu0 %v1655
        %2127 = vmatmul.mubr.f32.gmra.mxu0 %v1642
        %v2128 = vpop.f32.mrf.mxu0
        %v2129 = vadd.f32 %v1984, %v2128
        %v2130 = vpop.f32.mrf.mxu0
        %2131 = vmatprep.mubr.f32.mxu0 %v1656
        %2132 = vmatmul.mubr.f32.gmra.mxu0 %v1617
        %v2133 = vpop.f32.mrf.mxu0
        %v2134 = vadd.f32 %v1989, %v2133
        %v2135 = vpop.f32.mrf.mxu0
        %2136 = vmatprep.mubr.f32.mxu0 %v1657
        %2137 = vmatmul.mubr.f32.gmra.mxu0 %v1643
        %v2138 = vpop.f32.mrf.mxu0
        %v2139 = vadd.f32 %v1994, %v2138
        %v2140 = vpop.f32.mrf.mxu0
        %2141 = vmatprep.mubr.f32.mxu0 %v1658
        %2142 = vmatmul.mubr.f32.gmra.mxu0 %v1619
        %v2143 = vpop.f32.mrf.mxu0
        %v2144 = vadd.f32 %v1999, %v2143
        %v2145 = vpop.f32.mrf.mxu0
        %2146 = vmatprep.mubr.f32.mxu0 %v1659
        %2147 = vmatmul.mubr.f32.gmra.mxu0 %v1644
        %v2148 = vpop.f32.mrf.mxu0
        %v2149 = vadd.f32 %v2004, %v2148
        %v2150 = vpop.f32.mrf.mxu0
        %2151 = vmatprep.mubr.f32.mxu0 %v1660
        %2152 = vmatmul.mubr.f32.gmra.mxu0 %v1621
        %v2153 = vpop.f32.mrf.mxu0
        %v2154 = vadd.f32 %v2009, %v2153
        %v2155 = vpop.f32.mrf.mxu0
        %2156 = vmatprep.mubr.f32.mxu0 %v1661
        %2157 = vmatmul.mubr.f32.gmra.mxu0 %v1645
        %v2158 = vpop.f32.mrf.mxu0
        %v2159 = vadd.f32 %v2014, %v2158
        %v2160 = vpop.f32.mrf.mxu0
        %2161 = vdwg.mxu0
        %2162 = vmatprep.subr.mxu0 0.0
        %2163 = vmatpush1.msra.mxu0 %v1807
        %2164 = vmatprep.subr.mxu0 0.0
        %2165 = vmatpush1.msra.mxu0 %v1806
        %2166 = vmatprep.subr.mxu0 0.0
        %2167 = vmatpush1.msra.mxu0 %v1805
        %2168 = vmatprep.subr.mxu0 0.0
        %2169 = vmatpush1.msra.mxu0 %v1804
        %2170 = vmatprep.subr.mxu0 0.0
        %2171 = vmatpush1.msra.mxu0 %v1803
        %2172 = vmatprep.subr.mxu0 0.0
        %2173 = vmatpush1.msra.mxu0 %v1802
        %2174 = vmatprep.subr.mxu0 0.0
        %2175 = vmatpush1.msra.mxu0 %v1801
        %2176 = vmatprep.subr.mxu0 0.0
        %2177 = vmatpush1.msra.mxu0 %v1800
        %2178 = vmatprep.subr.mxu0 0.0
        %2179 = vmatpush1.msra.mxu0 %v1799
        %2180 = vmatprep.subr.mxu0 0.0
        %2181 = vmatpush1.msra.mxu0 %v1798
        %2182 = vmatprep.subr.mxu0 0.0
        %2183 = vmatpush1.msra.mxu0 %v1797
        %2184 = vmatprep.subr.mxu0 0.0
        %2185 = vmatpush1.msra.mxu0 %v1796
        %2186 = vmatprep.subr.mxu0 0.0
        %2187 = vmatpush1.msra.mxu0 %v1795
        %2188 = vmatprep.subr.mxu0 0.0
        %2189 = vmatpush1.msra.mxu0 %v1794
        %2190 = vmatprep.subr.mxu0 0.0
        %2191 = vmatpush1.msra.mxu0 %v1793
        %2192 = vmatprep.subr.mxu0 0.0
        %2193 = vmatpush1.msra.mxu0 %v1792
        %2194 = vmatprep.subr.mxu0 0.0
        %2195 = vmatpush2.msra.mxu0 %v1823
        %2196 = vmatprep.subr.mxu0 0.0
        %2197 = vmatpush2.msra.mxu0 %v1822
        %2198 = vmatprep.subr.mxu0 0.0
        %2199 = vmatpush2.msra.mxu0 %v1821
        %2200 = vmatprep.subr.mxu0 0.0
        %2201 = vmatpush2.msra.mxu0 %v1820
        %2202 = vmatprep.subr.mxu0 0.0
        %2203 = vmatpush2.msra.mxu0 %v1819
        %2204 = vmatprep.subr.mxu0 0.0
        %2205 = vmatpush2.msra.mxu0 %v1818
        %2206 = vmatprep.subr.mxu0 0.0
        %2207 = vmatpush2.msra.mxu0 %v1817
        %2208 = vmatprep.subr.mxu0 0.0
        %2209 = vmatpush2.msra.mxu0 %v1816
        %2210 = vmatprep.subr.mxu0 0.0
        %2211 = vmatpush2.msra.mxu0 %v1815
        %2212 = vmatprep.subr.mxu0 0.0
        %2213 = vmatpush2.msra.mxu0 %v1814
        %2214 = vmatprep.subr.mxu0 0.0
        %2215 = vmatpush2.msra.mxu0 %v1813
        %2216 = vmatprep.subr.mxu0 0.0
        %2217 = vmatpush2.msra.mxu0 %v1812
        %2218 = vmatprep.subr.mxu0 0.0
        %2219 = vmatpush2.msra.mxu0 %v1811
        %2220 = vmatprep.subr.mxu0 0.0
        %2221 = vmatpush2.msra.mxu0 %v1810
        %2222 = vmatprep.subr.mxu0 0.0
        %2223 = vmatpush2.msra.mxu0 %v1809
        %2224 = vmatprep.subr.mxu0 0.0
        %2225 = vmatpush2.msra.mxu0 %v1808
        %2226 = vmatprep.mubr.f32.mxu0 %v1647
        %2227 = vmatmul.mubr.f32.gmra.mxu0 %v1662
        %v2228 = vpop.f32.mrf.mxu0
        %v2229 = vadd.f32 %v2084, %v2228
        %v2230 = vpop.f32.mrf.mxu0
        %2231 = vmatprep.mubr.f32.mxu0 %v1678
        %2232 = vmatmul.mubr.f32.gmra.mxu0 %v1663
        %v2233 = vpop.f32.mrf.mxu0
        %v2234 = vadd.f32 %v2089, %v2233
        %v2235 = vpop.f32.mrf.mxu0
        %2236 = vmatprep.mubr.f32.mxu0 %v1649
        %2237 = vmatmul.mubr.f32.gmra.mxu0 %v1664
        %v2238 = vpop.f32.mrf.mxu0
        %v2239 = vadd.f32 %v2094, %v2238
        %v2240 = vpop.f32.mrf.mxu0
        %2241 = vmatprep.mubr.f32.mxu0 %v1679
        %2242 = vmatmul.mubr.f32.gmra.mxu0 %v1665
        %v2243 = vpop.f32.mrf.mxu0
        %v2244 = vadd.f32 %v2099, %v2243
        %v2245 = vpop.f32.mrf.mxu0
        %2246 = vmatprep.mubr.f32.mxu0 %v1651
        %2247 = vmatmul.mubr.f32.gmra.mxu0 %v1666
        %v2248 = vpop.f32.mrf.mxu0
        %v2249 = vadd.f32 %v2104, %v2248
        %v2250 = vpop.f32.mrf.mxu0
        %2251 = vmatprep.mubr.f32.mxu0 %v1680
        %2252 = vmatmul.mubr.f32.gmra.mxu0 %v1667
        %v2253 = vpop.f32.mrf.mxu0
        %v2254 = vadd.f32 %v2109, %v2253
        %v2255 = vpop.f32.mrf.mxu0
        %2256 = vmatprep.mubr.f32.mxu0 %v1653
        %2257 = vmatmul.mubr.f32.gmra.mxu0 %v1668
        %v2258 = vpop.f32.mrf.mxu0
        %v2259 = vadd.f32 %v2114, %v2258
        %v2260 = vpop.f32.mrf.mxu0
        %2261 = vmatprep.mubr.f32.mxu0 %v1681
        %2262 = vmatmul.mubr.f32.gmra.mxu0 %v1669
        %v2263 = vpop.f32.mrf.mxu0
        %v2264 = vadd.f32 %v2119, %v2263
        %v2265 = vpop.f32.mrf.mxu0
        %2266 = vmatprep.mubr.f32.mxu0 %v1655
        %2267 = vmatmul.mubr.f32.gmra.mxu0 %v1670
        %v2268 = vpop.f32.mrf.mxu0
        %v2269 = vadd.f32 %v2124, %v2268
        %v2270 = vpop.f32.mrf.mxu0
        %2271 = vmatprep.mubr.f32.mxu0 %v1682
        %2272 = vmatmul.mubr.f32.gmra.mxu0 %v1671
        %v2273 = vpop.f32.mrf.mxu0
        %v2274 = vadd.f32 %v2129, %v2273
        %v2275 = vpop.f32.mrf.mxu0
        %2276 = vmatprep.mubr.f32.mxu0 %v1657
        %2277 = vmatmul.mubr.f32.gmra.mxu0 %v1672
        %v2278 = vpop.f32.mrf.mxu0
        %v2279 = vadd.f32 %v2134, %v2278
        %v2280 = vpop.f32.mrf.mxu0
        %2281 = vmatprep.mubr.f32.mxu0 %v1683
        %2282 = vmatmul.mubr.f32.gmra.mxu0 %v1673
        %v2283 = vpop.f32.mrf.mxu0
        %v2284 = vadd.f32 %v2139, %v2283
        %v2285 = vpop.f32.mrf.mxu0
        %2286 = vmatprep.mubr.f32.mxu0 %v1659
        %2287 = vmatmul.mubr.f32.gmra.mxu0 %v1674
        %v2288 = vpop.f32.mrf.mxu0
        %v2289 = vadd.f32 %v2144, %v2288
        %v2290 = vpop.f32.mrf.mxu0
        %2291 = vmatprep.mubr.f32.mxu0 %v1684
        %2292 = vmatmul.mubr.f32.gmra.mxu0 %v1675
        %v2293 = vpop.f32.mrf.mxu0
        %v2294 = vadd.f32 %v2149, %v2293
        %v2295 = vpop.f32.mrf.mxu0
        %2296 = vmatprep.mubr.f32.mxu0 %v1661
        %2297 = vmatmul.mubr.f32.gmra.mxu0 %v1676
        %v2298 = vpop.f32.mrf.mxu0
        %v2299 = vadd.f32 %v2154, %v2298
        %v2300 = vpop.f32.mrf.mxu0
        %2301 = vmatprep.mubr.f32.mxu0 %v1685
        %2302 = vmatmul.mubr.f32.gmra.mxu0 %v1677
        %v2303 = vpop.f32.mrf.mxu0
        %v2304 = vadd.f32 %v2159, %v2303
        %v2305 = vpop.f32.mrf.mxu0
        %2306 = vdwg.mxu0
        %2307 = vmatprep.subr.mxu0 0.0
        %2308 = vmatpush1.msra.mxu0 %v1839
        %2309 = vmatprep.subr.mxu0 0.0
        %2310 = vmatpush1.msra.mxu0 %v1838
        %2311 = vmatprep.subr.mxu0 0.0
        %2312 = vmatpush1.msra.mxu0 %v1837
        %2313 = vmatprep.subr.mxu0 0.0
        %2314 = vmatpush1.msra.mxu0 %v1836
        %2315 = vmatprep.subr.mxu0 0.0
        %2316 = vmatpush1.msra.mxu0 %v1835
        %2317 = vmatprep.subr.mxu0 0.0
        %2318 = vmatpush1.msra.mxu0 %v1834
        %2319 = vmatprep.subr.mxu0 0.0
        %2320 = vmatpush1.msra.mxu0 %v1833
        %2321 = vmatprep.subr.mxu0 0.0
        %2322 = vmatpush1.msra.mxu0 %v1832
        %2323 = vmatprep.subr.mxu0 0.0
        %2324 = vmatpush1.msra.mxu0 %v1831
        %2325 = vmatprep.subr.mxu0 0.0
        %2326 = vmatpush1.msra.mxu0 %v1830
        %2327 = vmatprep.subr.mxu0 0.0
        %2328 = vmatpush1.msra.mxu0 %v1829
        %2329 = vmatprep.subr.mxu0 0.0
        %2330 = vmatpush1.msra.mxu0 %v1828
        %2331 = vmatprep.subr.mxu0 0.0
        %2332 = vmatpush1.msra.mxu0 %v1827
        %2333 = vmatprep.subr.mxu0 0.0
        %2334 = vmatpush1.msra.mxu0 %v1826
        %2335 = vmatprep.subr.mxu0 0.0
        %2336 = vmatpush1.msra.mxu0 %v1825
        %2337 = vmatprep.subr.mxu0 0.0
        %2338 = vmatpush1.msra.mxu0 %v1824
        %2339 = vmatprep.subr.mxu0 0.0
        %2340 = vmatpush2.msra.mxu0 %v1855
        %2341 = vmatprep.subr.mxu0 0.0
        %2342 = vmatpush2.msra.mxu0 %v1854
        %2343 = vmatprep.subr.mxu0 0.0
        %2344 = vmatpush2.msra.mxu0 %v1853
        %2345 = vmatprep.subr.mxu0 0.0
        %2346 = vmatpush2.msra.mxu0 %v1852
        %2347 = vmatprep.subr.mxu0 0.0
        %2348 = vmatpush2.msra.mxu0 %v1851
        %2349 = vmatprep.subr.mxu0 0.0
        %2350 = vmatpush2.msra.mxu0 %v1850
        %2351 = vmatprep.subr.mxu0 0.0
        %2352 = vmatpush2.msra.mxu0 %v1849
        %2353 = vmatprep.subr.mxu0 0.0
        %2354 = vmatpush2.msra.mxu0 %v1848
        %2355 = vmatprep.subr.mxu0 0.0
        %2356 = vmatpush2.msra.mxu0 %v1847
        %2357 = vmatprep.subr.mxu0 0.0
        %2358 = vmatpush2.msra.mxu0 %v1846
        %2359 = vmatprep.subr.mxu0 0.0
        %2360 = vmatpush2.msra.mxu0 %v1845
        %2361 = vmatprep.subr.mxu0 0.0
        %2362 = vmatpush2.msra.mxu0 %v1844
        %2363 = vmatprep.subr.mxu0 0.0
        %2364 = vmatpush2.msra.mxu0 %v1843
        %2365 = vmatprep.subr.mxu0 0.0
        %2366 = vmatpush2.msra.mxu0 %v1842
        %2367 = vmatprep.subr.mxu0 0.0
        %2368 = vmatpush2.msra.mxu0 %v1841
        %2369 = vmatprep.subr.mxu0 0.0
        %2370 = vmatpush2.msra.mxu0 %v1840
        %2371 = vmatprep.mubr.f32.mxu0 %v1703
        %2372 = vmatmul.mubr.f32.gmra.mxu0 %v1687
        %v2373 = vpop.f32.mrf.mxu0
        %v2374 = vadd.f32 %v2229, %v2373
        %v2375 = vpop.f32.mrf.mxu0
        %2376 = vmatprep.mubr.f32.mxu0 %v1704
        %2377 = vmatmul.mubr.f32.gmra.mxu0 %v1688
        %v2378 = vpop.f32.mrf.mxu0
        %v2379 = vadd.f32 %v2234, %v2378
        %v2380 = vpop.f32.mrf.mxu0
        %2381 = vmatprep.mubr.f32.mxu0 %v1705
        %2382 = vmatmul.mubr.f32.gmra.mxu0 %v1689
        %v2383 = vpop.f32.mrf.mxu0
        %v2384 = vadd.f32 %v2239, %v2383
        %v2385 = vpop.f32.mrf.mxu0
        %2386 = vmatprep.mubr.f32.mxu0 %v1706
        %2387 = vmatmul.mubr.f32.gmra.mxu0 %v1690
        %v2388 = vpop.f32.mrf.mxu0
        %v2389 = vadd.f32 %v2244, %v2388
        %v2390 = vpop.f32.mrf.mxu0
        %2391 = vmatprep.mubr.f32.mxu0 %v1707
        %2392 = vmatmul.mubr.f32.gmra.mxu0 %v1691
        %v2393 = vpop.f32.mrf.mxu0
        %v2394 = vadd.f32 %v2249, %v2393
        %v2395 = vpop.f32.mrf.mxu0
        %2396 = vmatprep.mubr.f32.mxu0 %v1708
        %2397 = vmatmul.mubr.f32.gmra.mxu0 %v1692
        %v2398 = vpop.f32.mrf.mxu0
        %v2399 = vadd.f32 %v2254, %v2398
        %v2400 = vpop.f32.mrf.mxu0
        %2401 = vmatprep.mubr.f32.mxu0 %v1709
        %2402 = vmatmul.mubr.f32.gmra.mxu0 %v1693
        %v2403 = vpop.f32.mrf.mxu0
        %v2404 = vadd.f32 %v2259, %v2403
        %v2405 = vpop.f32.mrf.mxu0
        %2406 = vmatprep.mubr.f32.mxu0 %v1710
        %2407 = vmatmul.mubr.f32.gmra.mxu0 %v1694
        %v2408 = vpop.f32.mrf.mxu0
        %v2409 = vadd.f32 %v2264, %v2408
        %v2410 = vpop.f32.mrf.mxu0
        %2411 = vmatprep.mubr.f32.mxu0 %v1711
        %2412 = vmatmul.mubr.f32.gmra.mxu0 %v1695
        %v2413 = vpop.f32.mrf.mxu0
        %v2414 = vadd.f32 %v2269, %v2413
        %v2415 = vpop.f32.mrf.mxu0
        %2416 = vmatprep.mubr.f32.mxu0 %v1712
        %2417 = vmatmul.mubr.f32.gmra.mxu0 %v1696
        %v2418 = vpop.f32.mrf.mxu0
        %v2419 = vadd.f32 %v2274, %v2418
        %v2420 = vpop.f32.mrf.mxu0
        %2421 = vmatprep.mubr.f32.mxu0 %v1713
        %2422 = vmatmul.mubr.f32.gmra.mxu0 %v1697
        %v2423 = vpop.f32.mrf.mxu0
        %v2424 = vadd.f32 %v2279, %v2423
        %v2425 = vpop.f32.mrf.mxu0
        %2426 = vmatprep.mubr.f32.mxu0 %v1714
        %2427 = vmatmul.mubr.f32.gmra.mxu0 %v1698
        %v2428 = vpop.f32.mrf.mxu0
        %v2429 = vadd.f32 %v2284, %v2428
        %v2430 = vpop.f32.mrf.mxu0
        %2431 = vmatprep.mubr.f32.mxu0 %v1715
        %2432 = vmatmul.mubr.f32.gmra.mxu0 %v1699
        %v2433 = vpop.f32.mrf.mxu0
        %v2434 = vadd.f32 %v2289, %v2433
        %v2435 = vpop.f32.mrf.mxu0
        %2436 = vmatprep.mubr.f32.mxu0 %v1716
        %2437 = vmatmul.mubr.f32.gmra.mxu0 %v1700
        %v2438 = vpop.f32.mrf.mxu0
        %v2439 = vadd.f32 %v2294, %v2438
        %v2440 = vpop.f32.mrf.mxu0
        %2441 = vmatprep.mubr.f32.mxu0 %v1717
        %2442 = vmatmul.mubr.f32.gmra.mxu0 %v1701
        %v2443 = vpop.f32.mrf.mxu0
        %v2444 = vadd.f32 %v2299, %v2443
        %v2445 = vpop.f32.mrf.mxu0
        %2446 = vmatprep.mubr.f32.mxu0 %v1718
        %2447 = vmatmul.mubr.f32.gmra.mxu0 %v1702
        %v2448 = vpop.f32.mrf.mxu0
        %v2449 = vadd.f32 %v2304, %v2448
        %v2450 = vpop.f32.mrf.mxu0
        %2451 = vdwg.mxu0
        %2452 = vmatprep.subr.mxu0 0.0
        %2453 = vmatpush1.msra.mxu0 %v1871
        %2454 = vmatprep.subr.mxu0 0.0
        %2455 = vmatpush1.msra.mxu0 %v1870
        %2456 = vmatprep.subr.mxu0 0.0
        %2457 = vmatpush1.msra.mxu0 %v1869
        %2458 = vmatprep.subr.mxu0 0.0
        %2459 = vmatpush1.msra.mxu0 %v1868
        %2460 = vmatprep.subr.mxu0 0.0
        %2461 = vmatpush1.msra.mxu0 %v1867
        %2462 = vmatprep.subr.mxu0 0.0
        %2463 = vmatpush1.msra.mxu0 %v1866
        %2464 = vmatprep.subr.mxu0 0.0
        %2465 = vmatpush1.msra.mxu0 %v1865
        %2466 = vmatprep.subr.mxu0 0.0
        %2467 = vmatpush1.msra.mxu0 %v1864
        %2468 = vmatprep.subr.mxu0 0.0
        %2469 = vmatpush1.msra.mxu0 %v1863
        %2470 = vmatprep.subr.mxu0 0.0
        %2471 = vmatpush1.msra.mxu0 %v1862
        %2472 = vmatprep.subr.mxu0 0.0
        %2473 = vmatpush1.msra.mxu0 %v1861
        %2474 = vmatprep.subr.mxu0 0.0
        %2475 = vmatpush1.msra.mxu0 %v1860
        %2476 = vmatprep.subr.mxu0 0.0
        %2477 = vmatpush1.msra.mxu0 %v1859
        %2478 = vmatprep.subr.mxu0 0.0
        %2479 = vmatpush1.msra.mxu0 %v1858
        %2480 = vmatprep.subr.mxu0 0.0
        %2481 = vmatpush1.msra.mxu0 %v1857
        %2482 = vmatprep.subr.mxu0 0.0
        %2483 = vmatpush1.msra.mxu0 %v1856
        %2484 = vmatprep.subr.mxu0 0.0
        %2485 = vmatpush2.msra.mxu0 0.0
        %2486 = vmatprep.subr.mxu0 0.0
        %2487 = vmatpush2.msra.mxu0 0.0
        %2488 = vmatprep.subr.mxu0 0.0
        %2489 = vmatpush2.msra.mxu0 0.0
        %2490 = vmatprep.subr.mxu0 0.0
        %2491 = vmatpush2.msra.mxu0 0.0
        %2492 = vmatprep.subr.mxu0 0.0
        %2493 = vmatpush2.msra.mxu0 0.0
        %2494 = vmatprep.subr.mxu0 0.0
        %2495 = vmatpush2.msra.mxu0 0.0
        %2496 = vmatprep.subr.mxu0 0.0
        %2497 = vmatpush2.msra.mxu0 0.0
        %2498 = vmatprep.subr.mxu0 0.0
        %2499 = vmatpush2.msra.mxu0 0.0
        %2500 = vmatprep.subr.mxu0 0.0
        %2501 = vmatpush2.msra.mxu0 0.0
        %2502 = vmatprep.subr.mxu0 0.0
        %2503 = vmatpush2.msra.mxu0 0.0
        %2504 = vmatprep.subr.mxu0 0.0
        %2505 = vmatpush2.msra.mxu0 0.0
        %2506 = vmatprep.subr.mxu0 0.0
        %2507 = vmatpush2.msra.mxu0 0.0
        %2508 = vmatprep.subr.mxu0 0.0
        %2509 = vmatpush2.msra.mxu0 0.0
        %2510 = vmatprep.subr.mxu0 0.0
        %2511 = vmatpush2.msra.mxu0 0.0
        %2512 = vmatprep.subr.mxu0 0.0
        %2513 = vmatpush2.msra.mxu0 0.0
        %2514 = vmatprep.subr.mxu0 0.0
        %2515 = vmatpush2.msra.mxu0 0.0
        %2516 = vmatprep.mubr.f32.mxu0 0.0
        %2517 = vmatmul.mubr.f32.gmra.mxu0 %v1688
        %v2518 = vpop.f32.mrf.mxu0
        %v2519 = vadd.f32 %v2374, %v2518
        %v2520 = vpop.f32.mrf.mxu0
        %2521 = vmatprep.mubr.f32.mxu0 0.0
        %2522 = vmatmul.mubr.f32.gmra.mxu0 %v1719
        %v2523 = vpop.f32.mrf.mxu0
        %v2524 = vadd.f32 %v2379, %v2523
        %v2525 = vpop.f32.mrf.mxu0
        %2526 = vmatprep.mubr.f32.mxu0 0.0
        %2527 = vmatmul.mubr.f32.gmra.mxu0 %v1690
        %v2528 = vpop.f32.mrf.mxu0
        %v2529 = vadd.f32 %v2384, %v2528
        %v2530 = vpop.f32.mrf.mxu0
        %2531 = vmatprep.mubr.f32.mxu0 0.0
        %2532 = vmatmul.mubr.f32.gmra.mxu0 %v1720
        %v2533 = vpop.f32.mrf.mxu0
        %v2534 = vadd.f32 %v2389, %v2533
        %v2535 = vpop.f32.mrf.mxu0
        %2536 = vmatprep.mubr.f32.mxu0 0.0
        %2537 = vmatmul.mubr.f32.gmra.mxu0 %v1692
        %v2538 = vpop.f32.mrf.mxu0
        %v2539 = vadd.f32 %v2394, %v2538
        %v2540 = vpop.f32.mrf.mxu0
        %2541 = vmatprep.mubr.f32.mxu0 0.0
        %2542 = vmatmul.mubr.f32.gmra.mxu0 %v1721
        %v2543 = vpop.f32.mrf.mxu0
        %v2544 = vadd.f32 %v2399, %v2543
        %v2545 = vpop.f32.mrf.mxu0
        %2546 = vmatprep.mubr.f32.mxu0 0.0
        %2547 = vmatmul.mubr.f32.gmra.mxu0 %v1694
        %v2548 = vpop.f32.mrf.mxu0
        %v2549 = vadd.f32 %v2404, %v2548
        %v2550 = vpop.f32.mrf.mxu0
        %2551 = vmatprep.mubr.f32.mxu0 0.0
        %2552 = vmatmul.mubr.f32.gmra.mxu0 %v1722
        %v2553 = vpop.f32.mrf.mxu0
        %v2554 = vadd.f32 %v2409, %v2553
        %v2555 = vpop.f32.mrf.mxu0
        %2556 = vmatprep.mubr.f32.mxu0 0.0
        %2557 = vmatmul.mubr.f32.gmra.mxu0 %v1696
        %v2558 = vpop.f32.mrf.mxu0
        %v2559 = vadd.f32 %v2414, %v2558
        %v2560 = vpop.f32.mrf.mxu0
        %2561 = vmatprep.mubr.f32.mxu0 0.0
        %2562 = vmatmul.mubr.f32.gmra.mxu0 %v1723
        %v2563 = vpop.f32.mrf.mxu0
        %v2564 = vadd.f32 %v2419, %v2563
        %v2565 = vpop.f32.mrf.mxu0
        %2566 = vmatprep.mubr.f32.mxu0 0.0
        %2567 = vmatmul.mubr.f32.gmra.mxu0 %v1698
        %v2568 = vpop.f32.mrf.mxu0
        %v2569 = vadd.f32 %v2424, %v2568
        %v2570 = vpop.f32.mrf.mxu0
        %2571 = vmatprep.mubr.f32.mxu0 0.0
        %2572 = vmatmul.mubr.f32.gmra.mxu0 %v1724
        %v2573 = vpop.f32.mrf.mxu0
        %v2574 = vadd.f32 %v2429, %v2573
        %v2575 = vpop.f32.mrf.mxu0
        %2576 = vmatprep.mubr.f32.mxu0 0.0
        %2577 = vmatmul.mubr.f32.gmra.mxu0 %v1700
        %v2578 = vpop.f32.mrf.mxu0
        %v2579 = vadd.f32 %v2434, %v2578
        %v2580 = vpop.f32.mrf.mxu0
        %2581 = vmatprep.mubr.f32.mxu0 0.0
        %2582 = vmatmul.mubr.f32.gmra.mxu0 %v1725
        %v2583 = vpop.f32.mrf.mxu0
        %v2584 = vadd.f32 %v2439, %v2583
        %v2585 = vpop.f32.mrf.mxu0
        %2586 = vmatprep.mubr.f32.mxu0 0.0
        %2587 = vmatmul.mubr.f32.gmra.mxu0 %v1702
        %v2588 = vpop.f32.mrf.mxu0
        %v2589 = vadd.f32 %v2444, %v2588
        %v2590 = vpop.f32.mrf.mxu0
        %2591 = vmatprep.mubr.f32.mxu0 0.0
        %2592 = vmatmul.mubr.f32.gmra.mxu0 %v1726
        %v2593 = vpop.f32.mrf.mxu0
        %v2594 = vadd.f32 %v2449, %v2593
        %v2595 = vpop.f32.mrf.mxu0
        %2596 = vdwg.mxu0
        %2597 = vst [vmem:[%s228 + $0x10] sm:$0xff] %v2519
        %2598 = vst [vmem:[%s228 + $0x28] sm:$0xff] %v2524
        %2599 = vst [vmem:[%s228 + $0x40] sm:$0xff] %v2529
        %2600 = vst [vmem:[%s228 + $0x58] sm:$0xff] %v2534
        %2601 = vst [vmem:[%s228 + $0x70] sm:$0xff] %v2539
        %2602 = vst [vmem:[%s228 + $0x88] sm:$0xff] %v2544
        %2603 = vst [vmem:[%s228 + $0xa0] sm:$0xff] %v2549
        %2604 = vst [vmem:[%s228 + $0xb8] sm:$0xff] %v2554
        %2605 = vst [vmem:[%s228 + $0xd0] sm:$0xff] %v2559
        %2606 = vst [vmem:[%s228 + $0xe8] sm:$0xff] %v2564
        %2607 = vst [vmem:[%s228 + $0x100] sm:$0xff] %v2569
        %2608 = vst [vmem:[%s228 + $0x118] sm:$0xff] %v2574
        %2609 = vst [vmem:[%s228 + $0x130] sm:$0xff] %v2579
        %2610 = vst [vmem:[%s228 + $0x148] sm:$0xff] %v2584
        %2611 = vst [vmem:[%s228 + $0x160] sm:$0xff] %v2589
        %2612 = vst [vmem:[%s228 + $0x178] sm:$0xff] %v2594
        %v2613 = vadd.f32 %v2519, %v2524
        %v2614 = vadd.f32 %v2613, %v2529
        %v2615 = vadd.f32 %v2614, %v2534
        %v2616 = vadd.f32 %v2615, %v2539
        %v2617 = vadd.f32 %v2616, %v2544
        %v2618 = vadd.f32 %v2617, %v2549
        %v2619 = vadd.f32 %v2618, %v2554
        %v2620 = vadd.f32 %v2619, %v2559
        %v2621 = vadd.f32 %v2620, %v2564
        %v2622 = vadd.f32 %v2621, %v2569
        %v2623 = vadd.f32 %v2622, %v2574
        %v2624 = vadd.f32 %v2623, %v2579
        %v2625 = vadd.f32 %v2624, %v2584
        %v2626 = vadd.f32 %v2625, %v2589
        %v2627 = vadd.f32 %v2626, %v2594
        %v2628 = vrot.slane %v2627, 4
        %v2629 = vadd.f32 %v2627, %v2628
        %v2630 = vrot.slane %v2629, 2
        %v2631 = vadd.f32 %v2629, %v2630
        %v2632 = vrot.slane %v2631, 1
        %v2633 = vadd.f32 %v2631, %v2632
        %v2634 = vmul.f32 %v2519, %v2519
        %v2635 = vmul.f32 %v2524, %v2524
        %v2636 = vmul.f32 %v2529, %v2529
        %v2637 = vmul.f32 %v2534, %v2534
        %v2638 = vmul.f32 %v2539, %v2539
        %v2639 = vmul.f32 %v2544, %v2544
        %v2640 = vmul.f32 %v2549, %v2549
        %v2641 = vmul.f32 %v2554, %v2554
        %v2642 = vmul.f32 %v2559, %v2559
        %v2643 = vmul.f32 %v2564, %v2564
        %v2644 = vmul.f32 %v2569, %v2569
        %v2645 = vmul.f32 %v2574, %v2574
        %v2646 = vmul.f32 %v2579, %v2579
        %v2647 = vmul.f32 %v2584, %v2584
        %v2648 = vmul.f32 %v2589, %v2589
        %v2649 = vmul.f32 %v2594, %v2594
        %v2650 = vadd.f32 %v2634, %v2635
        %v2651 = vadd.f32 %v2650, %v2636
        %v2652 = vadd.f32 %v2651, %v2637
        %v2653 = vadd.f32 %v2652, %v2638
        %v2654 = vadd.f32 %v2653, %v2639
        %v2655 = vadd.f32 %v2654, %v2640
        %v2656 = vadd.f32 %v2655, %v2641
        %v2657 = vadd.f32 %v2656, %v2642
        %v2658 = vadd.f32 %v2657, %v2643
        %v2659 = vadd.f32 %v2658, %v2644
        %v2660 = vadd.f32 %v2659, %v2645
        %v2661 = vadd.f32 %v2660, %v2646
        %v2662 = vadd.f32 %v2661, %v2647
        %v2663 = vadd.f32 %v2662, %v2648
        %v2664 = vadd.f32 %v2663, %v2649
        %v2665 = vrot.slane %v2664, 4
        %v2666 = vadd.f32 %v2664, %v2665
        %v2667 = vrot.slane %v2666, 2
        %v2668 = vadd.f32 %v2666, %v2667
        %v2669 = vrot.slane %v2668, 1
        %v2670 = vadd.f32 %v2668, %v2669
        %v2674 = vrot.slane %v516, 7
        %v2675 = vrot.slane %v1605, 7
        %v2676 = vrot.slane %v2670, 7
        %vm2680 = vcmask 1040384
        %v2681 = vsel %vm2680, %v479, %v2674
        %v2682 = vsel %vm2680, %v1568, %v2675
        %v2683 = vsel %vm2680, %v2633, %v2676
        %v2687 = vcombine.low %v2681, %v2682
        %v2689 = vunpack.c.l.s4 1983009808
        %v2690 = vunpack.c.0.s8 %v2689
        %v2691 = vlaneseq
        %v2692 = vshrl.u32 %v2691, 7
        %v2693 = vsub.s32 %v2690, %v2692
        %v2694 = vrot.slane %v2687, %v2693
        %v2696 = vunpack.c.l.s4 1983009808
        %v2697 = vunpack.c.0.s8 %v2696
        %v2698 = vlaneseq
        %v2699 = vshrl.u32 %v2698, 7
        %v2700 = vsub.s32 %v2697, %v2699
        %v2701 = vrot.slane %v2683, %v2700
        %v2702 = vcombine.low %v2694, %v2701
        %2704 = vst [vmem:[%s235] sm:$0x3f] %v2702
        %v2705 = vadd.f32 %v266, %v267
        %v2706 = vadd.f32 %v2705, %v268
        %v2707 = vadd.f32 %v2706, %v269
        %v2708 = vadd.f32 %v2707, %v270
        %v2709 = vadd.f32 %v2708, %v271
        %v2710 = vadd.f32 %v2709, %v272
        %v2711 = vadd.f32 %v2710, %v273
        %v2712 = vadd.f32 %v2711, %v274
        %v2713 = vadd.f32 %v2712, %v275
        %v2714 = vadd.f32 %v2713, %v276
        %v2715 = vadd.f32 %v2714, %v277
        %v2716 = vadd.f32 %v2715, %v278
        %v2717 = vadd.f32 %v2716, %v279
        %v2718 = vadd.f32 %v2717, %v280
        %v2719 = vadd.f32 %v2718, %v281
        %v2720 = vrot.slane %v2719, 4
        %v2721 = vadd.f32 %v2719, %v2720
        %v2722 = vrot.slane %v2721, 2
        %v2723 = vadd.f32 %v2721, %v2722
        %v2724 = vrot.slane %v2723, 1
        %v2725 = vadd.f32 %v2723, %v2724
        %2726 = vst [vmem:[%s241] sm:$0x1] %v2725
        %s2727 = sand.u32 %s89, 1
        %s2728 = scalar_lea.sflag [#allocation5], %s2727
        %s2729 = sand.u32 %s89, 1
        %s2730 = smul.addr %s2729, 384
        %s2731 = scalar_lea.vmem [#allocation8], %s2730
        %s2732 = sand.u32 %s25, 1
        %s2733 = scalar_lea.sflag [#allocation10], %s2732
        %s2734 = sand.u32 %s117, 1
        %s2735 = smul.addr %s2734, 6
        %s2736 = scalar_lea.vmem [#allocation9], %s2735
        %s2737 = sand.u32 %s25, 1
        %s2738 = scalar_lea.sflag [#allocation10], %s2737
        %s2739 = sand.u32 %s145, 1
        %s2740 = scalar_lea.vmem [#allocation11], %s2739
        // Predicated region
        $region42: #{tpu_custom_call.1} parent=27 // pred_check
          %p2741 = pneg %p99
        $region43: #{tpu_custom_call.1} parent=27 // pred_check_branch
          %2743 = sbr.rel (%p2741) target = $region45
        $region44: #{tpu_custom_call.1} parent=27 // pred_region
          %s2744 = smul.u32 16, %s30
          %s2746 = ssub.s32 6144, 6144
          %2747 = vsyncadd %s2728, %s2746
          %s2748 = smul.addr %s2744, 3
          %s2749 = smul.addr %s29, 96
          %s2750 = sadd.s32 %s2748, %s2749
          %s2751 = smul.addr %s2750, 128
          %s2752 = scalar_lea.hbm %s3, %s2751
          %s2753 = sshll.u32 %s2731, 4
          %s2754 = int_to_ptr.vmem [resolvable:$true] %s2753
          %2759 = dma.vmem_to_hbm [thread:$0]  %s2754, 6144, %s2752, %s2728, 384, 384, 24
        $region45: #{tpu_custom_call.1} parent=27 // pred_fallthru
          _
        // Predicated region
        $region46: #{tpu_custom_call.1} parent=27 // pred_check
          %p2760 = pneg %p127
        $region47: #{tpu_custom_call.1} parent=27 // pred_check_branch
          %2762 = sbr.rel (%p2760) target = $region49
        $region48: #{tpu_custom_call.1} parent=27 // pred_region
          %s2764 = ssub.s32 96, 96
          %2765 = vsyncadd %s2733, %s2764
          %s2766 = smul.addr %s30, 3
          %s2767 = smul.addr %s29, 6
          %s2768 = sadd.s32 %s2766, %s2767
          %s2769 = smul.addr %s2768, 32
          %s2770 = scalar_lea.hbm %s4, %s2769
          %s2772 = sshll.u32 %s2736, 4
          %s2773 = int_to_ptr.vmem [resolvable:$true] %s2772
          %2775 = dma.vmem_to_hbm [thread:$0]  %s2773, 96, %s2770, %s2733
        $region49: #{tpu_custom_call.1} parent=27 // pred_fallthru
          _
        // Predicated region
        $region50: #{tpu_custom_call.1} parent=27 // pred_check
          %p2776 = pneg %p155
        $region51: #{tpu_custom_call.1} parent=27 // pred_check_branch
          %2778 = sbr.rel (%p2776) target = $region53
        $region52: #{tpu_custom_call.1} parent=27 // pred_region
          %s2780 = ssub.s32 16, 16
          %2781 = vsyncadd %s2738, %s2780
          %s2782 = smul.addr %s29, 2
          %s2783 = sadd.s32 %s30, %s2782
          %s2784 = smul.addr %s2783, 16
          %s2785 = scalar_lea.hbm %s5, %s2784
          %s2787 = sshll.u32 %s2740, 4
          %s2788 = int_to_ptr.vmem [resolvable:$true] %s2787
          %2790 = dma.vmem_to_hbm [thread:$0]  %s2788, 16, %s2785, %s2738
        $region53: #{tpu_custom_call.1} parent=27 // pred_fallthru
          _
      $region28: #{tpu_custom_call.1} parent=5 // pred_fallthru
        _
      %p2791 = scmp.le.s32.totalorder 2, %s20
      // Predicated region
      $region54: #{tpu_custom_call.1} parent=5 // pred_check
        %p2792 = pneg %p2791
      $region55: #{tpu_custom_call.1} parent=5 // pred_check_branch
        %2794 = sbr.rel (%p2792) target = $region57
      $region56: #{tpu_custom_call.1} parent=5 // pred_region
        %s2795 = ssub.s32 %s20, 2
        // Predicated region
        $region58: #{tpu_custom_call.1} parent=56 // pred_check
          %p2796 = pneg %p105
        $region59: #{tpu_custom_call.1} parent=56 // pred_check_branch
          %2798 = sbr.rel (%p2796) target = $region61
        $region60: #{tpu_custom_call.1} parent=56 // pred_region
          %s2799 = sand.u32 %s90, 1
          %s2800 = scalar_lea.sflag [#allocation5], %s2799
          %s2801 = sand.u32 %s90, 1
          %s2802 = smul.addr %s2801, 384
          %s2803 = scalar_lea.vmem [#allocation8], %s2802
          %2804 = dma.done %s2800, 6144
        $region61: #{tpu_custom_call.1} parent=56 // pred_fallthru
          _
        // Predicated region
        $region62: #{tpu_custom_call.1} parent=56 // pred_check
          %p2805 = pneg %p133
        $region63: #{tpu_custom_call.1} parent=56 // pred_check_branch
          %2807 = sbr.rel (%p2805) target = $region65
        $region64: #{tpu_custom_call.1} parent=56 // pred_region
          %s2808 = sand.u32 %s26, 1
          %s2809 = scalar_lea.sflag [#allocation10], %s2808
          %s2810 = sand.u32 %s118, 1
          %s2811 = smul.addr %s2810, 6
          %s2812 = scalar_lea.vmem [#allocation9], %s2811
          %2813 = dma.done %s2809, 96
        $region65: #{tpu_custom_call.1} parent=56 // pred_fallthru
          _
        // Predicated region
        $region66: #{tpu_custom_call.1} parent=56 // pred_check
          %p2814 = pneg %p161
        $region67: #{tpu_custom_call.1} parent=56 // pred_check_branch
          %2816 = sbr.rel (%p2814) target = $region69
        $region68: #{tpu_custom_call.1} parent=56 // pred_region
          %s2817 = sand.u32 %s26, 1
          %s2818 = scalar_lea.sflag [#allocation10], %s2817
          %s2819 = sand.u32 %s146, 1
          %s2820 = scalar_lea.vmem [#allocation11], %s2819
          %2821 = dma.done %s2818, 16
        $region69: #{tpu_custom_call.1} parent=56 // pred_fallthru
          _
      $region57: #{tpu_custom_call.1} parent=5 // pred_fallthru
        _
    $region6: #{tpu_custom_call.1} parent=1 // loop_footer
      %s24 = sadd.s32 1, %s20
    $region7: #{tpu_custom_call.1} parent=1 // loop_footer_branch
      %19 = sbr.rel target = $region3
    $region8: #{tpu_custom_call.1} parent=1 // loop_exit
      _
    %2822 = vsyncpa [#allocation4], 1
    %s2823 = scalar_lea.sflag [#allocation4], 1
    %2824 = vsyncpa %s2823, 1
    %2825 = vsyncpa [#allocation7], 1
    %2826 = vsyncpa [#allocation5], 1
    %s2827 = scalar_lea.sflag [#allocation5], 1
    %2828 = vsyncpa %s2827, 1
    %2829 = vsyncpa [#allocation10], 1
    %s2830 = scalar_lea.sflag [#allocation10], 1
    %2831 = vsyncpa %s2830, 1

</llo_original>
